<compile_context>
chip_gen: v7x
topology: tpu7x:2x2x1
jax: 0.10.0
libtpu: 0.0.40
codegen_flags: <defaults>
</compile_context>

<pallas_src>
import functools

import numpy as np
import jax
import jax.numpy as jnp
from jax import lax
from jax.experimental import pallas as pl
from jax.experimental.pallas import tpu as pltpu


# ------------------------------ fused kernel ------------------------------- #

def _embedding_block_m_kernel(x_ref, w1_ref, w2_ref, bias_ref, shift_ref,
                              watt_ref, poolr_ref, poolc_ref, redc_ref,
                              upr_ref, upc_ref, rowsel_ref, colsel_ref, o_ref,
                              *, B, p, classes):
    f32 = jnp.float32
    bf16 = jnp.bfloat16

    x2d = x_ref[0]                                 # (B*H, W*C) f32, B images
    bias = bias_ref[...]                           # (2, W*C) f32
    b1, b2 = bias[0:1, :], bias[1:2, :]
    w1 = w1_ref[...]                               # (W*C, W*C) bf16, BN folded
    w2 = w2_ref[...]                               # (3*W*C, W*C) bf16, BN folded
    sh_prev = shift_ref[0]                         # (B*H, B*H) bf16: row h <- h-1
    sh_next = shift_ref[1]                         # (B*H, B*H) bf16: row h <- h+1
    poolr = poolr_ref[...]                         # (B*p, B*H) f32, block-diag
    poolc = poolc_ref[...]                         # (W*C, p*C) f32
    redc = redc_ref[...]                           # (p*C, p) f32 channel mean
    upr = upr_ref[...]                             # (B*H, B*p) f32, block-diag
    upc = upc_ref[...]                             # (p, W*C) f32

    def conv1x1_bn_relu(a):                        # f32 (BH,WC) -> f32 (BH,WC)
        out = jnp.dot(a.astype(bf16), w1, preferred_element_type=f32)
        return jnp.maximum(out + b1, 0.0)

    def conv3x3_bn_relu(a):                        # f32 (BH,WC) -> f32 (BH,WC)
        ab = a.astype(bf16)
        a_m = jnp.dot(sh_prev, ab, preferred_element_type=f32).astype(bf16)
        a_p = jnp.dot(sh_next, ab, preferred_element_type=f32).astype(bf16)
        a_cat = jnp.concatenate([a_m, ab, a_p], axis=1)       # (BH, 3*WC) bf16
        out = jnp.dot(a_cat, w2, preferred_element_type=f32)  # one K=3*WC matmul
        return jnp.maximum(out + b2, 0.0)

    def attention(a):                              # f32 (BH,WC) -> f32 (BH,WC)
        # adaptive average pool (kept f32: pooled statistics feed the CAM min/max)
        tmp = jnp.dot(poolr, a, preferred_element_type=f32)        # (B*p, W*C)
        pooled = jnp.dot(tmp, poolc, preferred_element_type=f32)   # (B*p, p*C)
        avg_blocks = []
        for b in range(B):                                         # static unroll
            pooled_b = pooled[b * p:(b + 1) * p, :]                # (p, p*C)
            acc = jnp.zeros((p, p), f32)
            for idx in range(classes):                             # static unroll
                cam = jnp.dot(watt_ref[idx] * pooled_b, redc,
                              preferred_element_type=f32)          # (p, p)
                cam = cam - jnp.min(cam, axis=(0, 1), keepdims=True)
                cam = cam * pl.reciprocal(
                    jnp.max(cam, axis=(0, 1), keepdims=True), approx=True)
                acc = acc + cam
            avg_blocks.append(acc * (1.0 / classes))
        avg = jnp.concatenate(avg_blocks, axis=0)                  # (B*p, p)
        up = jnp.dot(upr, avg, preferred_element_type=f32)         # (B*H, p)
        return jnp.dot(up, upc, preferred_element_type=f32)        # (B*H, W*C)

    def maxpool2x2(a):                  # f32 (BH,WC) -> f32 (B*Ho, out_lanes)
        ab = a.astype(bf16)
        re = jnp.dot(rowsel_ref[0], ab, preferred_element_type=f32)
        ro = jnp.dot(rowsel_ref[1], ab, preferred_element_type=f32)
        rmax = jnp.maximum(re, ro).astype(bf16)
        ce = jnp.dot(rmax, colsel_ref[0], preferred_element_type=f32)
        co = jnp.dot(rmax, colsel_ref[1], preferred_element_type=f32)
        return jnp.maximum(ce, co)

    # ---- EmbeddingBlock_M forward, all VMEM-resident, f32 residual chain ----
    y = conv1x1_bn_relu(x2d)
    s = x2d + y
    a1 = attention(x2d)
    z = a1 * conv3x3_bn_relu(s)
    s = s + z
    e = conv3x3_bn_relu(s)                         # no attention multiply here
    s = s + e
    a2 = attention(z)
    out = a2 * conv3x3_bn_relu(s)
    o_ref[0] = maxpool2x2(out)                     # Dropout is identity in eval


# ------------------------------ forward (glue) ------------------------------ #

def choose_block_images(N, H, target_rows=128):
    """Largest divisor B of N with B*H <= target_rows (MXU row fill)."""
    b = max(1, min(N, target_rows // max(H, 1)))
    while N % b:
        b -= 1
    return b


def embedding_block_m_forward(x_nhwc, params, pool_size, classes):
    """x_nhwc: (N, H, W, C) float32."""
    N, H, W, C = x_nhwc.shape
    p = pool_size
    B = int(params["B"])
    out_lanes = int(params["out_lanes"])
    assert N % B == 0 and H % p == 0 and W % p == 0 and H % 2 == 0 and W % 2 == 0
    Ho, Wo = H // 2, W // 2
    WC = W * C
    BH, BHo = B * H, B * Ho
    G = N // B                                      # grid length

    x3d = x_nhwc.reshape(G, BH, WC)                 # B images flattened into M

    kernel = functools.partial(_embedding_block_m_kernel,
                               B=B, p=p, classes=classes)

    out3d = pl.pallas_call(
        kernel,
        out_shape=jax.ShapeDtypeStruct((G, BHo, out_lanes), jnp.float32),
        grid=(G,),
        in_specs=[
            pl.BlockSpec((1, BH, WC), lambda n: (n, 0, 0)),            # x (B imgs)
            pl.BlockSpec((WC, WC), lambda n: (0, 0)),                  # conv1 bf16
            pl.BlockSpec((3 * WC, WC), lambda n: (0, 0)),              # conv2 stack
            pl.BlockSpec((2, WC), lambda n: (0, 0)),                   # bn biases
            pl.BlockSpec((2, BH, BH), lambda n: (0, 0, 0)),            # row shifts
            pl.BlockSpec((classes, p, p * C), lambda n: (0, 0, 0)),    # attention w
            pl.BlockSpec((B * p, BH), lambda n: (0, 0)),               # row pooling
            pl.BlockSpec((WC, p * C), lambda n: (0, 0)),               # col pooling
            pl.BlockSpec((p * C, p), lambda n: (0, 0)),                # channel mean
            pl.BlockSpec((BH, B * p), lambda n: (0, 0)),               # row upsample
            pl.BlockSpec((p, WC), lambda n: (0, 0)),                   # col upsample
            pl.BlockSpec((2, BHo, BH), lambda n: (0, 0, 0)),           # maxpool rows
            pl.BlockSpec((2, WC, out_lanes), lambda n: (0, 0, 0)),     # maxpool cols
        ],
        out_specs=pl.BlockSpec((1, BHo, out_lanes), lambda n: (n, 0, 0)),
        compiler_params=pltpu.CompilerParams(
            dimension_semantics=("parallel",),
            vmem_limit_bytes=32 * 1024 * 1024),
    )(x3d, params["w1s_bd"], params["w2_stack"], params["bias_rows"],
      params["shift"], params["w_att2d"], params["pool_r_bd"], params["pool_c"],
      params["red_c"], params["up_r_bd"], params["up_c"], params["rowsel_bd"],
      params["colsel_pad"])

    out = out3d[:, :, :Wo * C]                      # drop lane padding
    return out.reshape(N, Ho, Wo, C)


# ------------------------- pure-JAX reference check ------------------------- #

def ref_forward(x, params, pool_size, classes):
    N, H, W, C = x.shape
    p = pool_size

    def conv_bn_relu(a, w_oihw, scale, bias, padv):
        out = lax.conv_general_dilated(
            a, jnp.transpose(w_oihw, (2, 3, 1, 0)), (1, 1),
            [(padv, padv), (padv, padv)],
            dimension_numbers=("NHWC", "HWIO", "NHWC"))
        return jnp.maximum(out * scale + bias, 0.0)

    def attn(feat):
        sh, sw = H // p, W // p
        pooled = feat.reshape(N, p, sh, p, sw, C).mean(axis=(2, 4))
        acc = jnp.zeros((N, p, p), jnp.float32)
        for idx in range(classes):
            cam = (params["w_att_t"][idx] * pooled).mean(-1)
            cam = cam - cam.min(axis=(1, 2), keepdims=True)
            cam = cam / cam.max(axis=(1, 2), keepdims=True)
            acc = acc + cam
        return acc / classes

    def up(cam):
        ih = (jnp.arange(H) * p) // H
        iw = (jnp.arange(W) * p) // W
        return cam[:, ih][:, :, iw][..., None]

    c1 = lambda a: conv_bn_relu(a, params["conv1_w"], params["bn1_scale"],
                                params["bn1_bias"], 0)
    c2 = lambda a: conv_bn_relu(a, params["conv2_w"], params["bn2_scale"],
                                params["bn2_bias"], 1)

    y = c1(x)
    z = up(attn(x)) * c2(x + y)
    e = c2(x + y + z)
    out = up(attn(z)) * c2(x + y + z + e)
    out = lax.reduce_window(out, -jnp.inf, lax.max, (1, 2, 2, 1), (1, 2, 2, 1), "VALID")
    return out


# --------------------------- deterministic params --------------------------- #

def init_params(key, inplanes, planes, H, W, pool_size, classes, B):
    assert inplanes == planes            # required by the residual x + y
    C = planes
    p = pool_size
    sh, sw = H // p, W // p
    Ho, Wo = H // 2, W // 2
    WC = W * C
    out_lanes = max(128, ((Wo * C + 127) // 128) * 128)   # lane-dense store pad
    eps = 1e-5

    ks = jax.random.split(key, 13)
    conv1_w = jax.random.normal(ks[0], (planes, inplanes, 1, 1), jnp.float32) * 0.25
    conv1_b = jax.random.normal(ks[1], (planes,), jnp.float32) * 0.1
    bn1_g = 1.0 + 0.1 * jax.random.normal(ks[2], (planes,), jnp.float32)
    bn1_b = 0.1 * jax.random.normal(ks[3], (planes,), jnp.float32)
    bn1_m = 0.1 * jax.random.normal(ks[4], (planes,), jnp.float32)
    bn1_v = jax.random.uniform(ks[5], (planes,), jnp.float32, 0.5, 1.5)
    conv2_w = jax.random.normal(ks[6], (planes, inplanes, 3, 3), jnp.float32) * 0.08
    conv2_b = jax.random.normal(ks[7], (planes,), jnp.float32) * 0.1
    bn2_g = 1.0 + 0.1 * jax.random.normal(ks[8], (planes,), jnp.float32)
    bn2_b = 0.1 * jax.random.normal(ks[9], (planes,), jnp.float32)
    bn2_m = 0.1 * jax.random.normal(ks[10], (planes,), jnp.float32)
    bn2_v = jax.random.uniform(ks[11], (planes,), jnp.float32, 0.5, 1.5)
    w_att = jax.random.normal(
        ks[12], (classes, inplanes * p * p), jnp.float32) * 0.5

    # fold conv bias + BN (inference running stats)
    s1 = bn1_g / jnp.sqrt(bn1_v + eps)
    b1 = bn1_b + s1 * (conv1_b - bn1_m)
    s2 = bn2_g / jnp.sqrt(bn2_v + eps)
    b2 = bn2_b + s2 * (conv2_b - bn2_m)
    s1_np, b1_np = np.asarray(s1), np.asarray(b1)
    s2_np, b2_np = np.asarray(s2), np.asarray(b2)

    # 1x1 conv as block-diagonal (W*C, W*C) matmul, BN scale folded into columns.
    w1_np = np.asarray(conv1_w)[:, :, 0, 0].T.astype(np.float32)        # (Ci, Co)
    w1s_bd = np.kron(np.eye(W, dtype=np.float32), w1_np * s1_np[None, :])

    # 3x3 conv: banded lane-mixing weight per row offset dh (BN scale folded),
    # stacked along K so the kernel does one (B*H, 3*W*C) @ (3*W*C, W*C) matmul.
    wh = np.transpose(np.asarray(conv2_w), (2, 3, 1, 0)).astype(np.float32)  # HWIO
    wh = wh * s2_np[None, None, None, :]
    w2_band = np.zeros((3, WC, WC), np.float32)
    for dh in range(3):
        for dw in range(3):
            for w in range(W):
                wp = w + dw - 1
                if 0 <= wp < W:
                    w2_band[dh, wp * C:(wp + 1) * C, w * C:(w + 1) * C] = wh[dh, dw]
    w2_stack = w2_band.reshape(3 * WC, WC)

    bias_rows = np.stack([np.tile(b1_np, W), np.tile(b2_np, W)]).astype(np.float32)

    # +/-1 row shifts (zeroed across image boundaries), block-diag over B images.
    eyeB = np.eye(B, dtype=np.float32)
    prev_row = np.zeros((H, H), np.float32)
    prev_row[np.arange(1, H), np.arange(0, H - 1)] = 1.0     # row h <- a[h-1]
    next_row = np.zeros((H, H), np.float32)
    next_row[np.arange(0, H - 1), np.arange(1, H)] = 1.0     # row h <- a[h+1]
    shift = np.stack([np.kron(eyeB, prev_row), np.kron(eyeB, next_row)])

    # PyTorch: w[idx].reshape(C, p, p) -> (classes, p, p, C) -> (classes, p, p*C)
    w_att_t = jnp.transpose(w_att.reshape(classes, C, p, p), (0, 2, 3, 1))
    w_att2d = w_att_t.reshape(classes, p, p * C)

    # adaptive avg pool / channel mean / nearest upsample operands
    pool_r = (np.arange(H)[None, :] // sh == np.arange(p)[:, None]
              ).astype(np.float32) / sh                                  # (p, H)
    pw = (np.arange(W)[:, None] // sw == np.arange(p)[None, :]
          ).astype(np.float32) / sw                                      # (W, p)
    pool_c = np.kron(pw, np.eye(C, dtype=np.float32))                    # (W*C, p*C)
    red_c = np.kron(np.eye(p, dtype=np.float32),
                    np.full((C, 1), 1.0 / C, np.float32))                # (p*C, p)
    up_r = (np.arange(H)[:, None] // sh == np.arange(p)[None, :]
            ).astype(np.float32)                                         # (H, p)
    upw = (np.arange(W)[None, :] // sw == np.arange(p)[:, None]
           ).astype(np.float32)                                          # (p, W)
    up_c = np.kron(upw, np.ones((1, C), np.float32))                     # (p, W*C)
    pool_r_bd = np.kron(eyeB, pool_r)                                    # (B*p, B*H)
    up_r_bd = np.kron(eyeB, up_r)                                        # (B*H, B*p)

    # 2x2 max pool via even/odd row & column selections (rows block-diag over B,
    # columns zero-padded to a lane-dense multiple of 128).
    rowsel = np.zeros((2, Ho, H), np.float32)
    rowsel[0, np.arange(Ho), 2 * np.arange(Ho)] = 1.0
    rowsel[1, np.arange(Ho), 2 * np.arange(Ho) + 1] = 1.0
    rowsel_bd = np.stack([np.kron(eyeB, rowsel[0]), np.kron(eyeB, rowsel[1])])
    colw_even = np.zeros((W, Wo), np.float32)
    colw_even[2 * np.arange(Wo), np.arange(Wo)] = 1.0
    colw_odd = np.zeros((W, Wo), np.float32)
    colw_odd[2 * np.arange(Wo) + 1, np.arange(Wo)] = 1.0
    colsel_pad = np.zeros((2, WC, out_lanes), np.float32)
    colsel_pad[0, :, :Wo * C] = np.kron(colw_even, np.eye(C, dtype=np.float32))
    colsel_pad[1, :, :Wo * C] = np.kron(colw_odd, np.eye(C, dtype=np.float32))

    bf16 = jnp.bfloat16
    return dict(
        # reference-path params (f32)
        conv1_w=conv1_w, conv2_w=conv2_w,
        bn1_scale=s1[None, :], bn1_bias=b1[None, :],
        bn2_scale=s2[None, :], bn2_bias=b2[None, :],
        w_att_t=w_att_t,
        # fused-kernel operands (MXU operands in bf16, everything else f32)
        B=B, out_lanes=out_lanes,
        w1s_bd=jnp.asarray(w1s_bd, dtype=bf16),
        w2_stack=jnp.asarray(w2_stack, dtype=bf16),
        bias_rows=jnp.asarray(bias_rows),
        shift=jnp.asarray(shift, dtype=bf16),
        w_att2d=w_att2d,
        pool_r_bd=jnp.asarray(pool_r_bd), pool_c=jnp.asarray(pool_c),
        red_c=jnp.asarray(red_c), up_r_bd=jnp.asarray(up_r_bd),
        up_c=jnp.asarray(up_c),
        rowsel_bd=jnp.asarray(rowsel_bd, dtype=bf16),
        colsel_pad=jnp.asarray(colsel_pad, dtype=bf16),
    )


if __name__ == "__main__":
    N, C, H, W = 2, 8, 16, 16
    inplanes = planes = C
    pool_size, classes = 4, 3

    key = jax.random.PRNGKey(0)
    kx, kp = jax.random.split(key)

    # B images flattened into the matmul M dimension per grid step (MXU fill).
    # NOTE(v7x): with N=2 this yields a grid of 1; for production batch sizes
    # keep N // B >= 2 (ideally even) so both TensorCores receive grid steps.
    B = choose_block_images(N, H)
    params = init_params(kp, inplanes, planes, H, W, pool_size, classes, B)

    x_nchw = jax.random.normal(kx, (N, C, H, W), jnp.float32)   # PyTorch-style input
    x = jnp.transpose(x_nchw, (0, 2, 3, 1))                     # -> NHWC

    out = jax.block_until_ready(
        embedding_block_m_forward(x, params, pool_size, classes))
    ref = jax.block_until_ready(ref_forward(x, params, pool_size, classes))

    assert out.shape == (N, H // 2, W // 2, planes)
    assert bool(jnp.allclose(out, ref, rtol=5e-2, atol=5e-2))
    print("KERNEL_OK")
</pallas_src>

<mosaic_0001>
module attributes {stable_mosaic.version = 11 : i64} {
  func.func @_embedding_block_m_kernel(%arg0: i32, %arg1: memref<1x32x128xf32, #tpu.memory_space<vmem>>, %arg2: memref<128x128xbf16, #tpu.memory_space<vmem>>, %arg3: memref<384x128xbf16, #tpu.memory_space<vmem>>, %arg4: memref<2x128xf32, #tpu.memory_space<vmem>>, %arg5: memref<2x32x32xbf16, #tpu.memory_space<vmem>>, %arg6: memref<3x4x32xf32, #tpu.memory_space<vmem>>, %arg7: memref<8x32xf32, #tpu.memory_space<vmem>>, %arg8: memref<128x32xf32, #tpu.memory_space<vmem>>, %arg9: memref<32x4xf32, #tpu.memory_space<vmem>>, %arg10: memref<32x8xf32, #tpu.memory_space<vmem>>, %arg11: memref<4x128xf32, #tpu.memory_space<vmem>>, %arg12: memref<2x16x32xbf16, #tpu.memory_space<vmem>>, %arg13: memref<2x128x128xbf16, #tpu.memory_space<vmem>>, %arg14: memref<1x16x128xf32, #tpu.memory_space<vmem>>) attributes {dimension_semantics = [#tpu.dimension_semantics<parallel>], iteration_bounds = array<i64: 1>, scalar_prefetch = 0 : i64, scratch_operands = 0 : i64, tpu.core_type = #tpu.core_type<tc>, window_params = [{transform_indices = @transform_0, window_bounds = array<i64: 1, 32, 128>}, {pipeline_mode = #tpu.pipeline_mode<synchronous>, transform_indices = @transform_1, window_bounds = array<i64: 128, 128>}, {pipeline_mode = #tpu.pipeline_mode<synchronous>, transform_indices = @transform_2, window_bounds = array<i64: 384, 128>}, {pipeline_mode = #tpu.pipeline_mode<synchronous>, transform_indices = @transform_3, window_bounds = array<i64: 2, 128>}, {pipeline_mode = #tpu.pipeline_mode<synchronous>, transform_indices = @transform_4, window_bounds = array<i64: 2, 32, 32>}, {pipeline_mode = #tpu.pipeline_mode<synchronous>, transform_indices = @transform_5, window_bounds = array<i64: 3, 4, 32>}, {pipeline_mode = #tpu.pipeline_mode<synchronous>, transform_indices = @transform_6, window_bounds = array<i64: 8, 32>}, {pipeline_mode = #tpu.pipeline_mode<synchronous>, transform_indices = @transform_7, window_bounds = array<i64: 128, 32>}, {pipeline_mode = #tpu.pipeline_mode<synchronous>, transform_indices = @transform_8, window_bounds = array<i64: 32, 4>}, {pipeline_mode = #tpu.pipeline_mode<synchronous>, transform_indices = @transform_9, window_bounds = array<i64: 32, 8>}, {pipeline_mode = #tpu.pipeline_mode<synchronous>, transform_indices = @transform_10, window_bounds = array<i64: 4, 128>}, {pipeline_mode = #tpu.pipeline_mode<synchronous>, transform_indices = @transform_11, window_bounds = array<i64: 2, 16, 32>}, {pipeline_mode = #tpu.pipeline_mode<synchronous>, transform_indices = @transform_12, window_bounds = array<i64: 2, 128, 128>}, {transform_indices = @transform_13, window_bounds = array<i64: 1, 16, 128>}]} {
    %c0 = arith.constant 0 : index
    %c0_0 = arith.constant 0 : index
    %c0_1 = arith.constant 0 : index
    %0 = vector.load %arg1[%c0, %c0_0, %c0_1] : memref<1x32x128xf32, #tpu.memory_space<vmem>>, vector<1x32x128xf32>
    %1 = vector.shape_cast %0 : vector<1x32x128xf32> to vector<32x128xf32>
    %c0_2 = arith.constant 0 : index
    %c0_3 = arith.constant 0 : index
    %2 = vector.load %arg4[%c0_2, %c0_3] : memref<2x128xf32, #tpu.memory_space<vmem>>, vector<2x128xf32>
    %3 = vector.extract_strided_slice %2 {offsets = [0, 0], sizes = [1, 128], strides = [1, 1]} : vector<2x128xf32> to vector<1x128xf32>
    %4 = vector.extract_strided_slice %2 {offsets = [1, 0], sizes = [1, 128], strides = [1, 1]} : vector<2x128xf32> to vector<1x128xf32>
    %c0_4 = arith.constant 0 : index
    %c0_5 = arith.constant 0 : index
    %5 = vector.load %arg2[%c0_4, %c0_5] : memref<128x128xbf16, #tpu.memory_space<vmem>>, vector<128x128xbf16>
    %c0_6 = arith.constant 0 : index
    %c0_7 = arith.constant 0 : index
    %6 = vector.load %arg3[%c0_6, %c0_7] : memref<384x128xbf16, #tpu.memory_space<vmem>>, vector<384x128xbf16>
    %c0_8 = arith.constant 0 : index
    %c0_9 = arith.constant 0 : index
    %c0_10 = arith.constant 0 : index
    %7 = vector.load %arg5[%c0_8, %c0_9, %c0_10] : memref<2x32x32xbf16, #tpu.memory_space<vmem>>, vector<1x32x32xbf16>
    %8 = vector.shape_cast %7 : vector<1x32x32xbf16> to vector<32x32xbf16>
    %c1 = arith.constant 1 : index
    %c0_11 = arith.constant 0 : index
    %c0_12 = arith.constant 0 : index
    %9 = vector.load %arg5[%c1, %c0_11, %c0_12] : memref<2x32x32xbf16, #tpu.memory_space<vmem>>, vector<1x32x32xbf16>
    %10 = vector.shape_cast %9 : vector<1x32x32xbf16> to vector<32x32xbf16>
    %c0_13 = arith.constant 0 : index
    %c0_14 = arith.constant 0 : index
    %11 = vector.load %arg7[%c0_13, %c0_14] : memref<8x32xf32, #tpu.memory_space<vmem>>, vector<8x32xf32>
    %c0_15 = arith.constant 0 : index
    %c0_16 = arith.constant 0 : index
    %12 = vector.load %arg8[%c0_15, %c0_16] : memref<128x32xf32, #tpu.memory_space<vmem>>, vector<128x32xf32>
    %c0_17 = arith.constant 0 : index
    %c0_18 = arith.constant 0 : index
    %13 = vector.load %arg9[%c0_17, %c0_18] : memref<32x4xf32, #tpu.memory_space<vmem>>, vector<32x4xf32>
    %c0_19 = arith.constant 0 : index
    %c0_20 = arith.constant 0 : index
    %14 = vector.load %arg10[%c0_19, %c0_20] : memref<32x8xf32, #tpu.memory_space<vmem>>, vector<32x8xf32>
    %c0_21 = arith.constant 0 : index
    %c0_22 = arith.constant 0 : index
    %15 = vector.load %arg11[%c0_21, %c0_22] : memref<4x128xf32, #tpu.memory_space<vmem>>, vector<4x128xf32>
    %16 = arith.truncf %1 : vector<32x128xf32> to vector<32x128xbf16>
    %cst = arith.constant dense<0.000000e+00> : vector<32x128xf32>
    %17 = tpu.matmul %16, %5, %cst {dimension_numbers = #tpu.dot_dimension_numbers<[1], [0], [0], [1], [0, 0, 1, 1], [], []>} : vector<32x128xbf16>, vector<128x128xbf16>, vector<32x128xf32> -> vector<32x128xf32>
    %18 = vector.broadcast %3 : vector<1x128xf32> to vector<32x128xf32>
    %19 = arith.addf %17, %18 : vector<32x128xf32>
    %cst_23 = arith.constant 0.000000e+00 : f32
    %20 = vector.broadcast %cst_23 : f32 to vector<32x128xf32>
    %21 = arith.maximumf %19, %20 : vector<32x128xf32>
    %22 = arith.addf %1, %21 : vector<32x128xf32>
    %cst_24 = arith.constant dense<0.000000e+00> : vector<8x128xf32>
    %23 = tpu.matmul %11, %1, %cst_24 {dimension_numbers = #tpu.dot_dimension_numbers<[1], [0], [0], [1], [0, 0, 1, 1], [], []>} : vector<8x32xf32>, vector<32x128xf32>, vector<8x128xf32> -> vector<8x128xf32>
    %cst_25 = arith.constant dense<0.000000e+00> : vector<8x32xf32>
    %24 = tpu.matmul %23, %12, %cst_25 {dimension_numbers = #tpu.dot_dimension_numbers<[1], [0], [0], [1], [0, 0, 1, 1], [], []>} : vector<8x128xf32>, vector<128x32xf32>, vector<8x32xf32> -> vector<8x32xf32>
    %25 = vector.extract_strided_slice %24 {offsets = [0, 0], sizes = [4, 32], strides = [1, 1]} : vector<8x32xf32> to vector<4x32xf32>
    %cst_26 = arith.constant 0.000000e+00 : f32
    %26 = vector.broadcast %cst_26 : f32 to vector<4x4xf32>
    %c0_27 = arith.constant 0 : index
    %c0_28 = arith.constant 0 : index
    %c0_29 = arith.constant 0 : index
    %27 = vector.load %arg6[%c0_27, %c0_28, %c0_29] : memref<3x4x32xf32, #tpu.memory_space<vmem>>, vector<1x4x32xf32>
    %28 = vector.shape_cast %27 : vector<1x4x32xf32> to vector<4x32xf32>
    %29 = arith.mulf %28, %25 : vector<4x32xf32>
    %cst_30 = arith.constant dense<0.000000e+00> : vector<4x4xf32>
    %30 = tpu.matmul %29, %13, %cst_30 {dimension_numbers = #tpu.dot_dimension_numbers<[1], [0], [0], [1], [0, 0, 1, 1], [], []>} : vector<4x32xf32>, vector<32x4xf32>, vector<4x4xf32> -> vector<4x4xf32>
    %31 = vector.shape_cast %30 : vector<4x4xf32> to vector<1x4x4xf32>
    %cst_31 = arith.constant dense<0x7F800000> : vector<1xf32>
    %32 = vector.multi_reduction <minimumf>, %31, %cst_31 [1, 2] : vector<1x4x4xf32> to vector<1xf32>
    %33 = vector.shape_cast %32 : vector<1xf32> to vector<1x1x1xf32>
    %34 = vector.extract %33[0, 0, 0] : f32 from vector<1x1x1xf32>
    %35 = vector.broadcast %34 : f32 to vector<1x1xf32>
    %36 = vector.broadcast %35 : vector<1x1xf32> to vector<4x4xf32>
    %37 = arith.subf %30, %36 : vector<4x4xf32>
    %38 = vector.shape_cast %37 : vector<4x4xf32> to vector<1x4x4xf32>
    %cst_32 = arith.constant dense<0xFF800000> : vector<1xf32>
    %39 = vector.multi_reduction <maximumf>, %38, %cst_32 [1, 2] : vector<1x4x4xf32> to vector<1xf32>
    %40 = vector.shape_cast %39 : vector<1xf32> to vector<1x1x1xf32>
    %41 = vector.extract %40[0, 0, 0] : f32 from vector<1x1x1xf32>
    %42 = vector.broadcast %41 : f32 to vector<1x1xf32>
    %43 = tpu.reciprocal %42 {approx = true} : vector<1x1xf32> -> vector<1x1xf32>
    %44 = vector.broadcast %43 : vector<1x1xf32> to vector<4x4xf32>
    %45 = arith.mulf %37, %44 : vector<4x4xf32>
    %46 = arith.addf %26, %45 : vector<4x4xf32>
    %c1_33 = arith.constant 1 : index
    %c0_34 = arith.constant 0 : index
    %c0_35 = arith.constant 0 : index
    %47 = vector.load %arg6[%c1_33, %c0_34, %c0_35] : memref<3x4x32xf32, #tpu.memory_space<vmem>>, vector<1x4x32xf32>
    %48 = vector.shape_cast %47 : vector<1x4x32xf32> to vector<4x32xf32>
    %49 = arith.mulf %48, %25 : vector<4x32xf32>
    %cst_36 = arith.constant dense<0.000000e+00> : vector<4x4xf32>
    %50 = tpu.matmul %49, %13, %cst_36 {dimension_numbers = #tpu.dot_dimension_numbers<[1], [0], [0], [1], [0, 0, 1, 1], [], []>} : vector<4x32xf32>, vector<32x4xf32>, vector<4x4xf32> -> vector<4x4xf32>
    %51 = vector.shape_cast %50 : vector<4x4xf32> to vector<1x4x4xf32>
    %cst_37 = arith.constant dense<0x7F800000> : vector<1xf32>
    %52 = vector.multi_reduction <minimumf>, %51, %cst_37 [1, 2] : vector<1x4x4xf32> to vector<1xf32>
    %53 = vector.shape_cast %52 : vector<1xf32> to vector<1x1x1xf32>
    %54 = vector.extract %53[0, 0, 0] : f32 from vector<1x1x1xf32>
    %55 = vector.broadcast %54 : f32 to vector<1x1xf32>
    %56 = vector.broadcast %55 : vector<1x1xf32> to vector<4x4xf32>
    %57 = arith.subf %50, %56 : vector<4x4xf32>
    %58 = vector.shape_cast %57 : vector<4x4xf32> to vector<1x4x4xf32>
    %cst_38 = arith.constant dense<0xFF800000> : vector<1xf32>
    %59 = vector.multi_reduction <maximumf>, %58, %cst_38 [1, 2] : vector<1x4x4xf32> to vector<1xf32>
    %60 = vector.shape_cast %59 : vector<1xf32> to vector<1x1x1xf32>
    %61 = vector.extract %60[0, 0, 0] : f32 from vector<1x1x1xf32>
    %62 = vector.broadcast %61 : f32 to vector<1x1xf32>
    %63 = tpu.reciprocal %62 {approx = true} : vector<1x1xf32> -> vector<1x1xf32>
    %64 = vector.broadcast %63 : vector<1x1xf32> to vector<4x4xf32>
    %65 = arith.mulf %57, %64 : vector<4x4xf32>
    %66 = arith.addf %46, %65 : vector<4x4xf32>
    %c2 = arith.constant 2 : index
    %c0_39 = arith.constant 0 : index
    %c0_40 = arith.constant 0 : index
    %67 = vector.load %arg6[%c2, %c0_39, %c0_40] : memref<3x4x32xf32, #tpu.memory_space<vmem>>, vector<1x4x32xf32>
    %68 = vector.shape_cast %67 : vector<1x4x32xf32> to vector<4x32xf32>
    %69 = arith.mulf %68, %25 : vector<4x32xf32>
    %cst_41 = arith.constant dense<0.000000e+00> : vector<4x4xf32>
    %70 = tpu.matmul %69, %13, %cst_41 {dimension_numbers = #tpu.dot_dimension_numbers<[1], [0], [0], [1], [0, 0, 1, 1], [], []>} : vector<4x32xf32>, vector<32x4xf32>, vector<4x4xf32> -> vector<4x4xf32>
    %71 = vector.shape_cast %70 : vector<4x4xf32> to vector<1x4x4xf32>
    %cst_42 = arith.constant dense<0x7F800000> : vector<1xf32>
    %72 = vector.multi_reduction <minimumf>, %71, %cst_42 [1, 2] : vector<1x4x4xf32> to vector<1xf32>
    %73 = vector.shape_cast %72 : vector<1xf32> to vector<1x1x1xf32>
    %74 = vector.extract %73[0, 0, 0] : f32 from vector<1x1x1xf32>
    %75 = vector.broadcast %74 : f32 to vector<1x1xf32>
    %76 = vector.broadcast %75 : vector<1x1xf32> to vector<4x4xf32>
    %77 = arith.subf %70, %76 : vector<4x4xf32>
    %78 = vector.shape_cast %77 : vector<4x4xf32> to vector<1x4x4xf32>
    %cst_43 = arith.constant dense<0xFF800000> : vector<1xf32>
    %79 = vector.multi_reduction <maximumf>, %78, %cst_43 [1, 2] : vector<1x4x4xf32> to vector<1xf32>
    %80 = vector.shape_cast %79 : vector<1xf32> to vector<1x1x1xf32>
    %81 = vector.extract %80[0, 0, 0] : f32 from vector<1x1x1xf32>
    %82 = vector.broadcast %81 : f32 to vector<1x1xf32>
    %83 = tpu.reciprocal %82 {approx = true} : vector<1x1xf32> -> vector<1x1xf32>
    %84 = vector.broadcast %83 : vector<1x1xf32> to vector<4x4xf32>
    %85 = arith.mulf %77, %84 : vector<4x4xf32>
    %86 = arith.addf %66, %85 : vector<4x4xf32>
    %cst_44 = arith.constant 0.333333343 : f32
    %87 = vector.broadcast %cst_44 : f32 to vector<4x4xf32>
    %88 = arith.mulf %86, %87 : vector<4x4xf32>
    %89 = vector.extract_strided_slice %24 {offsets = [4, 0], sizes = [4, 32], strides = [1, 1]} : vector<8x32xf32> to vector<4x32xf32>
    %cst_45 = arith.constant 0.000000e+00 : f32
    %90 = vector.broadcast %cst_45 : f32 to vector<4x4xf32>
    %c0_46 = arith.constant 0 : index
    %c0_47 = arith.constant 0 : index
    %c0_48 = arith.constant 0 : index
    %91 = vector.load %arg6[%c0_46, %c0_47, %c0_48] : memref<3x4x32xf32, #tpu.memory_space<vmem>>, vector<1x4x32xf32>
    %92 = vector.shape_cast %91 : vector<1x4x32xf32> to vector<4x32xf32>
    %93 = arith.mulf %92, %89 : vector<4x32xf32>
    %cst_49 = arith.constant dense<0.000000e+00> : vector<4x4xf32>
    %94 = tpu.matmul %93, %13, %cst_49 {dimension_numbers = #tpu.dot_dimension_numbers<[1], [0], [0], [1], [0, 0, 1, 1], [], []>} : vector<4x32xf32>, vector<32x4xf32>, vector<4x4xf32> -> vector<4x4xf32>
    %95 = vector.shape_cast %94 : vector<4x4xf32> to vector<1x4x4xf32>
    %cst_50 = arith.constant dense<0x7F800000> : vector<1xf32>
    %96 = vector.multi_reduction <minimumf>, %95, %cst_50 [1, 2] : vector<1x4x4xf32> to vector<1xf32>
    %97 = vector.shape_cast %96 : vector<1xf32> to vector<1x1x1xf32>
    %98 = vector.extract %97[0, 0, 0] : f32 from vector<1x1x1xf32>
    %99 = vector.broadcast %98 : f32 to vector<1x1xf32>
    %100 = vector.broadcast %99 : vector<1x1xf32> to vector<4x4xf32>
    %101 = arith.subf %94, %100 : vector<4x4xf32>
    %102 = vector.shape_cast %101 : vector<4x4xf32> to vector<1x4x4xf32>
    %cst_51 = arith.constant dense<0xFF800000> : vector<1xf32>
    %103 = vector.multi_reduction <maximumf>, %102, %cst_51 [1, 2] : vector<1x4x4xf32> to vector<1xf32>
    %104 = vector.shape_cast %103 : vector<1xf32> to vector<1x1x1xf32>
    %105 = vector.extract %104[0, 0, 0] : f32 from vector<1x1x1xf32>
    %106 = vector.broadcast %105 : f32 to vector<1x1xf32>
    %107 = tpu.reciprocal %106 {approx = true} : vector<1x1xf32> -> vector<1x1xf32>
    %108 = vector.broadcast %107 : vector<1x1xf32> to vector<4x4xf32>
    %109 = arith.mulf %101, %108 : vector<4x4xf32>
    %110 = arith.addf %90, %109 : vector<4x4xf32>
    %c1_52 = arith.constant 1 : index
    %c0_53 = arith.constant 0 : index
    %c0_54 = arith.constant 0 : index
    %111 = vector.load %arg6[%c1_52, %c0_53, %c0_54] : memref<3x4x32xf32, #tpu.memory_space<vmem>>, vector<1x4x32xf32>
    %112 = vector.shape_cast %111 : vector<1x4x32xf32> to vector<4x32xf32>
    %113 = arith.mulf %112, %89 : vector<4x32xf32>
    %cst_55 = arith.constant dense<0.000000e+00> : vector<4x4xf32>
    %114 = tpu.matmul %113, %13, %cst_55 {dimension_numbers = #tpu.dot_dimension_numbers<[1], [0], [0], [1], [0, 0, 1, 1], [], []>} : vector<4x32xf32>, vector<32x4xf32>, vector<4x4xf32> -> vector<4x4xf32>
    %115 = vector.shape_cast %114 : vector<4x4xf32> to vector<1x4x4xf32>
    %cst_56 = arith.constant dense<0x7F800000> : vector<1xf32>
    %116 = vector.multi_reduction <minimumf>, %115, %cst_56 [1, 2] : vector<1x4x4xf32> to vector<1xf32>
    %117 = vector.shape_cast %116 : vector<1xf32> to vector<1x1x1xf32>
    %118 = vector.extract %117[0, 0, 0] : f32 from vector<1x1x1xf32>
    %119 = vector.broadcast %118 : f32 to vector<1x1xf32>
    %120 = vector.broadcast %119 : vector<1x1xf32> to vector<4x4xf32>
    %121 = arith.subf %114, %120 : vector<4x4xf32>
    %122 = vector.shape_cast %121 : vector<4x4xf32> to vector<1x4x4xf32>
    %cst_57 = arith.constant dense<0xFF800000> : vector<1xf32>
    %123 = vector.multi_reduction <maximumf>, %122, %cst_57 [1, 2] : vector<1x4x4xf32> to vector<1xf32>
    %124 = vector.shape_cast %123 : vector<1xf32> to vector<1x1x1xf32>
    %125 = vector.extract %124[0, 0, 0] : f32 from vector<1x1x1xf32>
    %126 = vector.broadcast %125 : f32 to vector<1x1xf32>
    %127 = tpu.reciprocal %126 {approx = true} : vector<1x1xf32> -> vector<1x1xf32>
    %128 = vector.broadcast %127 : vector<1x1xf32> to vector<4x4xf32>
    %129 = arith.mulf %121, %128 : vector<4x4xf32>
    %130 = arith.addf %110, %129 : vector<4x4xf32>
    %c2_58 = arith.constant 2 : index
    %c0_59 = arith.constant 0 : index
    %c0_60 = arith.constant 0 : index
    %131 = vector.load %arg6[%c2_58, %c0_59, %c0_60] : memref<3x4x32xf32, #tpu.memory_space<vmem>>, vector<1x4x32xf32>
    %132 = vector.shape_cast %131 : vector<1x4x32xf32> to vector<4x32xf32>
    %133 = arith.mulf %132, %89 : vector<4x32xf32>
    %cst_61 = arith.constant dense<0.000000e+00> : vector<4x4xf32>
    %134 = tpu.matmul %133, %13, %cst_61 {dimension_numbers = #tpu.dot_dimension_numbers<[1], [0], [0], [1], [0, 0, 1, 1], [], []>} : vector<4x32xf32>, vector<32x4xf32>, vector<4x4xf32> -> vector<4x4xf32>
    %135 = vector.shape_cast %134 : vector<4x4xf32> to vector<1x4x4xf32>
    %cst_62 = arith.constant dense<0x7F800000> : vector<1xf32>
    %136 = vector.multi_reduction <minimumf>, %135, %cst_62 [1, 2] : vector<1x4x4xf32> to vector<1xf32>
    %137 = vector.shape_cast %136 : vector<1xf32> to vector<1x1x1xf32>
    %138 = vector.extract %137[0, 0, 0] : f32 from vector<1x1x1xf32>
    %139 = vector.broadcast %138 : f32 to vector<1x1xf32>
    %140 = vector.broadcast %139 : vector<1x1xf32> to vector<4x4xf32>
    %141 = arith.subf %134, %140 : vector<4x4xf32>
    %142 = vector.shape_cast %141 : vector<4x4xf32> to vector<1x4x4xf32>
    %cst_63 = arith.constant dense<0xFF800000> : vector<1xf32>
    %143 = vector.multi_reduction <maximumf>, %142, %cst_63 [1, 2] : vector<1x4x4xf32> to vector<1xf32>
    %144 = vector.shape_cast %143 : vector<1xf32> to vector<1x1x1xf32>
    %145 = vector.extract %144[0, 0, 0] : f32 from vector<1x1x1xf32>
    %146 = vector.broadcast %145 : f32 to vector<1x1xf32>
    %147 = tpu.reciprocal %146 {approx = true} : vector<1x1xf32> -> vector<1x1xf32>
    %148 = vector.broadcast %147 : vector<1x1xf32> to vector<4x4xf32>
    %149 = arith.mulf %141, %148 : vector<4x4xf32>
    %150 = arith.addf %130, %149 : vector<4x4xf32>
    %cst_64 = arith.constant 0.333333343 : f32
    %151 = vector.broadcast %cst_64 : f32 to vector<4x4xf32>
    %152 = arith.mulf %150, %151 : vector<4x4xf32>
    %153 = tpu.concatenate %88, %152 in 0 : vector<4x4xf32>, vector<4x4xf32> -> vector<8x4xf32>
    %cst_65 = arith.constant dense<0.000000e+00> : vector<32x4xf32>
    %154 = tpu.matmul %14, %153, %cst_65 {dimension_numbers = #tpu.dot_dimension_numbers<[1], [0], [0], [1], [0, 0, 1, 1], [], []>} : vector<32x8xf32>, vector<8x4xf32>, vector<32x4xf32> -> vector<32x4xf32>
    %cst_66 = arith.constant dense<0.000000e+00> : vector<32x128xf32>
    %155 = tpu.matmul %154, %15, %cst_66 {dimension_numbers = #tpu.dot_dimension_numbers<[1], [0], [0], [1], [0, 0, 1, 1], [], []>} : vector<32x4xf32>, vector<4x128xf32>, vector<32x128xf32> -> vector<32x128xf32>
    %156 = arith.truncf %22 : vector<32x128xf32> to vector<32x128xbf16>
    %cst_67 = arith.constant dense<0.000000e+00> : vector<32x128xf32>
    %157 = tpu.matmul %8, %156, %cst_67 {dimension_numbers = #tpu.dot_dimension_numbers<[1], [0], [0], [1], [0, 0, 1, 1], [], []>} : vector<32x32xbf16>, vector<32x128xbf16>, vector<32x128xf32> -> vector<32x128xf32>
    %158 = arith.truncf %157 : vector<32x128xf32> to vector<32x128xbf16>
    %cst_68 = arith.constant dense<0.000000e+00> : vector<32x128xf32>
    %159 = tpu.matmul %10, %156, %cst_68 {dimension_numbers = #tpu.dot_dimension_numbers<[1], [0], [0], [1], [0, 0, 1, 1], [], []>} : vector<32x32xbf16>, vector<32x128xbf16>, vector<32x128xf32> -> vector<32x128xf32>
    %160 = arith.truncf %159 : vector<32x128xf32> to vector<32x128xbf16>
    %161 = tpu.concatenate %158, %156, %160 in 1 : vector<32x128xbf16>, vector<32x128xbf16>, vector<32x128xbf16> -> vector<32x384xbf16>
    %cst_69 = arith.constant dense<0.000000e+00> : vector<32x128xf32>
    %162 = tpu.matmul %161, %6, %cst_69 {dimension_numbers = #tpu.dot_dimension_numbers<[1], [0], [0], [1], [0, 0, 1, 1], [], []>} : vector<32x384xbf16>, vector<384x128xbf16>, vector<32x128xf32> -> vector<32x128xf32>
    %163 = vector.broadcast %4 : vector<1x128xf32> to vector<32x128xf32>
    %164 = arith.addf %162, %163 : vector<32x128xf32>
    %cst_70 = arith.constant 0.000000e+00 : f32
    %165 = vector.broadcast %cst_70 : f32 to vector<32x128xf32>
    %166 = arith.maximumf %164, %165 : vector<32x128xf32>
    %167 = arith.mulf %155, %166 : vector<32x128xf32>
    %168 = arith.addf %22, %167 : vector<32x128xf32>
    %169 = arith.truncf %168 : vector<32x128xf32> to vector<32x128xbf16>
    %cst_71 = arith.constant dense<0.000000e+00> : vector<32x128xf32>
    %170 = tpu.matmul %8, %169, %cst_71 {dimension_numbers = #tpu.dot_dimension_numbers<[1], [0], [0], [1], [0, 0, 1, 1], [], []>} : vector<32x32xbf16>, vector<32x128xbf16>, vector<32x128xf32> -> vector<32x128xf32>
    %171 = arith.truncf %170 : vector<32x128xf32> to vector<32x128xbf16>
    %cst_72 = arith.constant dense<0.000000e+00> : vector<32x128xf32>
    %172 = tpu.matmul %10, %169, %cst_72 {dimension_numbers = #tpu.dot_dimension_numbers<[1], [0], [0], [1], [0, 0, 1, 1], [], []>} : vector<32x32xbf16>, vector<32x128xbf16>, vector<32x128xf32> -> vector<32x128xf32>
    %173 = arith.truncf %172 : vector<32x128xf32> to vector<32x128xbf16>
    %174 = tpu.concatenate %171, %169, %173 in 1 : vector<32x128xbf16>, vector<32x128xbf16>, vector<32x128xbf16> -> vector<32x384xbf16>
    %cst_73 = arith.constant dense<0.000000e+00> : vector<32x128xf32>
    %175 = tpu.matmul %174, %6, %cst_73 {dimension_numbers = #tpu.dot_dimension_numbers<[1], [0], [0], [1], [0, 0, 1, 1], [], []>} : vector<32x384xbf16>, vector<384x128xbf16>, vector<32x128xf32> -> vector<32x128xf32>
    %176 = vector.broadcast %4 : vector<1x128xf32> to vector<32x128xf32>
    %177 = arith.addf %175, %176 : vector<32x128xf32>
    %cst_74 = arith.constant 0.000000e+00 : f32
    %178 = vector.broadcast %cst_74 : f32 to vector<32x128xf32>
    %179 = arith.maximumf %177, %178 : vector<32x128xf32>
    %180 = arith.addf %168, %179 : vector<32x128xf32>
    %cst_75 = arith.constant dense<0.000000e+00> : vector<8x128xf32>
    %181 = tpu.matmul %11, %167, %cst_75 {dimension_numbers = #tpu.dot_dimension_numbers<[1], [0], [0], [1], [0, 0, 1, 1], [], []>} : vector<8x32xf32>, vector<32x128xf32>, vector<8x128xf32> -> vector<8x128xf32>
    %cst_76 = arith.constant dense<0.000000e+00> : vector<8x32xf32>
    %182 = tpu.matmul %181, %12, %cst_76 {dimension_numbers = #tpu.dot_dimension_numbers<[1], [0], [0], [1], [0, 0, 1, 1], [], []>} : vector<8x128xf32>, vector<128x32xf32>, vector<8x32xf32> -> vector<8x32xf32>
    %183 = vector.extract_strided_slice %182 {offsets = [0, 0], sizes = [4, 32], strides = [1, 1]} : vector<8x32xf32> to vector<4x32xf32>
    %cst_77 = arith.constant 0.000000e+00 : f32
    %184 = vector.broadcast %cst_77 : f32 to vector<4x4xf32>
    %c0_78 = arith.constant 0 : index
    %c0_79 = arith.constant 0 : index
    %c0_80 = arith.constant 0 : index
    %185 = vector.load %arg6[%c0_78, %c0_79, %c0_80] : memref<3x4x32xf32, #tpu.memory_space<vmem>>, vector<1x4x32xf32>
    %186 = vector.shape_cast %185 : vector<1x4x32xf32> to vector<4x32xf32>
    %187 = arith.mulf %186, %183 : vector<4x32xf32>
    %cst_81 = arith.constant dense<0.000000e+00> : vector<4x4xf32>
    %188 = tpu.matmul %187, %13, %cst_81 {dimension_numbers = #tpu.dot_dimension_numbers<[1], [0], [0], [1], [0, 0, 1, 1], [], []>} : vector<4x32xf32>, vector<32x4xf32>, vector<4x4xf32> -> vector<4x4xf32>
    %189 = vector.shape_cast %188 : vector<4x4xf32> to vector<1x4x4xf32>
    %cst_82 = arith.constant dense<0x7F800000> : vector<1xf32>
    %190 = vector.multi_reduction <minimumf>, %189, %cst_82 [1, 2] : vector<1x4x4xf32> to vector<1xf32>
    %191 = vector.shape_cast %190 : vector<1xf32> to vector<1x1x1xf32>
    %192 = vector.extract %191[0, 0, 0] : f32 from vector<1x1x1xf32>
    %193 = vector.broadcast %192 : f32 to vector<1x1xf32>
    %194 = vector.broadcast %193 : vector<1x1xf32> to vector<4x4xf32>
    %195 = arith.subf %188, %194 : vector<4x4xf32>
    %196 = vector.shape_cast %195 : vector<4x4xf32> to vector<1x4x4xf32>
    %cst_83 = arith.constant dense<0xFF800000> : vector<1xf32>
    %197 = vector.multi_reduction <maximumf>, %196, %cst_83 [1, 2] : vector<1x4x4xf32> to vector<1xf32>
    %198 = vector.shape_cast %197 : vector<1xf32> to vector<1x1x1xf32>
    %199 = vector.extract %198[0, 0, 0] : f32 from vector<1x1x1xf32>
    %200 = vector.broadcast %199 : f32 to vector<1x1xf32>
    %201 = tpu.reciprocal %200 {approx = true} : vector<1x1xf32> -> vector<1x1xf32>
    %202 = vector.broadcast %201 : vector<1x1xf32> to vector<4x4xf32>
    %203 = arith.mulf %195, %202 : vector<4x4xf32>
    %204 = arith.addf %184, %203 : vector<4x4xf32>
    %c1_84 = arith.constant 1 : index
    %c0_85 = arith.constant 0 : index
    %c0_86 = arith.constant 0 : index
    %205 = vector.load %arg6[%c1_84, %c0_85, %c0_86] : memref<3x4x32xf32, #tpu.memory_space<vmem>>, vector<1x4x32xf32>
    %206 = vector.shape_cast %205 : vector<1x4x32xf32> to vector<4x32xf32>
    %207 = arith.mulf %206, %183 : vector<4x32xf32>
    %cst_87 = arith.constant dense<0.000000e+00> : vector<4x4xf32>
    %208 = tpu.matmul %207, %13, %cst_87 {dimension_numbers = #tpu.dot_dimension_numbers<[1], [0], [0], [1], [0, 0, 1, 1], [], []>} : vector<4x32xf32>, vector<32x4xf32>, vector<4x4xf32> -> vector<4x4xf32>
    %209 = vector.shape_cast %208 : vector<4x4xf32> to vector<1x4x4xf32>
    %cst_88 = arith.constant dense<0x7F800000> : vector<1xf32>
    %210 = vector.multi_reduction <minimumf>, %209, %cst_88 [1, 2] : vector<1x4x4xf32> to vector<1xf32>
    %211 = vector.shape_cast %210 : vector<1xf32> to vector<1x1x1xf32>
    %212 = vector.extract %211[0, 0, 0] : f32 from vector<1x1x1xf32>
    %213 = vector.broadcast %212 : f32 to vector<1x1xf32>
    %214 = vector.broadcast %213 : vector<1x1xf32> to vector<4x4xf32>
    %215 = arith.subf %208, %214 : vector<4x4xf32>
    %216 = vector.shape_cast %215 : vector<4x4xf32> to vector<1x4x4xf32>
    %cst_89 = arith.constant dense<0xFF800000> : vector<1xf32>
    %217 = vector.multi_reduction <maximumf>, %216, %cst_89 [1, 2] : vector<1x4x4xf32> to vector<1xf32>
    %218 = vector.shape_cast %217 : vector<1xf32> to vector<1x1x1xf32>
    %219 = vector.extract %218[0, 0, 0] : f32 from vector<1x1x1xf32>
    %220 = vector.broadcast %219 : f32 to vector<1x1xf32>
    %221 = tpu.reciprocal %220 {approx = true} : vector<1x1xf32> -> vector<1x1xf32>
    %222 = vector.broadcast %221 : vector<1x1xf32> to vector<4x4xf32>
    %223 = arith.mulf %215, %222 : vector<4x4xf32>
    %224 = arith.addf %204, %223 : vector<4x4xf32>
    %c2_90 = arith.constant 2 : index
    %c0_91 = arith.constant 0 : index
    %c0_92 = arith.constant 0 : index
    %225 = vector.load %arg6[%c2_90, %c0_91, %c0_92] : memref<3x4x32xf32, #tpu.memory_space<vmem>>, vector<1x4x32xf32>
    %226 = vector.shape_cast %225 : vector<1x4x32xf32> to vector<4x32xf32>
    %227 = arith.mulf %226, %183 : vector<4x32xf32>
    %cst_93 = arith.constant dense<0.000000e+00> : vector<4x4xf32>
    %228 = tpu.matmul %227, %13, %cst_93 {dimension_numbers = #tpu.dot_dimension_numbers<[1], [0], [0], [1], [0, 0, 1, 1], [], []>} : vector<4x32xf32>, vector<32x4xf32>, vector<4x4xf32> -> vector<4x4xf32>
    %229 = vector.shape_cast %228 : vector<4x4xf32> to vector<1x4x4xf32>
    %cst_94 = arith.constant dense<0x7F800000> : vector<1xf32>
    %230 = vector.multi_reduction <minimumf>, %229, %cst_94 [1, 2] : vector<1x4x4xf32> to vector<1xf32>
    %231 = vector.shape_cast %230 : vector<1xf32> to vector<1x1x1xf32>
    %232 = vector.extract %231[0, 0, 0] : f32 from vector<1x1x1xf32>
    %233 = vector.broadcast %232 : f32 to vector<1x1xf32>
    %234 = vector.broadcast %233 : vector<1x1xf32> to vector<4x4xf32>
    %235 = arith.subf %228, %234 : vector<4x4xf32>
    %236 = vector.shape_cast %235 : vector<4x4xf32> to vector<1x4x4xf32>
    %cst_95 = arith.constant dense<0xFF800000> : vector<1xf32>
    %237 = vector.multi_reduction <maximumf>, %236, %cst_95 [1, 2] : vector<1x4x4xf32> to vector<1xf32>
    %238 = vector.shape_cast %237 : vector<1xf32> to vector<1x1x1xf32>
    %239 = vector.extract %238[0, 0, 0] : f32 from vector<1x1x1xf32>
    %240 = vector.broadcast %239 : f32 to vector<1x1xf32>
    %241 = tpu.reciprocal %240 {approx = true} : vector<1x1xf32> -> vector<1x1xf32>
    %242 = vector.broadcast %241 : vector<1x1xf32> to vector<4x4xf32>
    %243 = arith.mulf %235, %242 : vector<4x4xf32>
    %244 = arith.addf %224, %243 : vector<4x4xf32>
    %cst_96 = arith.constant 0.333333343 : f32
    %245 = vector.broadcast %cst_96 : f32 to vector<4x4xf32>
    %246 = arith.mulf %244, %245 : vector<4x4xf32>
    %247 = vector.extract_strided_slice %182 {offsets = [4, 0], sizes = [4, 32], strides = [1, 1]} : vector<8x32xf32> to vector<4x32xf32>
    %cst_97 = arith.constant 0.000000e+00 : f32
    %248 = vector.broadcast %cst_97 : f32 to vector<4x4xf32>
    %c0_98 = arith.constant 0 : index
    %c0_99 = arith.constant 0 : index
    %c0_100 = arith.constant 0 : index
    %249 = vector.load %arg6[%c0_98, %c0_99, %c0_100] : memref<3x4x32xf32, #tpu.memory_space<vmem>>, vector<1x4x32xf32>
    %250 = vector.shape_cast %249 : vector<1x4x32xf32> to vector<4x32xf32>
    %251 = arith.mulf %250, %247 : vector<4x32xf32>
    %cst_101 = arith.constant dense<0.000000e+00> : vector<4x4xf32>
    %252 = tpu.matmul %251, %13, %cst_101 {dimension_numbers = #tpu.dot_dimension_numbers<[1], [0], [0], [1], [0, 0, 1, 1], [], []>} : vector<4x32xf32>, vector<32x4xf32>, vector<4x4xf32> -> vector<4x4xf32>
    %253 = vector.shape_cast %252 : vector<4x4xf32> to vector<1x4x4xf32>
    %cst_102 = arith.constant dense<0x7F800000> : vector<1xf32>
    %254 = vector.multi_reduction <minimumf>, %253, %cst_102 [1, 2] : vector<1x4x4xf32> to vector<1xf32>
    %255 = vector.shape_cast %254 : vector<1xf32> to vector<1x1x1xf32>
    %256 = vector.extract %255[0, 0, 0] : f32 from vector<1x1x1xf32>
    %257 = vector.broadcast %256 : f32 to vector<1x1xf32>
    %258 = vector.broadcast %257 : vector<1x1xf32> to vector<4x4xf32>
    %259 = arith.subf %252, %258 : vector<4x4xf32>
    %260 = vector.shape_cast %259 : vector<4x4xf32> to vector<1x4x4xf32>
    %cst_103 = arith.constant dense<0xFF800000> : vector<1xf32>
    %261 = vector.multi_reduction <maximumf>, %260, %cst_103 [1, 2] : vector<1x4x4xf32> to vector<1xf32>
    %262 = vector.shape_cast %261 : vector<1xf32> to vector<1x1x1xf32>
    %263 = vector.extract %262[0, 0, 0] : f32 from vector<1x1x1xf32>
    %264 = vector.broadcast %263 : f32 to vector<1x1xf32>
    %265 = tpu.reciprocal %264 {approx = true} : vector<1x1xf32> -> vector<1x1xf32>
    %266 = vector.broadcast %265 : vector<1x1xf32> to vector<4x4xf32>
    %267 = arith.mulf %259, %266 : vector<4x4xf32>
    %268 = arith.addf %248, %267 : vector<4x4xf32>
    %c1_104 = arith.constant 1 : index
    %c0_105 = arith.constant 0 : index
    %c0_106 = arith.constant 0 : index
    %269 = vector.load %arg6[%c1_104, %c0_105, %c0_106] : memref<3x4x32xf32, #tpu.memory_space<vmem>>, vector<1x4x32xf32>
    %270 = vector.shape_cast %269 : vector<1x4x32xf32> to vector<4x32xf32>
    %271 = arith.mulf %270, %247 : vector<4x32xf32>
    %cst_107 = arith.constant dense<0.000000e+00> : vector<4x4xf32>
    %272 = tpu.matmul %271, %13, %cst_107 {dimension_numbers = #tpu.dot_dimension_numbers<[1], [0], [0], [1], [0, 0, 1, 1], [], []>} : vector<4x32xf32>, vector<32x4xf32>, vector<4x4xf32> -> vector<4x4xf32>
    %273 = vector.shape_cast %272 : vector<4x4xf32> to vector<1x4x4xf32>
    %cst_108 = arith.constant dense<0x7F800000> : vector<1xf32>
    %274 = vector.multi_reduction <minimumf>, %273, %cst_108 [1, 2] : vector<1x4x4xf32> to vector<1xf32>
    %275 = vector.shape_cast %274 : vector<1xf32> to vector<1x1x1xf32>
    %276 = vector.extract %275[0, 0, 0] : f32 from vector<1x1x1xf32>
    %277 = vector.broadcast %276 : f32 to vector<1x1xf32>
    %278 = vector.broadcast %277 : vector<1x1xf32> to vector<4x4xf32>
    %279 = arith.subf %272, %278 : vector<4x4xf32>
    %280 = vector.shape_cast %279 : vector<4x4xf32> to vector<1x4x4xf32>
    %cst_109 = arith.constant dense<0xFF800000> : vector<1xf32>
    %281 = vector.multi_reduction <maximumf>, %280, %cst_109 [1, 2] : vector<1x4x4xf32> to vector<1xf32>
    %282 = vector.shape_cast %281 : vector<1xf32> to vector<1x1x1xf32>
    %283 = vector.extract %282[0, 0, 0] : f32 from vector<1x1x1xf32>
    %284 = vector.broadcast %283 : f32 to vector<1x1xf32>
    %285 = tpu.reciprocal %284 {approx = true} : vector<1x1xf32> -> vector<1x1xf32>
    %286 = vector.broadcast %285 : vector<1x1xf32> to vector<4x4xf32>
    %287 = arith.mulf %279, %286 : vector<4x4xf32>
    %288 = arith.addf %268, %287 : vector<4x4xf32>
    %c2_110 = arith.constant 2 : index
    %c0_111 = arith.constant 0 : index
    %c0_112 = arith.constant 0 : index
    %289 = vector.load %arg6[%c2_110, %c0_111, %c0_112] : memref<3x4x32xf32, #tpu.memory_space<vmem>>, vector<1x4x32xf32>
    %290 = vector.shape_cast %289 : vector<1x4x32xf32> to vector<4x32xf32>
    %291 = arith.mulf %290, %247 : vector<4x32xf32>
    %cst_113 = arith.constant dense<0.000000e+00> : vector<4x4xf32>
    %292 = tpu.matmul %291, %13, %cst_113 {dimension_numbers = #tpu.dot_dimension_numbers<[1], [0], [0], [1], [0, 0, 1, 1], [], []>} : vector<4x32xf32>, vector<32x4xf32>, vector<4x4xf32> -> vector<4x4xf32>
    %293 = vector.shape_cast %292 : vector<4x4xf32> to vector<1x4x4xf32>
    %cst_114 = arith.constant dense<0x7F800000> : vector<1xf32>
    %294 = vector.multi_reduction <minimumf>, %293, %cst_114 [1, 2] : vector<1x4x4xf32> to vector<1xf32>
    %295 = vector.shape_cast %294 : vector<1xf32> to vector<1x1x1xf32>
    %296 = vector.extract %295[0, 0, 0] : f32 from vector<1x1x1xf32>
    %297 = vector.broadcast %296 : f32 to vector<1x1xf32>
    %298 = vector.broadcast %297 : vector<1x1xf32> to vector<4x4xf32>
    %299 = arith.subf %292, %298 : vector<4x4xf32>
    %300 = vector.shape_cast %299 : vector<4x4xf32> to vector<1x4x4xf32>
    %cst_115 = arith.constant dense<0xFF800000> : vector<1xf32>
    %301 = vector.multi_reduction <maximumf>, %300, %cst_115 [1, 2] : vector<1x4x4xf32> to vector<1xf32>
    %302 = vector.shape_cast %301 : vector<1xf32> to vector<1x1x1xf32>
    %303 = vector.extract %302[0, 0, 0] : f32 from vector<1x1x1xf32>
    %304 = vector.broadcast %303 : f32 to vector<1x1xf32>
    %305 = tpu.reciprocal %304 {approx = true} : vector<1x1xf32> -> vector<1x1xf32>
    %306 = vector.broadcast %305 : vector<1x1xf32> to vector<4x4xf32>
    %307 = arith.mulf %299, %306 : vector<4x4xf32>
    %308 = arith.addf %288, %307 : vector<4x4xf32>
    %cst_116 = arith.constant 0.333333343 : f32
    %309 = vector.broadcast %cst_116 : f32 to vector<4x4xf32>
    %310 = arith.mulf %308, %309 : vector<4x4xf32>
    %311 = tpu.concatenate %246, %310 in 0 : vector<4x4xf32>, vector<4x4xf32> -> vector<8x4xf32>
    %cst_117 = arith.constant dense<0.000000e+00> : vector<32x4xf32>
    %312 = tpu.matmul %14, %311, %cst_117 {dimension_numbers = #tpu.dot_dimension_numbers<[1], [0], [0], [1], [0, 0, 1, 1], [], []>} : vector<32x8xf32>, vector<8x4xf32>, vector<32x4xf32> -> vector<32x4xf32>
    %cst_118 = arith.constant dense<0.000000e+00> : vector<32x128xf32>
    %313 = tpu.matmul %312, %15, %cst_118 {dimension_numbers = #tpu.dot_dimension_numbers<[1], [0], [0], [1], [0, 0, 1, 1], [], []>} : vector<32x4xf32>, vector<4x128xf32>, vector<32x128xf32> -> vector<32x128xf32>
    %314 = arith.truncf %180 : vector<32x128xf32> to vector<32x128xbf16>
    %cst_119 = arith.constant dense<0.000000e+00> : vector<32x128xf32>
    %315 = tpu.matmul %8, %314, %cst_119 {dimension_numbers = #tpu.dot_dimension_numbers<[1], [0], [0], [1], [0, 0, 1, 1], [], []>} : vector<32x32xbf16>, vector<32x128xbf16>, vector<32x128xf32> -> vector<32x128xf32>
    %316 = arith.truncf %315 : vector<32x128xf32> to vector<32x128xbf16>
    %cst_120 = arith.constant dense<0.000000e+00> : vector<32x128xf32>
    %317 = tpu.matmul %10, %314, %cst_120 {dimension_numbers = #tpu.dot_dimension_numbers<[1], [0], [0], [1], [0, 0, 1, 1], [], []>} : vector<32x32xbf16>, vector<32x128xbf16>, vector<32x128xf32> -> vector<32x128xf32>
    %318 = arith.truncf %317 : vector<32x128xf32> to vector<32x128xbf16>
    %319 = tpu.concatenate %316, %314, %318 in 1 : vector<32x128xbf16>, vector<32x128xbf16>, vector<32x128xbf16> -> vector<32x384xbf16>
    %cst_121 = arith.constant dense<0.000000e+00> : vector<32x128xf32>
    %320 = tpu.matmul %319, %6, %cst_121 {dimension_numbers = #tpu.dot_dimension_numbers<[1], [0], [0], [1], [0, 0, 1, 1], [], []>} : vector<32x384xbf16>, vector<384x128xbf16>, vector<32x128xf32> -> vector<32x128xf32>
    %321 = vector.broadcast %4 : vector<1x128xf32> to vector<32x128xf32>
    %322 = arith.addf %320, %321 : vector<32x128xf32>
    %cst_122 = arith.constant 0.000000e+00 : f32
    %323 = vector.broadcast %cst_122 : f32 to vector<32x128xf32>
    %324 = arith.maximumf %322, %323 : vector<32x128xf32>
    %325 = arith.mulf %313, %324 : vector<32x128xf32>
    %326 = arith.truncf %325 : vector<32x128xf32> to vector<32x128xbf16>
    %c0_123 = arith.constant 0 : index
    %c0_124 = arith.constant 0 : index
    %c0_125 = arith.constant 0 : index
    %327 = vector.load %arg12[%c0_123, %c0_124, %c0_125] : memref<2x16x32xbf16, #tpu.memory_space<vmem>>, vector<1x16x32xbf16>
    %328 = vector.shape_cast %327 : vector<1x16x32xbf16> to vector<16x32xbf16>
    %cst_126 = arith.constant dense<0.000000e+00> : vector<16x128xf32>
    %329 = tpu.matmul %328, %326, %cst_126 {dimension_numbers = #tpu.dot_dimension_numbers<[1], [0], [0], [1], [0, 0, 1, 1], [], []>} : vector<16x32xbf16>, vector<32x128xbf16>, vector<16x128xf32> -> vector<16x128xf32>
    %c1_127 = arith.constant 1 : index
    %c0_128 = arith.constant 0 : index
    %c0_129 = arith.constant 0 : index
    %330 = vector.load %arg12[%c1_127, %c0_128, %c0_129] : memref<2x16x32xbf16, #tpu.memory_space<vmem>>, vector<1x16x32xbf16>
    %331 = vector.shape_cast %330 : vector<1x16x32xbf16> to vector<16x32xbf16>
    %cst_130 = arith.constant dense<0.000000e+00> : vector<16x128xf32>
    %332 = tpu.matmul %331, %326, %cst_130 {dimension_numbers = #tpu.dot_dimension_numbers<[1], [0], [0], [1], [0, 0, 1, 1], [], []>} : vector<16x32xbf16>, vector<32x128xbf16>, vector<16x128xf32> -> vector<16x128xf32>
    %333 = arith.maximumf %329, %332 : vector<16x128xf32>
    %334 = arith.truncf %333 : vector<16x128xf32> to vector<16x128xbf16>
    %c0_131 = arith.constant 0 : index
    %c0_132 = arith.constant 0 : index
    %c0_133 = arith.constant 0 : index
    %335 = vector.load %arg13[%c0_131, %c0_132, %c0_133] : memref<2x128x128xbf16, #tpu.memory_space<vmem>>, vector<1x128x128xbf16>
    %336 = vector.shape_cast %335 : vector<1x128x128xbf16> to vector<128x128xbf16>
    %cst_134 = arith.constant dense<0.000000e+00> : vector<16x128xf32>
    %337 = tpu.matmul %334, %336, %cst_134 {dimension_numbers = #tpu.dot_dimension_numbers<[1], [0], [0], [1], [0, 0, 1, 1], [], []>} : vector<16x128xbf16>, vector<128x128xbf16>, vector<16x128xf32> -> vector<16x128xf32>
    %c1_135 = arith.constant 1 : index
    %c0_136 = arith.constant 0 : index
    %c0_137 = arith.constant 0 : index
    %338 = vector.load %arg13[%c1_135, %c0_136, %c0_137] : memref<2x128x128xbf16, #tpu.memory_space<vmem>>, vector<1x128x128xbf16>
    %339 = vector.shape_cast %338 : vector<1x128x128xbf16> to vector<128x128xbf16>
    %cst_138 = arith.constant dense<0.000000e+00> : vector<16x128xf32>
    %340 = tpu.matmul %334, %339, %cst_138 {dimension_numbers = #tpu.dot_dimension_numbers<[1], [0], [0], [1], [0, 0, 1, 1], [], []>} : vector<16x128xbf16>, vector<128x128xbf16>, vector<16x128xf32> -> vector<16x128xf32>
    %341 = arith.maximumf %337, %340 : vector<16x128xf32>
    %c0_139 = arith.constant 0 : index
    %c0_140 = arith.constant 0 : index
    %c0_141 = arith.constant 0 : index
    %342 = vector.load %arg14[%c0_139, %c0_140, %c0_141] : memref<1x16x128xf32, #tpu.memory_space<vmem>>, vector<1x16x128xf32>
    %343 = vector.shape_cast %342 : vector<1x16x128xf32> to vector<16x128xf32>
    %344 = vector.shape_cast %341 : vector<16x128xf32> to vector<1x16x128xf32>
    tpu.vector_store %arg14[%c0_139, %c0_140, %c0_141], %344 {strides = array<i32>} : memref<1x16x128xf32, #tpu.memory_space<vmem>>, vector<1x16x128xf32>,
    return
  }
  func.func @transform_0(%arg0: i32) -> (i32, i32, i32) {
    %c0_i32 = arith.constant 0 : i32
    %c0_i32_0 = arith.constant 0 : i32
    %c0_i32_1 = arith.constant 0 : i32
    return %arg0, %c0_i32, %c0_i32_0 : i32, i32, i32
  }
  func.func @transform_1(%arg0: i32) -> (i32, i32) {
    %c0_i32 = arith.constant 0 : i32
    %c0_i32_0 = arith.constant 0 : i32
    %c0_i32_1 = arith.constant 0 : i32
    return %c0_i32, %c0_i32_0 : i32, i32
  }
  func.func @transform_2(%arg0: i32) -> (i32, i32) {
    %c0_i32 = arith.constant 0 : i32
    %c0_i32_0 = arith.constant 0 : i32
    %c0_i32_1 = arith.constant 0 : i32
    return %c0_i32, %c0_i32_0 : i32, i32
  }
  func.func @transform_3(%arg0: i32) -> (i32, i32) {
    %c0_i32 = arith.constant 0 : i32
    %c0_i32_0 = arith.constant 0 : i32
    %c0_i32_1 = arith.constant 0 : i32
    return %c0_i32, %c0_i32_0 : i32, i32
  }
  func.func @transform_4(%arg0: i32) -> (i32, i32, i32) {
    %c0_i32 = arith.constant 0 : i32
    %c0_i32_0 = arith.constant 0 : i32
    %c0_i32_1 = arith.constant 0 : i32
    %c0_i32_2 = arith.constant 0 : i32
    return %c0_i32, %c0_i32_0, %c0_i32_1 : i32, i32, i32
  }
  func.func @transform_5(%arg0: i32) -> (i32, i32, i32) {
    %c0_i32 = arith.constant 0 : i32
    %c0_i32_0 = arith.constant 0 : i32
    %c0_i32_1 = arith.constant 0 : i32
    %c0_i32_2 = arith.constant 0 : i32
    return %c0_i32, %c0_i32_0, %c0_i32_1 : i32, i32, i32
  }
  func.func @transform_6(%arg0: i32) -> (i32, i32) {
    %c0_i32 = arith.constant 0 : i32
    %c0_i32_0 = arith.constant 0 : i32
    %c0_i32_1 = arith.constant 0 : i32
    return %c0_i32, %c0_i32_0 : i32, i32
  }
  func.func @transform_7(%arg0: i32) -> (i32, i32) {
    %c0_i32 = arith.constant 0 : i32
    %c0_i32_0 = arith.constant 0 : i32
    %c0_i32_1 = arith.constant 0 : i32
    return %c0_i32, %c0_i32_0 : i32, i32
  }
  func.func @transform_8(%arg0: i32) -> (i32, i32) {
    %c0_i32 = arith.constant 0 : i32
    %c0_i32_0 = arith.constant 0 : i32
    %c0_i32_1 = arith.constant 0 : i32
    return %c0_i32, %c0_i32_0 : i32, i32
  }
  func.func @transform_9(%arg0: i32) -> (i32, i32) {
    %c0_i32 = arith.constant 0 : i32
    %c0_i32_0 = arith.constant 0 : i32
    %c0_i32_1 = arith.constant 0 : i32
    return %c0_i32, %c0_i32_0 : i32, i32
  }
  func.func @transform_10(%arg0: i32) -> (i32, i32) {
    %c0_i32 = arith.constant 0 : i32
    %c0_i32_0 = arith.constant 0 : i32
    %c0_i32_1 = arith.constant 0 : i32
    return %c0_i32, %c0_i32_0 : i32, i32
  }
  func.func @transform_11(%arg0: i32) -> (i32, i32, i32) {
    %c0_i32 = arith.constant 0 : i32
    %c0_i32_0 = arith.constant 0 : i32
    %c0_i32_1 = arith.constant 0 : i32
    %c0_i32_2 = arith.constant 0 : i32
    return %c0_i32, %c0_i32_0, %c0_i32_1 : i32, i32, i32
  }
  func.func @transform_12(%arg0: i32) -> (i32, i32, i32) {
    %c0_i32 = arith.constant 0 : i32
    %c0_i32_0 = arith.constant 0 : i32
    %c0_i32_1 = arith.constant 0 : i32
    %c0_i32_2 = arith.constant 0 : i32
    return %c0_i32, %c0_i32_0, %c0_i32_1 : i32, i32, i32
  }
  func.func @transform_13(%arg0: i32) -> (i32, i32, i32) {
    %c0_i32 = arith.constant 0 : i32
    %c0_i32_0 = arith.constant 0 : i32
    %c0_i32_1 = arith.constant 0 : i32
    return %arg0, %c0_i32, %c0_i32_0 : i32, i32, i32
  }
}

</mosaic_0001>

<llo_original>
// kernel: tpu_custom_call.1
$region0: #{tpu_custom_call.1}
  #allocation0 [shape = 'u32[]', space=smem, size = 0x4, offset = 0x4, fixed_abs, tag = 'smem constant byte address 0x4 - core index']
  #allocation1 [shape = 'u32[144,128]{1,0:T(1,128)}', space=vmem, size = 0x12000, scoped, tag = 'internal scratch']
  %s0 = inlined_call_operand.hbm [shape: f32[1,32,128], index: 0, kind: input, shape index: {}]
  %s1 = inlined_call_operand.hbm [shape: bf16[128,128], index: 1, kind: input, shape index: {}]
  %s2 = inlined_call_operand.vmem [shape: bf16[384,128], index: 2, kind: input, shape index: {}]
  %s3 = inlined_call_operand.vmem [shape: f32[2,128], index: 3, kind: input, shape index: {}]
  %s4 = inlined_call_operand.hbm [shape: bf16[2,32,32], index: 4, kind: input, shape index: {}]
  %s5 = inlined_call_operand.vmem [shape: f32[3,4,32], index: 5, kind: input, shape index: {}]
  %s6 = inlined_call_operand.hbm [shape: f32[8,32], index: 6, kind: input, shape index: {}]
  %s7 = inlined_call_operand.vmem [shape: f32[128,32], index: 7, kind: input, shape index: {}]
  %s8 = inlined_call_operand.vmem [shape: f32[32,4], index: 8, kind: input, shape index: {}]
  %s9 = inlined_call_operand.vmem [shape: f32[32,8], index: 9, kind: input, shape index: {}]
  %s10 = inlined_call_operand.vmem [shape: f32[4,128], index: 10, kind: input, shape index: {}]
  %s11 = inlined_call_operand.vmem [shape: bf16[2,16,32], index: 11, kind: input, shape index: {}]
  %s12 = inlined_call_operand.hbm [shape: bf16[2,128,128], index: 12, kind: input, shape index: {}]
  %s13 = inlined_call_operand.hbm [shape: f32[1,16,128], index: 13, kind: output, shape index: {}]
  %s14 = sld [smem:[#allocation0]]
  $region82: #{tpu_custom_call.1} parent=0
    _
  %s16 = ssub.s32 1, %s14
  %s17 = scalar_select 0, %s16, %s14
  $region1: #{tpu_custom_call.1} parent=0
    #allocation2 [shape = 'u8[16384]{0}', space=vmem, size = 0x4000, scoped, tag = 'input window, operand 0, single buffered']
    #allocation3 [shape = 's32[1]{0}', space=sflag, size = 0x4, scoped, tag = 'scoped memory for tpu_custom_call.1']
    #allocation4 [shape = 's32[1]{0}', space=sflag, size = 0x4, scoped, tag = 'scoped memory for tpu_custom_call.1']
    #allocation5 [shape = 'u8[32768]{0}', space=vmem, size = 0x8000, scoped, tag = 'input window, operand 1, single buffered']
    #allocation6 [shape = 's32[1]{0}', space=sflag, size = 0x4, scoped, tag = 'scoped memory for tpu_custom_call.1']
    #allocation7 [shape = 'u8[16384]{0}', space=vmem, size = 0x4000, scoped, tag = 'input window, operand 4, single buffered']
    #allocation8 [shape = 'u8[4096]{0}', space=vmem, size = 0x1000, scoped, tag = 'input window, operand 6, single buffered']
    #allocation9 [shape = 's32[1]{0}', space=sflag, size = 0x4, scoped, tag = 'scoped memory for tpu_custom_call.1']
    #allocation10 [shape = 'u8[65536]{0}', space=vmem, size = 0x10000, scoped, tag = 'input window, operand 12, single buffered']
    #allocation11 [shape = 'u8[8192]{0}', space=vmem, size = 0x2000, scoped, tag = 'output window, operand 0, single buffered']
    %18 = vsyncpa [#allocation3], 0
    %19 = vsyncpa [#allocation6], 0
    %20 = vsyncpa [#allocation9], 0
    %21 = vsyncpa [#allocation4], 0
    // Predicated region
    $region2: #{tpu_custom_call.1} parent=1 // pred_check
      _
    $region3: #{tpu_custom_call.1} parent=1 // pred_check_branch
      %23 = sbr.rel (0) target = $region5
    $region4: #{tpu_custom_call.1} parent=1 // pred_region
      %s25 = ssub.s32 512, 512
      %26 = vsyncadd [#allocation3], %s25
      %s27 = sshll.u32 [#allocation2], 4
      %s28 = int_to_ptr.vmem [resolvable:$true] %s27
      %33 = dma.hbm_to_vmem [thread:$0]  %s0, 512, %s28, [#allocation3], 128, 128, 8
    $region5: #{tpu_custom_call.1} parent=1 // pred_fallthru
      _
    // Predicated region
    $region6: #{tpu_custom_call.1} parent=1 // pred_check
      _
    $region7: #{tpu_custom_call.1} parent=1 // pred_check_branch
      %35 = sbr.rel (0) target = $region9
    $region8: #{tpu_custom_call.1} parent=1 // pred_region
      %s37 = ssub.s32 1024, 1024
      %38 = vsyncadd [#allocation6], %s37
      %s39 = sshll.u32 [#allocation5], 4
      %s40 = int_to_ptr.vmem [resolvable:$true] %s39
      %45 = dma.hbm_to_vmem [thread:$0]  %s1, 1024, %s40, [#allocation6], 64, 64, 4
    $region9: #{tpu_custom_call.1} parent=1 // pred_fallthru
      _
    // Predicated region
    $region10: #{tpu_custom_call.1} parent=1 // pred_check
      _
    $region11: #{tpu_custom_call.1} parent=1 // pred_check_branch
      %47 = sbr.rel (0) target = $region13
    $region12: #{tpu_custom_call.1} parent=1 // pred_region
      _
    $region13: #{tpu_custom_call.1} parent=1 // pred_fallthru
      _
    // Predicated region
    $region14: #{tpu_custom_call.1} parent=1 // pred_check
      _
    $region15: #{tpu_custom_call.1} parent=1 // pred_check_branch
      %49 = sbr.rel (0) target = $region17
    $region16: #{tpu_custom_call.1} parent=1 // pred_region
      _
    $region17: #{tpu_custom_call.1} parent=1 // pred_fallthru
      _
    // Predicated region
    $region18: #{tpu_custom_call.1} parent=1 // pred_check
      _
    $region19: #{tpu_custom_call.1} parent=1 // pred_check_branch
      %51 = sbr.rel (0) target = $region21
    $region20: #{tpu_custom_call.1} parent=1 // pred_region
      %s53 = ssub.s32 512, 512
      %54 = vsyncadd [#allocation6], %s53
      %s55 = sshll.u32 [#allocation7], 4
      %s56 = int_to_ptr.vmem [resolvable:$true] %s55
      %61 = dma.hbm_to_vmem [thread:$0]  %s4, 512, %s56, [#allocation6], 64, 64, 4
    $region21: #{tpu_custom_call.1} parent=1 // pred_fallthru
      _
    // Predicated region
    $region22: #{tpu_custom_call.1} parent=1 // pred_check
      _
    $region23: #{tpu_custom_call.1} parent=1 // pred_check_branch
      %63 = sbr.rel (0) target = $region25
    $region24: #{tpu_custom_call.1} parent=1 // pred_region
      _
    $region25: #{tpu_custom_call.1} parent=1 // pred_fallthru
      _
    // Predicated region
    $region26: #{tpu_custom_call.1} parent=1 // pred_check
      _
    $region27: #{tpu_custom_call.1} parent=1 // pred_check_branch
      %65 = sbr.rel (0) target = $region29
    $region28: #{tpu_custom_call.1} parent=1 // pred_region
      %s67 = ssub.s32 128, 128
      %68 = vsyncadd [#allocation9], %s67
      %s70 = sshll.u32 [#allocation8], 4
      %s71 = int_to_ptr.vmem [resolvable:$true] %s70
      %73 = dma.hbm_to_vmem [thread:$0]  %s6, 128, %s71, [#allocation9]
    $region29: #{tpu_custom_call.1} parent=1 // pred_fallthru
      _
    // Predicated region
    $region30: #{tpu_custom_call.1} parent=1 // pred_check
      _
    $region31: #{tpu_custom_call.1} parent=1 // pred_check_branch
      %75 = sbr.rel (0) target = $region33
    $region32: #{tpu_custom_call.1} parent=1 // pred_region
      _
    $region33: #{tpu_custom_call.1} parent=1 // pred_fallthru
      _
    // Predicated region
    $region34: #{tpu_custom_call.1} parent=1 // pred_check
      _
    $region35: #{tpu_custom_call.1} parent=1 // pred_check_branch
      %77 = sbr.rel (0) target = $region37
    $region36: #{tpu_custom_call.1} parent=1 // pred_region
      _
    $region37: #{tpu_custom_call.1} parent=1 // pred_fallthru
      _
    // Predicated region
    $region38: #{tpu_custom_call.1} parent=1 // pred_check
      _
    $region39: #{tpu_custom_call.1} parent=1 // pred_check_branch
      %79 = sbr.rel (0) target = $region41
    $region40: #{tpu_custom_call.1} parent=1 // pred_region
      _
    $region41: #{tpu_custom_call.1} parent=1 // pred_fallthru
      _
    // Predicated region
    $region42: #{tpu_custom_call.1} parent=1 // pred_check
      _
    $region43: #{tpu_custom_call.1} parent=1 // pred_check_branch
      %81 = sbr.rel (0) target = $region45
    $region44: #{tpu_custom_call.1} parent=1 // pred_region
      _
    $region45: #{tpu_custom_call.1} parent=1 // pred_fallthru
      _
    // Predicated region
    $region46: #{tpu_custom_call.1} parent=1 // pred_check
      _
    $region47: #{tpu_custom_call.1} parent=1 // pred_check_branch
      %83 = sbr.rel (0) target = $region49
    $region48: #{tpu_custom_call.1} parent=1 // pred_region
      _
    $region49: #{tpu_custom_call.1} parent=1 // pred_fallthru
      _
    // Predicated region
    $region50: #{tpu_custom_call.1} parent=1 // pred_check
      _
    $region51: #{tpu_custom_call.1} parent=1 // pred_check_branch
      %85 = sbr.rel (0) target = $region53
    $region52: #{tpu_custom_call.1} parent=1 // pred_region
      %s87 = ssub.s32 2048, 2048
      %88 = vsyncadd [#allocation9], %s87
      %s89 = sshll.u32 [#allocation10], 4
      %s90 = int_to_ptr.vmem [resolvable:$true] %s89
      %95 = dma.hbm_to_vmem [thread:$0]  %s12, 2048, %s90, [#allocation9], 64, 64, 4
    $region53: #{tpu_custom_call.1} parent=1 // pred_fallthru
      _
    // Predicated region
    $region54: #{tpu_custom_call.1} parent=1 // pred_check
      _
    $region55: #{tpu_custom_call.1} parent=1 // pred_check_branch
      %97 = sbr.rel (0) target = $region57
    $region56: #{tpu_custom_call.1} parent=1 // pred_region
      %98 = dma.done [#allocation3], 512
    $region57: #{tpu_custom_call.1} parent=1 // pred_fallthru
      _
    // Predicated region
    $region58: #{tpu_custom_call.1} parent=1 // pred_check
      _
    $region59: #{tpu_custom_call.1} parent=1 // pred_check_branch
      %100 = sbr.rel (0) target = $region61
    $region60: #{tpu_custom_call.1} parent=1 // pred_region
      %101 = dma.done [#allocation6], 1024
    $region61: #{tpu_custom_call.1} parent=1 // pred_fallthru
      _
    // Predicated region
    $region62: #{tpu_custom_call.1} parent=1 // pred_check
      _
    $region63: #{tpu_custom_call.1} parent=1 // pred_check_branch
      %103 = sbr.rel (0) target = $region65
    $region64: #{tpu_custom_call.1} parent=1 // pred_region
      %104 = dma.done [#allocation6], 512
    $region65: #{tpu_custom_call.1} parent=1 // pred_fallthru
      _
    // Predicated region
    $region66: #{tpu_custom_call.1} parent=1 // pred_check
      _
    $region67: #{tpu_custom_call.1} parent=1 // pred_check_branch
      %106 = sbr.rel (0) target = $region69
    $region68: #{tpu_custom_call.1} parent=1 // pred_region
      %107 = dma.done [#allocation9], 128
    $region69: #{tpu_custom_call.1} parent=1 // pred_fallthru
      _
    // Predicated region
    $region70: #{tpu_custom_call.1} parent=1 // pred_check
      _
    $region71: #{tpu_custom_call.1} parent=1 // pred_check_branch
      %109 = sbr.rel (0) target = $region73
    $region72: #{tpu_custom_call.1} parent=1 // pred_region
      %110 = dma.done [#allocation9], 2048
    $region73: #{tpu_custom_call.1} parent=1 // pred_fallthru
      _
    %v112 = vld [vmem:[#allocation2] sm:$0xff]
    %v113 = vld [vmem:[#allocation2 + $0x8] sm:$0xff]
    %v114 = vld [vmem:[#allocation2 + $0x10] sm:$0xff]
    %v115 = vld [vmem:[#allocation2 + $0x18] sm:$0xff]
    %v116 = vld [vmem:[%s3] sm:$0x3]
    %v117 = vld [vmem:[#allocation5] sm:$0xf]
    %v118 = vld [vmem:[#allocation5 + $0x4] sm:$0xf]
    %v119 = vld [vmem:[#allocation5 + $0x8] sm:$0xf]
    %v120 = vld [vmem:[#allocation5 + $0xc] sm:$0xf]
    %v121 = vld [vmem:[#allocation5 + $0x10] sm:$0xf]
    %v122 = vld [vmem:[#allocation5 + $0x14] sm:$0xf]
    %v123 = vld [vmem:[#allocation5 + $0x18] sm:$0xf]
    %v124 = vld [vmem:[#allocation5 + $0x1c] sm:$0xf]
    %v125 = vld [vmem:[#allocation5 + $0x20] sm:$0xf]
    %v126 = vld [vmem:[#allocation5 + $0x24] sm:$0xf]
    %v127 = vld [vmem:[#allocation5 + $0x28] sm:$0xf]
    %v128 = vld [vmem:[#allocation5 + $0x2c] sm:$0xf]
    %v129 = vld [vmem:[#allocation5 + $0x30] sm:$0xf]
    %v130 = vld [vmem:[#allocation5 + $0x34] sm:$0xf]
    %v131 = vld [vmem:[#allocation5 + $0x38] sm:$0xf]
    %v132 = vld [vmem:[#allocation5 + $0x3c] sm:$0xf]
    %v133 = vld [vmem:[%s2] sm:$0xf]
    %v134 = vld [vmem:[%s2 + $0x4] sm:$0xf]
    %v135 = vld [vmem:[%s2 + $0x8] sm:$0xf]
    %v136 = vld [vmem:[%s2 + $0xc] sm:$0xf]
    %v137 = vld [vmem:[%s2 + $0x10] sm:$0xf]
    %v138 = vld [vmem:[%s2 + $0x14] sm:$0xf]
    %v139 = vld [vmem:[%s2 + $0x18] sm:$0xf]
    %v140 = vld [vmem:[%s2 + $0x1c] sm:$0xf]
    %v141 = vld [vmem:[%s2 + $0x20] sm:$0xf]
    %v142 = vld [vmem:[%s2 + $0x24] sm:$0xf]
    %v143 = vld [vmem:[%s2 + $0x28] sm:$0xf]
    %v144 = vld [vmem:[%s2 + $0x2c] sm:$0xf]
    %v145 = vld [vmem:[%s2 + $0x30] sm:$0xf]
    %v146 = vld [vmem:[%s2 + $0x34] sm:$0xf]
    %v147 = vld [vmem:[%s2 + $0x38] sm:$0xf]
    %v148 = vld [vmem:[%s2 + $0x3c] sm:$0xf]
    %v149 = vld [vmem:[%s2 + $0x40] sm:$0xf]
    %v150 = vld [vmem:[%s2 + $0x44] sm:$0xf]
    %v151 = vld [vmem:[%s2 + $0x48] sm:$0xf]
    %v152 = vld [vmem:[%s2 + $0x4c] sm:$0xf]
    %v153 = vld [vmem:[%s2 + $0x50] sm:$0xf]
    %v154 = vld [vmem:[%s2 + $0x54] sm:$0xf]
    %v155 = vld [vmem:[%s2 + $0x58] sm:$0xf]
    %v156 = vld [vmem:[%s2 + $0x5c] sm:$0xf]
    %v157 = vld [vmem:[%s2 + $0x60] sm:$0xf]
    %v158 = vld [vmem:[%s2 + $0x64] sm:$0xf]
    %v159 = vld [vmem:[%s2 + $0x68] sm:$0xf]
    %v160 = vld [vmem:[%s2 + $0x6c] sm:$0xf]
    %v161 = vld [vmem:[%s2 + $0x70] sm:$0xf]
    %v162 = vld [vmem:[%s2 + $0x74] sm:$0xf]
    %v163 = vld [vmem:[%s2 + $0x78] sm:$0xf]
    %v164 = vld [vmem:[%s2 + $0x7c] sm:$0xf]
    %v165 = vld [vmem:[%s2 + $0x80] sm:$0xf]
    %v166 = vld [vmem:[%s2 + $0x84] sm:$0xf]
    %v167 = vld [vmem:[%s2 + $0x88] sm:$0xf]
    %v168 = vld [vmem:[%s2 + $0x8c] sm:$0xf]
    %v169 = vld [vmem:[%s2 + $0x90] sm:$0xf]
    %v170 = vld [vmem:[%s2 + $0x94] sm:$0xf]
    %v171 = vld [vmem:[%s2 + $0x98] sm:$0xf]
    %v172 = vld [vmem:[%s2 + $0x9c] sm:$0xf]
    %v173 = vld [vmem:[%s2 + $0xa0] sm:$0xf]
    %v174 = vld [vmem:[%s2 + $0xa4] sm:$0xf]
    %v175 = vld [vmem:[%s2 + $0xa8] sm:$0xf]
    %v176 = vld [vmem:[%s2 + $0xac] sm:$0xf]
    %v177 = vld [vmem:[%s2 + $0xb0] sm:$0xf]
    %v178 = vld [vmem:[%s2 + $0xb4] sm:$0xf]
    %v179 = vld [vmem:[%s2 + $0xb8] sm:$0xf]
    %v180 = vld [vmem:[%s2 + $0xbc] sm:$0xf]
    %v181 = vld [vmem:[#allocation7] sm:$0xf]
    %v182 = vld [vmem:[#allocation7 + $0x4] sm:$0xf]
    %v183 = vld [vmem:[#allocation7 + $0x8] sm:$0xf]
    %v184 = vld [vmem:[#allocation7 + $0xc] sm:$0xf]
    %s185 = scalar_lea.vmem [#allocation7], 16
    %v186 = vld [vmem:[%s185] sm:$0xf]
    %v187 = vld [vmem:[%s185 + $0x4] sm:$0xf]
    %v188 = vld [vmem:[%s185 + $0x8] sm:$0xf]
    %v189 = vld [vmem:[%s185 + $0xc] sm:$0xf]
    %v190 = vld [vmem:[#allocation8] sm:$0xff]
    %v191 = vld [vmem:[%s7] sm:$0xff]
    %v192 = vld [vmem:[%s7 + $0x8] sm:$0xff]
    %v193 = vld [vmem:[%s7 + $0x10] sm:$0xff]
    %v194 = vld [vmem:[%s7 + $0x18] sm:$0xff]
    %v195 = vld [vmem:[%s7 + $0x20] sm:$0xff]
    %v196 = vld [vmem:[%s7 + $0x28] sm:$0xff]
    %v197 = vld [vmem:[%s7 + $0x30] sm:$0xff]
    %v198 = vld [vmem:[%s7 + $0x38] sm:$0xff]
    %v199 = vld [vmem:[%s7 + $0x40] sm:$0xff]
    %v200 = vld [vmem:[%s7 + $0x48] sm:$0xff]
    %v201 = vld [vmem:[%s7 + $0x50] sm:$0xff]
    %v202 = vld [vmem:[%s7 + $0x58] sm:$0xff]
    %v203 = vld [vmem:[%s7 + $0x60] sm:$0xff]
    %v204 = vld [vmem:[%s7 + $0x68] sm:$0xff]
    %v205 = vld [vmem:[%s7 + $0x70] sm:$0xff]
    %v206 = vld [vmem:[%s7 + $0x78] sm:$0xff]
    %v207 = vld [vmem:[%s8] sm:$0xff]
    %v208 = vld [vmem:[%s8 + $0x8] sm:$0xff]
    %v209 = vld [vmem:[%s8 + $0x10] sm:$0xff]
    %v210 = vld [vmem:[%s8 + $0x18] sm:$0xff]
    %v211 = vld [vmem:[%s9] sm:$0xff]
    %v212 = vld [vmem:[%s9 + $0x8] sm:$0xff]
    %v213 = vld [vmem:[%s9 + $0x10] sm:$0xff]
    %v214 = vld [vmem:[%s9 + $0x18] sm:$0xff]
    %v215 = vld [vmem:[%s10] sm:$0xf]
    %v216 = vpack.c.bf16 %v113, %v112
    %v217 = vpack.c.bf16 %v115, %v114
    %v218 = vlaneseq
    %v219 = vshrl.u32 %v218, 7
    %v220 = vsub.s32 0, %v219
    %v221 = vrot.slane %v116, %v220
    %v238 = vunpack.c.l.b16 %v117
    %v239 = vunpack.c.l.b16 %v118
    %v240 = vunpack.c.l.b16 %v119
    %v241 = vunpack.c.l.b16 %v120
    %v242 = vunpack.c.l.b16 %v121
    %v243 = vunpack.c.l.b16 %v122
    %v244 = vunpack.c.l.b16 %v123
    %v245 = vunpack.c.l.b16 %v124
    %v246 = vunpack.c.l.b16 %v125
    %v247 = vunpack.c.l.b16 %v126
    %v248 = vunpack.c.l.b16 %v127
    %v249 = vunpack.c.l.b16 %v128
    %v250 = vunpack.c.l.b16 %v129
    %v251 = vunpack.c.l.b16 %v130
    %v252 = vunpack.c.l.b16 %v131
    %v253 = vunpack.c.l.b16 %v132
    %v254 = vpack.c.b16 %v239, %v238
    %v255 = vpack.c.b16 %v241, %v240
    %v256 = vpack.c.b16 %v243, %v242
    %v257 = vpack.c.b16 %v245, %v244
    %v258 = vpack.c.b16 %v247, %v246
    %v259 = vpack.c.b16 %v249, %v248
    %v260 = vpack.c.b16 %v251, %v250
    %v261 = vpack.c.b16 %v253, %v252
    %270 = vmatprep.subr.bf16.mxu0 0
    %271 = vmatpush1.bf16.msra.mxu0 %v254
    %272 = vmatprep.subr.bf16.mxu0 0
    %273 = vmatpush1.bf16.msra.mxu0 %v255
    %274 = vmatprep.subr.bf16.mxu0 0
    %275 = vmatpush1.bf16.msra.mxu0 %v256
    %276 = vmatprep.subr.bf16.mxu0 0
    %277 = vmatpush1.bf16.msra.mxu0 %v257
    %278 = vmatprep.subr.bf16.mxu0 0
    %279 = vmatpush1.bf16.msra.mxu0 %v258
    %280 = vmatprep.subr.bf16.mxu0 0
    %281 = vmatpush1.bf16.msra.mxu0 %v259
    %282 = vmatprep.subr.bf16.mxu0 0
    %283 = vmatpush1.bf16.msra.mxu0 %v260
    %284 = vmatprep.subr.bf16.mxu0 0
    %285 = vmatpush1.bf16.msra.mxu0 %v261
    %286 = vmatprep.subr.bf16.mxu0 0
    %287 = vmatpush1.bf16.msra.mxu0 0
    %288 = vmatprep.subr.bf16.mxu0 0
    %289 = vmatpush1.bf16.msra.mxu0 0
    %290 = vmatprep.subr.bf16.mxu0 0
    %291 = vmatpush1.bf16.msra.mxu0 0
    %292 = vmatprep.subr.bf16.mxu0 0
    %293 = vmatpush1.bf16.msra.mxu0 0
    %294 = vmatprep.subr.bf16.mxu0 0
    %295 = vmatpush1.bf16.msra.mxu0 0
    %296 = vmatprep.subr.bf16.mxu0 0
    %297 = vmatpush1.bf16.msra.mxu0 0
    %298 = vmatprep.subr.bf16.mxu0 0
    %299 = vmatpush1.bf16.msra.mxu0 0
    %300 = vmatprep.subr.bf16.mxu0 0
    %301 = vmatpush1.bf16.msra.mxu0 0
    %302 = vmatprep.mubr.bf16.mxu0 0
    %303 = vmatmul.mubr.bf16.gmra.mrb[0].mxu0 %v216
    %v304 = vpop.f32.mrb[0].mxu0
    %v305 = vadd.f32 %v221, %v304
    %v306 = vpop.f32.mrb[0].mxu0
    %v307 = vpop.f32.mrb[0].mxu0
    %v308 = vadd.f32 %v221, %v307
    %v309 = vpop.f32.mrb[0].mxu0
    %310 = vmatprep.mubr.bf16.mxu0 0
    %311 = vmatmul.mubr.bf16.gmra.mrb[0].mxu0 %v217
    %v312 = vpop.f32.mrb[0].mxu0
    %v313 = vadd.f32 %v221, %v312
    %v314 = vpop.f32.mrb[0].mxu0
    %v315 = vpop.f32.mrb[0].mxu0
    %v316 = vadd.f32 %v221, %v315
    %v317 = vpop.f32.mrb[0].mxu0
    %318 = vdwg.mxu0
    %v319 = vmax.f32 %v305, 0.0
    %v320 = vmax.f32 %v308, 0.0
    %v321 = vmax.f32 %v313, 0.0
    %v322 = vmax.f32 %v316, 0.0
    %v323 = vadd.f32 %v112, %v319
    %v324 = vadd.f32 %v113, %v320
    %v325 = vadd.f32 %v114, %v321
    %v326 = vadd.f32 %v115, %v322
    %vm327 = vcmask 261120
    %v329 = vsel %vm327, %v190, 0
    %331 = vmatprep.subr.mxu0 0.0
    %332 = vmatpush1.msra.mxu0 %v112
    %333 = vmatprep.subr.mxu0 0.0
    %334 = vmatpush1.msra.mxu0 %v113
    %335 = vmatprep.subr.mxu0 0.0
    %336 = vmatpush1.msra.mxu0 %v114
    %337 = vmatprep.subr.mxu0 0.0
    %338 = vmatpush1.msra.mxu0 %v115
    %339 = vmatprep.subr.mxu0 0.0
    %340 = vmatpush1.msra.mxu0 0.0
    %341 = vmatprep.subr.mxu0 0.0
    %342 = vmatpush1.msra.mxu0 0.0
    %343 = vmatprep.subr.mxu0 0.0
    %344 = vmatpush1.msra.mxu0 0.0
    %345 = vmatprep.subr.mxu0 0.0
    %346 = vmatpush1.msra.mxu0 0.0
    %347 = vmatprep.subr.mxu0 0.0
    %348 = vmatpush1.msra.mxu0 0.0
    %349 = vmatprep.subr.mxu0 0.0
    %350 = vmatpush1.msra.mxu0 0.0
    %351 = vmatprep.subr.mxu0 0.0
    %352 = vmatpush1.msra.mxu0 0.0
    %353 = vmatprep.subr.mxu0 0.0
    %354 = vmatpush1.msra.mxu0 0.0
    %355 = vmatprep.subr.mxu0 0.0
    %356 = vmatpush1.msra.mxu0 0.0
    %357 = vmatprep.subr.mxu0 0.0
    %358 = vmatpush1.msra.mxu0 0.0
    %359 = vmatprep.subr.mxu0 0.0
    %360 = vmatpush1.msra.mxu0 0.0
    %361 = vmatprep.subr.mxu0 0.0
    %362 = vmatpush1.msra.mxu0 0.0
    %363 = vmatprep.subr.mxu0 0.0
    %364 = vmatpush1.msra.mxu0 0.0
    %365 = vmatprep.subr.mxu0 0.0
    %366 = vmatpush1.msra.mxu0 0.0
    %367 = vmatprep.subr.mxu0 0.0
    %368 = vmatpush1.msra.mxu0 0.0
    %369 = vmatprep.subr.mxu0 0.0
    %370 = vmatpush1.msra.mxu0 0.0
    %371 = vmatprep.subr.mxu0 0.0
    %372 = vmatpush1.msra.mxu0 0.0
    %373 = vmatprep.subr.mxu0 0.0
    %374 = vmatpush1.msra.mxu0 0.0
    %375 = vmatprep.subr.mxu0 0.0
    %376 = vmatpush1.msra.mxu0 0.0
    %377 = vmatprep.subr.mxu0 0.0
    %378 = vmatpush1.msra.mxu0 0.0
    %379 = vmatprep.subr.mxu0 0.0
    %380 = vmatpush1.msra.mxu0 0.0
    %381 = vmatprep.subr.mxu0 0.0
    %382 = vmatpush1.msra.mxu0 0.0
    %383 = vmatprep.subr.mxu0 0.0
    %384 = vmatpush1.msra.mxu0 0.0
    %385 = vmatprep.subr.mxu0 0.0
    %386 = vmatpush1.msra.mxu0 0.0
    %387 = vmatprep.subr.mxu0 0.0
    %388 = vmatpush1.msra.mxu0 0.0
    %389 = vmatprep.subr.mxu0 0.0
    %390 = vmatpush1.msra.mxu0 0.0
    %391 = vmatprep.subr.mxu0 0.0
    %392 = vmatpush1.msra.mxu0 0.0
    %393 = vmatprep.subr.mxu0 0.0
    %394 = vmatpush1.msra.mxu0 0.0
    %395 = vmatprep.mubr.f32.mxu0 0.0
    %396 = vmatmul.mubr.f32.gmra.mrb[0].mxu0 %v329
    %v397 = vpop.f32.mrb[0].mxu0
    %v398 = vadd.f32 0.0, %v397
    %v399 = vpop.f32.mrb[0].mxu0
    %400 = vdwg.mxu0
    %401 = vmatprep.subr.mxu0 0.0
    %402 = vmatpush1.msra.mxu0 %v191
    %403 = vmatprep.subr.mxu0 0.0
    %404 = vmatpush1.msra.mxu0 %v192
    %405 = vmatprep.subr.mxu0 0.0
    %406 = vmatpush1.msra.mxu0 %v193
    %407 = vmatprep.subr.mxu0 0.0
    %408 = vmatpush1.msra.mxu0 %v194
    %409 = vmatprep.subr.mxu0 0.0
    %410 = vmatpush1.msra.mxu0 %v195
    %411 = vmatprep.subr.mxu0 0.0
    %412 = vmatpush1.msra.mxu0 %v196
    %413 = vmatprep.subr.mxu0 0.0
    %414 = vmatpush1.msra.mxu0 %v197
    %415 = vmatprep.subr.mxu0 0.0
    %416 = vmatpush1.msra.mxu0 %v198
    %417 = vmatprep.subr.mxu0 0.0
    %418 = vmatpush1.msra.mxu0 %v199
    %419 = vmatprep.subr.mxu0 0.0
    %420 = vmatpush1.msra.mxu0 %v200
    %421 = vmatprep.subr.mxu0 0.0
    %422 = vmatpush1.msra.mxu0 %v201
    %423 = vmatprep.subr.mxu0 0.0
    %424 = vmatpush1.msra.mxu0 %v202
    %425 = vmatprep.subr.mxu0 0.0
    %426 = vmatpush1.msra.mxu0 %v203
    %427 = vmatprep.subr.mxu0 0.0
    %428 = vmatpush1.msra.mxu0 %v204
    %429 = vmatprep.subr.mxu0 0.0
    %430 = vmatpush1.msra.mxu0 %v205
    %431 = vmatprep.subr.mxu0 0.0
    %432 = vmatpush1.msra.mxu0 %v206
    %433 = vmatprep.subr.mxu0 0.0
    %434 = vmatpush1.msra.mxu0 0.0
    %435 = vmatprep.subr.mxu0 0.0
    %436 = vmatpush1.msra.mxu0 0.0
    %437 = vmatprep.subr.mxu0 0.0
    %438 = vmatpush1.msra.mxu0 0.0
    %439 = vmatprep.subr.mxu0 0.0
    %440 = vmatpush1.msra.mxu0 0.0
    %441 = vmatprep.subr.mxu0 0.0
    %442 = vmatpush1.msra.mxu0 0.0
    %443 = vmatprep.subr.mxu0 0.0
    %444 = vmatpush1.msra.mxu0 0.0
    %445 = vmatprep.subr.mxu0 0.0
    %446 = vmatpush1.msra.mxu0 0.0
    %447 = vmatprep.subr.mxu0 0.0
    %448 = vmatpush1.msra.mxu0 0.0
    %449 = vmatprep.subr.mxu0 0.0
    %450 = vmatpush1.msra.mxu0 0.0
    %451 = vmatprep.subr.mxu0 0.0
    %452 = vmatpush1.msra.mxu0 0.0
    %453 = vmatprep.subr.mxu0 0.0
    %454 = vmatpush1.msra.mxu0 0.0
    %455 = vmatprep.subr.mxu0 0.0
    %456 = vmatpush1.msra.mxu0 0.0
    %457 = vmatprep.subr.mxu0 0.0
    %458 = vmatpush1.msra.mxu0 0.0
    %459 = vmatprep.subr.mxu0 0.0
    %460 = vmatpush1.msra.mxu0 0.0
    %461 = vmatprep.subr.mxu0 0.0
    %462 = vmatpush1.msra.mxu0 0.0
    %463 = vmatprep.subr.mxu0 0.0
    %464 = vmatpush1.msra.mxu0 0.0
    %465 = vmatprep.mubr.f32.mxu0 0.0
    %466 = vmatmul.mubr.f32.gmra.mrb[0].mxu0 %v398
    %v467 = vpop.f32.mrb[0].mxu0
    %v468 = vadd.f32 0.0, %v467
    %v469 = vpop.f32.mrb[0].mxu0
    %470 = vdwg.mxu0
    %v471 = vld [vmem:[%s5] sm:$0xf]
    %v472 = vmul.f32 %v471, %v468
    %v474 = vsel %vm327, %v472, 0
    %476 = vmatprep.subr.mxu0 0.0
    %477 = vmatpush1.msra.mxu0 %v207
    %478 = vmatprep.subr.mxu0 0.0
    %479 = vmatpush1.msra.mxu0 %v208
    %480 = vmatprep.subr.mxu0 0.0
    %481 = vmatpush1.msra.mxu0 %v209
    %482 = vmatprep.subr.mxu0 0.0
    %483 = vmatpush1.msra.mxu0 %v210
    %484 = vmatprep.subr.mxu0 0.0
    %485 = vmatpush1.msra.mxu0 0.0
    %486 = vmatprep.subr.mxu0 0.0
    %487 = vmatpush1.msra.mxu0 0.0
    %488 = vmatprep.subr.mxu0 0.0
    %489 = vmatpush1.msra.mxu0 0.0
    %490 = vmatprep.subr.mxu0 0.0
    %491 = vmatpush1.msra.mxu0 0.0
    %492 = vmatprep.subr.mxu0 0.0
    %493 = vmatpush1.msra.mxu0 0.0
    %494 = vmatprep.subr.mxu0 0.0
    %495 = vmatpush1.msra.mxu0 0.0
    %496 = vmatprep.subr.mxu0 0.0
    %497 = vmatpush1.msra.mxu0 0.0
    %498 = vmatprep.subr.mxu0 0.0
    %499 = vmatpush1.msra.mxu0 0.0
    %500 = vmatprep.subr.mxu0 0.0
    %501 = vmatpush1.msra.mxu0 0.0
    %502 = vmatprep.subr.mxu0 0.0
    %503 = vmatpush1.msra.mxu0 0.0
    %504 = vmatprep.subr.mxu0 0.0
    %505 = vmatpush1.msra.mxu0 0.0
    %506 = vmatprep.subr.mxu0 0.0
    %507 = vmatpush1.msra.mxu0 0.0
    %508 = vmatprep.subr.mxu0 0.0
    %509 = vmatpush1.msra.mxu0 0.0
    %510 = vmatprep.subr.mxu0 0.0
    %511 = vmatpush1.msra.mxu0 0.0
    %512 = vmatprep.subr.mxu0 0.0
    %513 = vmatpush1.msra.mxu0 0.0
    %514 = vmatprep.subr.mxu0 0.0
    %515 = vmatpush1.msra.mxu0 0.0
    %516 = vmatprep.subr.mxu0 0.0
    %517 = vmatpush1.msra.mxu0 0.0
    %518 = vmatprep.subr.mxu0 0.0
    %519 = vmatpush1.msra.mxu0 0.0
    %520 = vmatprep.subr.mxu0 0.0
    %521 = vmatpush1.msra.mxu0 0.0
    %522 = vmatprep.subr.mxu0 0.0
    %523 = vmatpush1.msra.mxu0 0.0
    %524 = vmatprep.subr.mxu0 0.0
    %525 = vmatpush1.msra.mxu0 0.0
    %526 = vmatprep.subr.mxu0 0.0
    %527 = vmatpush1.msra.mxu0 0.0
    %528 = vmatprep.subr.mxu0 0.0
    %529 = vmatpush1.msra.mxu0 0.0
    %530 = vmatprep.subr.mxu0 0.0
    %531 = vmatpush1.msra.mxu0 0.0
    %532 = vmatprep.subr.mxu0 0.0
    %533 = vmatpush1.msra.mxu0 0.0
    %534 = vmatprep.subr.mxu0 0.0
    %535 = vmatpush1.msra.mxu0 0.0
    %536 = vmatprep.subr.mxu0 0.0
    %537 = vmatpush1.msra.mxu0 0.0
    %538 = vmatprep.subr.mxu0 0.0
    %539 = vmatpush1.msra.mxu0 0.0
    %540 = vmatprep.mubr.f32.mxu0 0.0
    %541 = vmatmul.mubr.f32.gmra.mrb[0].mxu0 %v474
    %v542 = vpop.f32.mrb[0].mxu0
    %v543 = vadd.f32 0.0, %v542
    %v544 = vpop.f32.mrb[0].mxu0
    %545 = vdwg.mxu0
    %vm546 = vcmask 27648
    %v547 = vsel %vm546, %v543, inf
    %548 = vmin.xlane.f32.xlu0 %v547
    %v549 = vpop.xlane.xlu0 %548
    %v550 = vrot.slane %v549, 4
    %v551 = vmin.f32 %v549, %v550
    %v552 = vrot.slane %v551, 2
    %v553 = vmin.f32 %v551, %v552
    %v554 = vrot.slane %v553, 1
    %v555 = vmin.f32 %v553, %v554
    %s556 = vtos %v555
    %v557 = vstv %s556
    %v558 = vsub.f32 %v543, %v557
    %v559 = vsel %vm546, %v558, -inf
    %560 = vmax.xlane.f32.xlu0 %v559
    %v561 = vpop.xlane.xlu0 %560
    %v562 = vrot.slane %v561, 4
    %v563 = vmax.f32 %v561, %v562
    %v564 = vrot.slane %v563, 2
    %v565 = vmax.f32 %v563, %v564
    %v566 = vrot.slane %v565, 1
    %v567 = vmax.f32 %v565, %v566
    %s568 = vtos %v567
    %v569 = vstv %s568
    %v570 = vrcp.pop %v569
    %v571 = vmul.f32 %v558, %v570
    %v572 = vadd.f32 %v571, 0.0
    %s573 = scalar_lea.vmem %s5, 4
    %v574 = vld [vmem:[%s573] sm:$0xf]
    %v575 = vmul.f32 %v574, %v468
    %v577 = vsel %vm327, %v575, 0
    %579 = vmatprep.subr.mxu0 0.0
    %580 = vmatpush1.msra.mxu0 %v207
    %581 = vmatprep.subr.mxu0 0.0
    %582 = vmatpush1.msra.mxu0 %v208
    %583 = vmatprep.subr.mxu0 0.0
    %584 = vmatpush1.msra.mxu0 %v209
    %585 = vmatprep.subr.mxu0 0.0
    %586 = vmatpush1.msra.mxu0 %v210
    %587 = vmatprep.subr.mxu0 0.0
    %588 = vmatpush1.msra.mxu0 0.0
    %589 = vmatprep.subr.mxu0 0.0
    %590 = vmatpush1.msra.mxu0 0.0
    %591 = vmatprep.subr.mxu0 0.0
    %592 = vmatpush1.msra.mxu0 0.0
    %593 = vmatprep.subr.mxu0 0.0
    %594 = vmatpush1.msra.mxu0 0.0
    %595 = vmatprep.subr.mxu0 0.0
    %596 = vmatpush1.msra.mxu0 0.0
    %597 = vmatprep.subr.mxu0 0.0
    %598 = vmatpush1.msra.mxu0 0.0
    %599 = vmatprep.subr.mxu0 0.0
    %600 = vmatpush1.msra.mxu0 0.0
    %601 = vmatprep.subr.mxu0 0.0
    %602 = vmatpush1.msra.mxu0 0.0
    %603 = vmatprep.subr.mxu0 0.0
    %604 = vmatpush1.msra.mxu0 0.0
    %605 = vmatprep.subr.mxu0 0.0
    %606 = vmatpush1.msra.mxu0 0.0
    %607 = vmatprep.subr.mxu0 0.0
    %608 = vmatpush1.msra.mxu0 0.0
    %609 = vmatprep.subr.mxu0 0.0
    %610 = vmatpush1.msra.mxu0 0.0
    %611 = vmatprep.subr.mxu0 0.0
    %612 = vmatpush1.msra.mxu0 0.0
    %613 = vmatprep.subr.mxu0 0.0
    %614 = vmatpush1.msra.mxu0 0.0
    %615 = vmatprep.subr.mxu0 0.0
    %616 = vmatpush1.msra.mxu0 0.0
    %617 = vmatprep.subr.mxu0 0.0
    %618 = vmatpush1.msra.mxu0 0.0
    %619 = vmatprep.subr.mxu0 0.0
    %620 = vmatpush1.msra.mxu0 0.0
    %621 = vmatprep.subr.mxu0 0.0
    %622 = vmatpush1.msra.mxu0 0.0
    %623 = vmatprep.subr.mxu0 0.0
    %624 = vmatpush1.msra.mxu0 0.0
    %625 = vmatprep.subr.mxu0 0.0
    %626 = vmatpush1.msra.mxu0 0.0
    %627 = vmatprep.subr.mxu0 0.0
    %628 = vmatpush1.msra.mxu0 0.0
    %629 = vmatprep.subr.mxu0 0.0
    %630 = vmatpush1.msra.mxu0 0.0
    %631 = vmatprep.subr.mxu0 0.0
    %632 = vmatpush1.msra.mxu0 0.0
    %633 = vmatprep.subr.mxu0 0.0
    %634 = vmatpush1.msra.mxu0 0.0
    %635 = vmatprep.subr.mxu0 0.0
    %636 = vmatpush1.msra.mxu0 0.0
    %637 = vmatprep.subr.mxu0 0.0
    %638 = vmatpush1.msra.mxu0 0.0
    %639 = vmatprep.subr.mxu0 0.0
    %640 = vmatpush1.msra.mxu0 0.0
    %641 = vmatprep.subr.mxu0 0.0
    %642 = vmatpush1.msra.mxu0 0.0
    %643 = vmatprep.mubr.f32.mxu0 0.0
    %644 = vmatmul.mubr.f32.gmra.mrb[0].mxu0 %v577
    %v645 = vpop.f32.mrb[0].mxu0
    %v646 = vadd.f32 0.0, %v645
    %v647 = vpop.f32.mrb[0].mxu0
    %648 = vdwg.mxu0
    %v649 = vsel %vm546, %v646, inf
    %650 = vmin.xlane.f32.xlu0 %v649
    %v651 = vpop.xlane.xlu0 %650
    %v652 = vrot.slane %v651, 4
    %v653 = vmin.f32 %v651, %v652
    %v654 = vrot.slane %v653, 2
    %v655 = vmin.f32 %v653, %v654
    %v656 = vrot.slane %v655, 1
    %v657 = vmin.f32 %v655, %v656
    %s658 = vtos %v657
    %v659 = vstv %s658
    %v660 = vsub.f32 %v646, %v659
    %v661 = vsel %vm546, %v660, -inf
    %662 = vmax.xlane.f32.xlu0 %v661
    %v663 = vpop.xlane.xlu0 %662
    %v664 = vrot.slane %v663, 4
    %v665 = vmax.f32 %v663, %v664
    %v666 = vrot.slane %v665, 2
    %v667 = vmax.f32 %v665, %v666
    %v668 = vrot.slane %v667, 1
    %v669 = vmax.f32 %v667, %v668
    %s670 = vtos %v669
    %v671 = vstv %s670
    %v672 = vrcp.pop %v671
    %v673 = vmul.f32 %v660, %v672
    %v674 = vadd.f32 %v572, %v673
    %s675 = scalar_lea.vmem %s5, 8
    %v676 = vld [vmem:[%s675] sm:$0xf]
    %v677 = vmul.f32 %v676, %v468
    %v679 = vsel %vm327, %v677, 0
    %681 = vmatprep.subr.mxu0 0.0
    %682 = vmatpush1.msra.mxu0 %v207
    %683 = vmatprep.subr.mxu0 0.0
    %684 = vmatpush1.msra.mxu0 %v208
    %685 = vmatprep.subr.mxu0 0.0
    %686 = vmatpush1.msra.mxu0 %v209
    %687 = vmatprep.subr.mxu0 0.0
    %688 = vmatpush1.msra.mxu0 %v210
    %689 = vmatprep.subr.mxu0 0.0
    %690 = vmatpush1.msra.mxu0 0.0
    %691 = vmatprep.subr.mxu0 0.0
    %692 = vmatpush1.msra.mxu0 0.0
    %693 = vmatprep.subr.mxu0 0.0
    %694 = vmatpush1.msra.mxu0 0.0
    %695 = vmatprep.subr.mxu0 0.0
    %696 = vmatpush1.msra.mxu0 0.0
    %697 = vmatprep.subr.mxu0 0.0
    %698 = vmatpush1.msra.mxu0 0.0
    %699 = vmatprep.subr.mxu0 0.0
    %700 = vmatpush1.msra.mxu0 0.0
    %701 = vmatprep.subr.mxu0 0.0
    %702 = vmatpush1.msra.mxu0 0.0
    %703 = vmatprep.subr.mxu0 0.0
    %704 = vmatpush1.msra.mxu0 0.0
    %705 = vmatprep.subr.mxu0 0.0
    %706 = vmatpush1.msra.mxu0 0.0
    %707 = vmatprep.subr.mxu0 0.0
    %708 = vmatpush1.msra.mxu0 0.0
    %709 = vmatprep.subr.mxu0 0.0
    %710 = vmatpush1.msra.mxu0 0.0
    %711 = vmatprep.subr.mxu0 0.0
    %712 = vmatpush1.msra.mxu0 0.0
    %713 = vmatprep.subr.mxu0 0.0
    %714 = vmatpush1.msra.mxu0 0.0
    %715 = vmatprep.subr.mxu0 0.0
    %716 = vmatpush1.msra.mxu0 0.0
    %717 = vmatprep.subr.mxu0 0.0
    %718 = vmatpush1.msra.mxu0 0.0
    %719 = vmatprep.subr.mxu0 0.0
    %720 = vmatpush1.msra.mxu0 0.0
    %721 = vmatprep.subr.mxu0 0.0
    %722 = vmatpush1.msra.mxu0 0.0
    %723 = vmatprep.subr.mxu0 0.0
    %724 = vmatpush1.msra.mxu0 0.0
    %725 = vmatprep.subr.mxu0 0.0
    %726 = vmatpush1.msra.mxu0 0.0
    %727 = vmatprep.subr.mxu0 0.0
    %728 = vmatpush1.msra.mxu0 0.0
    %729 = vmatprep.subr.mxu0 0.0
    %730 = vmatpush1.msra.mxu0 0.0
    %731 = vmatprep.subr.mxu0 0.0
    %732 = vmatpush1.msra.mxu0 0.0
    %733 = vmatprep.subr.mxu0 0.0
    %734 = vmatpush1.msra.mxu0 0.0
    %735 = vmatprep.subr.mxu0 0.0
    %736 = vmatpush1.msra.mxu0 0.0
    %737 = vmatprep.subr.mxu0 0.0
    %738 = vmatpush1.msra.mxu0 0.0
    %739 = vmatprep.subr.mxu0 0.0
    %740 = vmatpush1.msra.mxu0 0.0
    %741 = vmatprep.subr.mxu0 0.0
    %742 = vmatpush1.msra.mxu0 0.0
    %743 = vmatprep.subr.mxu0 0.0
    %744 = vmatpush1.msra.mxu0 0.0
    %745 = vmatprep.mubr.f32.mxu0 0.0
    %746 = vmatmul.mubr.f32.gmra.mrb[0].mxu0 %v679
    %v747 = vpop.f32.mrb[0].mxu0
    %v748 = vadd.f32 0.0, %v747
    %v749 = vpop.f32.mrb[0].mxu0
    %750 = vdwg.mxu0
    %v751 = vsel %vm546, %v748, inf
    %752 = vmin.xlane.f32.xlu0 %v751
    %v753 = vpop.xlane.xlu0 %752
    %v754 = vrot.slane %v753, 4
    %v755 = vmin.f32 %v753, %v754
    %v756 = vrot.slane %v755, 2
    %v757 = vmin.f32 %v755, %v756
    %v758 = vrot.slane %v757, 1
    %v759 = vmin.f32 %v757, %v758
    %s760 = vtos %v759
    %v761 = vstv %s760
    %v762 = vsub.f32 %v748, %v761
    %v763 = vsel %vm546, %v762, -inf
    %764 = vmax.xlane.f32.xlu0 %v763
    %v765 = vpop.xlane.xlu0 %764
    %v766 = vrot.slane %v765, 4
    %v767 = vmax.f32 %v765, %v766
    %v768 = vrot.slane %v767, 2
    %v769 = vmax.f32 %v767, %v768
    %v770 = vrot.slane %v769, 1
    %v771 = vmax.f32 %v769, %v770
    %s772 = vtos %v771
    %v773 = vstv %s772
    %v774 = vrcp.pop %v773
    %v775 = vmul.f32 %v762, %v774
    %v776 = vadd.f32 %v674, %v775
    %v777 = vmul.f32 %v776, 0.33333334
    %v779 = vrot.slane %v468, 4
    %v781 = vmul.f32 %v471, %v779
    %v783 = vsel %vm327, %v781, 0
    %785 = vmatprep.subr.mxu0 0.0
    %786 = vmatpush1.msra.mxu0 %v207
    %787 = vmatprep.subr.mxu0 0.0
    %788 = vmatpush1.msra.mxu0 %v208
    %789 = vmatprep.subr.mxu0 0.0
    %790 = vmatpush1.msra.mxu0 %v209
    %791 = vmatprep.subr.mxu0 0.0
    %792 = vmatpush1.msra.mxu0 %v210
    %793 = vmatprep.subr.mxu0 0.0
    %794 = vmatpush1.msra.mxu0 0.0
    %795 = vmatprep.subr.mxu0 0.0
    %796 = vmatpush1.msra.mxu0 0.0
    %797 = vmatprep.subr.mxu0 0.0
    %798 = vmatpush1.msra.mxu0 0.0
    %799 = vmatprep.subr.mxu0 0.0
    %800 = vmatpush1.msra.mxu0 0.0
    %801 = vmatprep.subr.mxu0 0.0
    %802 = vmatpush1.msra.mxu0 0.0
    %803 = vmatprep.subr.mxu0 0.0
    %804 = vmatpush1.msra.mxu0 0.0
    %805 = vmatprep.subr.mxu0 0.0
    %806 = vmatpush1.msra.mxu0 0.0
    %807 = vmatprep.subr.mxu0 0.0
    %808 = vmatpush1.msra.mxu0 0.0
    %809 = vmatprep.subr.mxu0 0.0
    %810 = vmatpush1.msra.mxu0 0.0
    %811 = vmatprep.subr.mxu0 0.0
    %812 = vmatpush1.msra.mxu0 0.0
    %813 = vmatprep.subr.mxu0 0.0
    %814 = vmatpush1.msra.mxu0 0.0
    %815 = vmatprep.subr.mxu0 0.0
    %816 = vmatpush1.msra.mxu0 0.0
    %817 = vmatprep.subr.mxu0 0.0
    %818 = vmatpush1.msra.mxu0 0.0
    %819 = vmatprep.subr.mxu0 0.0
    %820 = vmatpush1.msra.mxu0 0.0
    %821 = vmatprep.subr.mxu0 0.0
    %822 = vmatpush1.msra.mxu0 0.0
    %823 = vmatprep.subr.mxu0 0.0
    %824 = vmatpush1.msra.mxu0 0.0
    %825 = vmatprep.subr.mxu0 0.0
    %826 = vmatpush1.msra.mxu0 0.0
    %827 = vmatprep.subr.mxu0 0.0
    %828 = vmatpush1.msra.mxu0 0.0
    %829 = vmatprep.subr.mxu0 0.0
    %830 = vmatpush1.msra.mxu0 0.0
    %831 = vmatprep.subr.mxu0 0.0
    %832 = vmatpush1.msra.mxu0 0.0
    %833 = vmatprep.subr.mxu0 0.0
    %834 = vmatpush1.msra.mxu0 0.0
    %835 = vmatprep.subr.mxu0 0.0
    %836 = vmatpush1.msra.mxu0 0.0
    %837 = vmatprep.subr.mxu0 0.0
    %838 = vmatpush1.msra.mxu0 0.0
    %839 = vmatprep.subr.mxu0 0.0
    %840 = vmatpush1.msra.mxu0 0.0
    %841 = vmatprep.subr.mxu0 0.0
    %842 = vmatpush1.msra.mxu0 0.0
    %843 = vmatprep.subr.mxu0 0.0
    %844 = vmatpush1.msra.mxu0 0.0
    %845 = vmatprep.subr.mxu0 0.0
    %846 = vmatpush1.msra.mxu0 0.0
    %847 = vmatprep.subr.mxu0 0.0
    %848 = vmatpush1.msra.mxu0 0.0
    %849 = vmatprep.mubr.f32.mxu0 0.0
    %850 = vmatmul.mubr.f32.gmra.mrb[0].mxu0 %v783
    %v851 = vpop.f32.mrb[0].mxu0
    %v852 = vadd.f32 0.0, %v851
    %v853 = vpop.f32.mrb[0].mxu0
    %854 = vdwg.mxu0
    %v855 = vsel %vm546, %v852, inf
    %856 = vmin.xlane.f32.xlu0 %v855
    %v857 = vpop.xlane.xlu0 %856
    %v858 = vrot.slane %v857, 4
    %v859 = vmin.f32 %v857, %v858
    %v860 = vrot.slane %v859, 2
    %v861 = vmin.f32 %v859, %v860
    %v862 = vrot.slane %v861, 1
    %v863 = vmin.f32 %v861, %v862
    %s864 = vtos %v863
    %v865 = vstv %s864
    %v866 = vsub.f32 %v852, %v865
    %v867 = vsel %vm546, %v866, -inf
    %868 = vmax.xlane.f32.xlu0 %v867
    %v869 = vpop.xlane.xlu0 %868
    %v870 = vrot.slane %v869, 4
    %v871 = vmax.f32 %v869, %v870
    %v872 = vrot.slane %v871, 2
    %v873 = vmax.f32 %v871, %v872
    %v874 = vrot.slane %v873, 1
    %v875 = vmax.f32 %v873, %v874
    %s876 = vtos %v875
    %v877 = vstv %s876
    %v878 = vrcp.pop %v877
    %v879 = vmul.f32 %v866, %v878
    %v880 = vadd.f32 %v879, 0.0
    %v881 = vmul.f32 %v574, %v779
    %v883 = vsel %vm327, %v881, 0
    %885 = vmatprep.subr.mxu0 0.0
    %886 = vmatpush1.msra.mxu0 %v207
    %887 = vmatprep.subr.mxu0 0.0
    %888 = vmatpush1.msra.mxu0 %v208
    %889 = vmatprep.subr.mxu0 0.0
    %890 = vmatpush1.msra.mxu0 %v209
    %891 = vmatprep.subr.mxu0 0.0
    %892 = vmatpush1.msra.mxu0 %v210
    %893 = vmatprep.subr.mxu0 0.0
    %894 = vmatpush1.msra.mxu0 0.0
    %895 = vmatprep.subr.mxu0 0.0
    %896 = vmatpush1.msra.mxu0 0.0
    %897 = vmatprep.subr.mxu0 0.0
    %898 = vmatpush1.msra.mxu0 0.0
    %899 = vmatprep.subr.mxu0 0.0
    %900 = vmatpush1.msra.mxu0 0.0
    %901 = vmatprep.subr.mxu0 0.0
    %902 = vmatpush1.msra.mxu0 0.0
    %903 = vmatprep.subr.mxu0 0.0
    %904 = vmatpush1.msra.mxu0 0.0
    %905 = vmatprep.subr.mxu0 0.0
    %906 = vmatpush1.msra.mxu0 0.0
    %907 = vmatprep.subr.mxu0 0.0
    %908 = vmatpush1.msra.mxu0 0.0
    %909 = vmatprep.subr.mxu0 0.0
    %910 = vmatpush1.msra.mxu0 0.0
    %911 = vmatprep.subr.mxu0 0.0
    %912 = vmatpush1.msra.mxu0 0.0
    %913 = vmatprep.subr.mxu0 0.0
    %914 = vmatpush1.msra.mxu0 0.0
    %915 = vmatprep.subr.mxu0 0.0
    %916 = vmatpush1.msra.mxu0 0.0
    %917 = vmatprep.subr.mxu0 0.0
    %918 = vmatpush1.msra.mxu0 0.0
    %919 = vmatprep.subr.mxu0 0.0
    %920 = vmatpush1.msra.mxu0 0.0
    %921 = vmatprep.subr.mxu0 0.0
    %922 = vmatpush1.msra.mxu0 0.0
    %923 = vmatprep.subr.mxu0 0.0
    %924 = vmatpush1.msra.mxu0 0.0
    %925 = vmatprep.subr.mxu0 0.0
    %926 = vmatpush1.msra.mxu0 0.0
    %927 = vmatprep.subr.mxu0 0.0
    %928 = vmatpush1.msra.mxu0 0.0
    %929 = vmatprep.subr.mxu0 0.0
    %930 = vmatpush1.msra.mxu0 0.0
    %931 = vmatprep.subr.mxu0 0.0
    %932 = vmatpush1.msra.mxu0 0.0
    %933 = vmatprep.subr.mxu0 0.0
    %934 = vmatpush1.msra.mxu0 0.0
    %935 = vmatprep.subr.mxu0 0.0
    %936 = vmatpush1.msra.mxu0 0.0
    %937 = vmatprep.subr.mxu0 0.0
    %938 = vmatpush1.msra.mxu0 0.0
    %939 = vmatprep.subr.mxu0 0.0
    %940 = vmatpush1.msra.mxu0 0.0
    %941 = vmatprep.subr.mxu0 0.0
    %942 = vmatpush1.msra.mxu0 0.0
    %943 = vmatprep.subr.mxu0 0.0
    %944 = vmatpush1.msra.mxu0 0.0
    %945 = vmatprep.subr.mxu0 0.0
    %946 = vmatpush1.msra.mxu0 0.0
    %947 = vmatprep.subr.mxu0 0.0
    %948 = vmatpush1.msra.mxu0 0.0
    %949 = vmatprep.mubr.f32.mxu0 0.0
    %950 = vmatmul.mubr.f32.gmra.mrb[0].mxu0 %v883
    %v951 = vpop.f32.mrb[0].mxu0
    %v952 = vadd.f32 0.0, %v951
    %v953 = vpop.f32.mrb[0].mxu0
    %954 = vdwg.mxu0
    %v955 = vsel %vm546, %v952, inf
    %956 = vmin.xlane.f32.xlu0 %v955
    %v957 = vpop.xlane.xlu0 %956
    %v958 = vrot.slane %v957, 4
    %v959 = vmin.f32 %v957, %v958
    %v960 = vrot.slane %v959, 2
    %v961 = vmin.f32 %v959, %v960
    %v962 = vrot.slane %v961, 1
    %v963 = vmin.f32 %v961, %v962
    %s964 = vtos %v963
    %v965 = vstv %s964
    %v966 = vsub.f32 %v952, %v965
    %v967 = vsel %vm546, %v966, -inf
    %968 = vmax.xlane.f32.xlu0 %v967
    %v969 = vpop.xlane.xlu0 %968
    %v970 = vrot.slane %v969, 4
    %v971 = vmax.f32 %v969, %v970
    %v972 = vrot.slane %v971, 2
    %v973 = vmax.f32 %v971, %v972
    %v974 = vrot.slane %v973, 1
    %v975 = vmax.f32 %v973, %v974
    %s976 = vtos %v975
    %v977 = vstv %s976
    %v978 = vrcp.pop %v977
    %v979 = vmul.f32 %v966, %v978
    %v980 = vadd.f32 %v880, %v979
    %v981 = vmul.f32 %v676, %v779
    %v983 = vsel %vm327, %v981, 0
    %985 = vmatprep.subr.mxu0 0.0
    %986 = vmatpush1.msra.mxu0 %v207
    %987 = vmatprep.subr.mxu0 0.0
    %988 = vmatpush1.msra.mxu0 %v208
    %989 = vmatprep.subr.mxu0 0.0
    %990 = vmatpush1.msra.mxu0 %v209
    %991 = vmatprep.subr.mxu0 0.0
    %992 = vmatpush1.msra.mxu0 %v210
    %993 = vmatprep.subr.mxu0 0.0
    %994 = vmatpush1.msra.mxu0 0.0
    %995 = vmatprep.subr.mxu0 0.0
    %996 = vmatpush1.msra.mxu0 0.0
    %997 = vmatprep.subr.mxu0 0.0
    %998 = vmatpush1.msra.mxu0 0.0
    %999 = vmatprep.subr.mxu0 0.0
    %1000 = vmatpush1.msra.mxu0 0.0
    %1001 = vmatprep.subr.mxu0 0.0
    %1002 = vmatpush1.msra.mxu0 0.0
    %1003 = vmatprep.subr.mxu0 0.0
    %1004 = vmatpush1.msra.mxu0 0.0
    %1005 = vmatprep.subr.mxu0 0.0
    %1006 = vmatpush1.msra.mxu0 0.0
    %1007 = vmatprep.subr.mxu0 0.0
    %1008 = vmatpush1.msra.mxu0 0.0
    %1009 = vmatprep.subr.mxu0 0.0
    %1010 = vmatpush1.msra.mxu0 0.0
    %1011 = vmatprep.subr.mxu0 0.0
    %1012 = vmatpush1.msra.mxu0 0.0
    %1013 = vmatprep.subr.mxu0 0.0
    %1014 = vmatpush1.msra.mxu0 0.0
    %1015 = vmatprep.subr.mxu0 0.0
    %1016 = vmatpush1.msra.mxu0 0.0
    %1017 = vmatprep.subr.mxu0 0.0
    %1018 = vmatpush1.msra.mxu0 0.0
    %1019 = vmatprep.subr.mxu0 0.0
    %1020 = vmatpush1.msra.mxu0 0.0
    %1021 = vmatprep.subr.mxu0 0.0
    %1022 = vmatpush1.msra.mxu0 0.0
    %1023 = vmatprep.subr.mxu0 0.0
    %1024 = vmatpush1.msra.mxu0 0.0
    %1025 = vmatprep.subr.mxu0 0.0
    %1026 = vmatpush1.msra.mxu0 0.0
    %1027 = vmatprep.subr.mxu0 0.0
    %1028 = vmatpush1.msra.mxu0 0.0
    %1029 = vmatprep.subr.mxu0 0.0
    %1030 = vmatpush1.msra.mxu0 0.0
    %1031 = vmatprep.subr.mxu0 0.0
    %1032 = vmatpush1.msra.mxu0 0.0
    %1033 = vmatprep.subr.mxu0 0.0
    %1034 = vmatpush1.msra.mxu0 0.0
    %1035 = vmatprep.subr.mxu0 0.0
    %1036 = vmatpush1.msra.mxu0 0.0
    %1037 = vmatprep.subr.mxu0 0.0
    %1038 = vmatpush1.msra.mxu0 0.0
    %1039 = vmatprep.subr.mxu0 0.0
    %1040 = vmatpush1.msra.mxu0 0.0
    %1041 = vmatprep.subr.mxu0 0.0
    %1042 = vmatpush1.msra.mxu0 0.0
    %1043 = vmatprep.subr.mxu0 0.0
    %1044 = vmatpush1.msra.mxu0 0.0
    %1045 = vmatprep.subr.mxu0 0.0
    %1046 = vmatpush1.msra.mxu0 0.0
    %1047 = vmatprep.subr.mxu0 0.0
    %1048 = vmatpush1.msra.mxu0 0.0
    %1049 = vmatprep.mubr.f32.mxu0 0.0
    %1050 = vmatmul.mubr.f32.gmra.mrb[0].mxu0 %v983
    %v1051 = vpop.f32.mrb[0].mxu0
    %v1052 = vadd.f32 0.0, %v1051
    %v1053 = vpop.f32.mrb[0].mxu0
    %1054 = vdwg.mxu0
    %v1055 = vsel %vm546, %v1052, inf
    %1056 = vmin.xlane.f32.xlu0 %v1055
    %v1057 = vpop.xlane.xlu0 %1056
    %v1058 = vrot.slane %v1057, 4
    %v1059 = vmin.f32 %v1057, %v1058
    %v1060 = vrot.slane %v1059, 2
    %v1061 = vmin.f32 %v1059, %v1060
    %v1062 = vrot.slane %v1061, 1
    %v1063 = vmin.f32 %v1061, %v1062
    %s1064 = vtos %v1063
    %v1065 = vstv %s1064
    %v1066 = vsub.f32 %v1052, %v1065
    %v1067 = vsel %vm546, %v1066, -inf
    %1068 = vmax.xlane.f32.xlu0 %v1067
    %v1069 = vpop.xlane.xlu0 %1068
    %v1070 = vrot.slane %v1069, 4
    %v1071 = vmax.f32 %v1069, %v1070
    %v1072 = vrot.slane %v1071, 2
    %v1073 = vmax.f32 %v1071, %v1072
    %v1074 = vrot.slane %v1073, 1
    %v1075 = vmax.f32 %v1073, %v1074
    %s1076 = vtos %v1075
    %v1077 = vstv %s1076
    %v1078 = vrcp.pop %v1077
    %v1079 = vmul.f32 %v1066, %v1078
    %v1080 = vadd.f32 %v980, %v1079
    %v1081 = vmul.f32 %v1080, 0.33333334
    %v1083 = vrot.slane %v1081, 4
    %vm1085 = vcmask 1043456
    %v1086 = vsel %vm1085, %v777, %v1083
    %vm1087 = vcmask 64512
    %v1089 = vsel %vm1087, %v211, 0
    %v1092 = vsel %vm1087, %v212, 0
    %v1095 = vsel %vm1087, %v213, 0
    %v1098 = vsel %vm1087, %v214, 0
    %1100 = vmatprep.subr.mxu0 0.0
    %1101 = vmatpush1.msra.mxu0 %v1086
    %1102 = vmatprep.subr.mxu0 0.0
    %1103 = vmatpush1.msra.mxu0 0.0
    %1104 = vmatprep.subr.mxu0 0.0
    %1105 = vmatpush1.msra.mxu0 0.0
    %1106 = vmatprep.subr.mxu0 0.0
    %1107 = vmatpush1.msra.mxu0 0.0
    %1108 = vmatprep.subr.mxu0 0.0
    %1109 = vmatpush1.msra.mxu0 0.0
    %1110 = vmatprep.subr.mxu0 0.0
    %1111 = vmatpush1.msra.mxu0 0.0
    %1112 = vmatprep.subr.mxu0 0.0
    %1113 = vmatpush1.msra.mxu0 0.0
    %1114 = vmatprep.subr.mxu0 0.0
    %1115 = vmatpush1.msra.mxu0 0.0
    %1116 = vmatprep.subr.mxu0 0.0
    %1117 = vmatpush1.msra.mxu0 0.0
    %1118 = vmatprep.subr.mxu0 0.0
    %1119 = vmatpush1.msra.mxu0 0.0
    %1120 = vmatprep.subr.mxu0 0.0
    %1121 = vmatpush1.msra.mxu0 0.0
    %1122 = vmatprep.subr.mxu0 0.0
    %1123 = vmatpush1.msra.mxu0 0.0
    %1124 = vmatprep.subr.mxu0 0.0
    %1125 = vmatpush1.msra.mxu0 0.0
    %1126 = vmatprep.subr.mxu0 0.0
    %1127 = vmatpush1.msra.mxu0 0.0
    %1128 = vmatprep.subr.mxu0 0.0
    %1129 = vmatpush1.msra.mxu0 0.0
    %1130 = vmatprep.subr.mxu0 0.0
    %1131 = vmatpush1.msra.mxu0 0.0
    %1132 = vmatprep.subr.mxu0 0.0
    %1133 = vmatpush1.msra.mxu0 0.0
    %1134 = vmatprep.subr.mxu0 0.0
    %1135 = vmatpush1.msra.mxu0 0.0
    %1136 = vmatprep.subr.mxu0 0.0
    %1137 = vmatpush1.msra.mxu0 0.0
    %1138 = vmatprep.subr.mxu0 0.0
    %1139 = vmatpush1.msra.mxu0 0.0
    %1140 = vmatprep.subr.mxu0 0.0
    %1141 = vmatpush1.msra.mxu0 0.0
    %1142 = vmatprep.subr.mxu0 0.0
    %1143 = vmatpush1.msra.mxu0 0.0
    %1144 = vmatprep.subr.mxu0 0.0
    %1145 = vmatpush1.msra.mxu0 0.0
    %1146 = vmatprep.subr.mxu0 0.0
    %1147 = vmatpush1.msra.mxu0 0.0
    %1148 = vmatprep.subr.mxu0 0.0
    %1149 = vmatpush1.msra.mxu0 0.0
    %1150 = vmatprep.subr.mxu0 0.0
    %1151 = vmatpush1.msra.mxu0 0.0
    %1152 = vmatprep.subr.mxu0 0.0
    %1153 = vmatpush1.msra.mxu0 0.0
    %1154 = vmatprep.subr.mxu0 0.0
    %1155 = vmatpush1.msra.mxu0 0.0
    %1156 = vmatprep.subr.mxu0 0.0
    %1157 = vmatpush1.msra.mxu0 0.0
    %1158 = vmatprep.subr.mxu0 0.0
    %1159 = vmatpush1.msra.mxu0 0.0
    %1160 = vmatprep.subr.mxu0 0.0
    %1161 = vmatpush1.msra.mxu0 0.0
    %1162 = vmatprep.subr.mxu0 0.0
    %1163 = vmatpush1.msra.mxu0 0.0
    %1164 = vmatprep.mubr.f32.mxu0 0.0
    %1165 = vmatmul.mubr.f32.gmra.mrb[0].mxu0 %v1089
    %v1166 = vpop.f32.mrb[0].mxu0
    %v1167 = vadd.f32 0.0, %v1166
    %v1168 = vpop.f32.mrb[0].mxu0
    %1169 = vmatprep.mubr.f32.mxu0 0.0
    %1170 = vmatmul.mubr.f32.gmra.mrb[0].mxu0 %v1092
    %v1171 = vpop.f32.mrb[0].mxu0
    %v1172 = vadd.f32 0.0, %v1171
    %v1173 = vpop.f32.mrb[0].mxu0
    %1174 = vmatprep.mubr.f32.mxu0 0.0
    %1175 = vmatmul.mubr.f32.gmra.mrb[0].mxu0 %v1095
    %v1176 = vpop.f32.mrb[0].mxu0
    %v1177 = vadd.f32 0.0, %v1176
    %v1178 = vpop.f32.mrb[0].mxu0
    %1179 = vmatprep.mubr.f32.mxu0 0.0
    %1180 = vmatmul.mubr.f32.gmra.mrb[0].mxu0 %v1098
    %v1181 = vpop.f32.mrb[0].mxu0
    %v1182 = vadd.f32 0.0, %v1181
    %v1183 = vpop.f32.mrb[0].mxu0
    %1184 = vdwg.mxu0
    %vm1185 = vcmask 31744
    %v1187 = vsel %vm1185, %v1167, 0
    %v1190 = vsel %vm1185, %v1172, 0
    %v1193 = vsel %vm1185, %v1177, 0
    %v1196 = vsel %vm1185, %v1182, 0
    %v1199 = vsel %vm1085, %v215, 0
    %1201 = vmatprep.subr.mxu0 0.0
    %1202 = vmatpush1.msra.mxu0 %v1199
    %1203 = vmatprep.subr.mxu0 0.0
    %1204 = vmatpush1.msra.mxu0 0.0
    %1205 = vmatprep.subr.mxu0 0.0
    %1206 = vmatpush1.msra.mxu0 0.0
    %1207 = vmatprep.subr.mxu0 0.0
    %1208 = vmatpush1.msra.mxu0 0.0
    %1209 = vmatprep.subr.mxu0 0.0
    %1210 = vmatpush1.msra.mxu0 0.0
    %1211 = vmatprep.subr.mxu0 0.0
    %1212 = vmatpush1.msra.mxu0 0.0
    %1213 = vmatprep.subr.mxu0 0.0
    %1214 = vmatpush1.msra.mxu0 0.0
    %1215 = vmatprep.subr.mxu0 0.0
    %1216 = vmatpush1.msra.mxu0 0.0
    %1217 = vmatprep.subr.mxu0 0.0
    %1218 = vmatpush1.msra.mxu0 0.0
    %1219 = vmatprep.subr.mxu0 0.0
    %1220 = vmatpush1.msra.mxu0 0.0
    %1221 = vmatprep.subr.mxu0 0.0
    %1222 = vmatpush1.msra.mxu0 0.0
    %1223 = vmatprep.subr.mxu0 0.0
    %1224 = vmatpush1.msra.mxu0 0.0
    %1225 = vmatprep.subr.mxu0 0.0
    %1226 = vmatpush1.msra.mxu0 0.0
    %1227 = vmatprep.subr.mxu0 0.0
    %1228 = vmatpush1.msra.mxu0 0.0
    %1229 = vmatprep.subr.mxu0 0.0
    %1230 = vmatpush1.msra.mxu0 0.0
    %1231 = vmatprep.subr.mxu0 0.0
    %1232 = vmatpush1.msra.mxu0 0.0
    %1233 = vmatprep.subr.mxu0 0.0
    %1234 = vmatpush1.msra.mxu0 0.0
    %1235 = vmatprep.subr.mxu0 0.0
    %1236 = vmatpush1.msra.mxu0 0.0
    %1237 = vmatprep.subr.mxu0 0.0
    %1238 = vmatpush1.msra.mxu0 0.0
    %1239 = vmatprep.subr.mxu0 0.0
    %1240 = vmatpush1.msra.mxu0 0.0
    %1241 = vmatprep.subr.mxu0 0.0
    %1242 = vmatpush1.msra.mxu0 0.0
    %1243 = vmatprep.subr.mxu0 0.0
    %1244 = vmatpush1.msra.mxu0 0.0
    %1245 = vmatprep.subr.mxu0 0.0
    %1246 = vmatpush1.msra.mxu0 0.0
    %1247 = vmatprep.subr.mxu0 0.0
    %1248 = vmatpush1.msra.mxu0 0.0
    %1249 = vmatprep.subr.mxu0 0.0
    %1250 = vmatpush1.msra.mxu0 0.0
    %1251 = vmatprep.subr.mxu0 0.0
    %1252 = vmatpush1.msra.mxu0 0.0
    %1253 = vmatprep.subr.mxu0 0.0
    %1254 = vmatpush1.msra.mxu0 0.0
    %1255 = vmatprep.subr.mxu0 0.0
    %1256 = vmatpush1.msra.mxu0 0.0
    %1257 = vmatprep.subr.mxu0 0.0
    %1258 = vmatpush1.msra.mxu0 0.0
    %1259 = vmatprep.subr.mxu0 0.0
    %1260 = vmatpush1.msra.mxu0 0.0
    %1261 = vmatprep.subr.mxu0 0.0
    %1262 = vmatpush1.msra.mxu0 0.0
    %1263 = vmatprep.subr.mxu0 0.0
    %1264 = vmatpush1.msra.mxu0 0.0
    %1265 = vmatprep.mubr.f32.mxu0 0.0
    %1266 = vmatmul.mubr.f32.gmra.mrb[0].mxu0 %v1187
    %v1267 = vpop.f32.mrb[0].mxu0
    %v1268 = vadd.f32 0.0, %v1267
    %v1269 = vpop.f32.mrb[0].mxu0
    %1270 = vmatprep.mubr.f32.mxu0 0.0
    %1271 = vmatmul.mubr.f32.gmra.mrb[0].mxu0 %v1190
    %v1272 = vpop.f32.mrb[0].mxu0
    %v1273 = vadd.f32 0.0, %v1272
    %v1274 = vpop.f32.mrb[0].mxu0
    %1275 = vmatprep.mubr.f32.mxu0 0.0
    %1276 = vmatmul.mubr.f32.gmra.mrb[0].mxu0 %v1193
    %v1277 = vpop.f32.mrb[0].mxu0
    %v1278 = vadd.f32 0.0, %v1277
    %v1279 = vpop.f32.mrb[0].mxu0
    %1280 = vmatprep.mubr.f32.mxu0 0.0
    %1281 = vmatmul.mubr.f32.gmra.mrb[0].mxu0 %v1196
    %v1282 = vpop.f32.mrb[0].mxu0
    %v1283 = vadd.f32 0.0, %v1282
    %v1284 = vpop.f32.mrb[0].mxu0
    %1285 = vdwg.mxu0
    %v1286 = vpack.c.bf16 %v324, %v323
    %v1287 = vpack.c.bf16 %v326, %v325
    %v1292 = vunpack.c.l.b16 %v181
    %v1293 = vunpack.c.l.b16 %v182
    %v1294 = vunpack.c.l.b16 %v183
    %v1295 = vunpack.c.l.b16 %v184
    %v1296 = vpack.c.b16 %v1293, %v1292
    %v1297 = vpack.c.b16 %v1295, %v1294
    %v1299 = vsel %vm327, %v1296, 0
    %v1302 = vsel %vm327, %v1297, 0
    %1304 = vmatprep.subr.bf16.mxu0 0
    %1305 = vmatpush1.bf16.msra.mxu0 %v1286
    %1306 = vmatprep.subr.bf16.mxu0 0
    %1307 = vmatpush1.bf16.msra.mxu0 %v1287
    %1308 = vmatprep.subr.bf16.mxu0 0
    %1309 = vmatpush1.bf16.msra.mxu0 0
    %1310 = vmatprep.subr.bf16.mxu0 0
    %1311 = vmatpush1.bf16.msra.mxu0 0
    %1312 = vmatprep.subr.bf16.mxu0 0
    %1313 = vmatpush1.bf16.msra.mxu0 0
    %1314 = vmatprep.subr.bf16.mxu0 0
    %1315 = vmatpush1.bf16.msra.mxu0 0
    %1316 = vmatprep.subr.bf16.mxu0 0
    %1317 = vmatpush1.bf16.msra.mxu0 0
    %1318 = vmatprep.subr.bf16.mxu0 0
    %1319 = vmatpush1.bf16.msra.mxu0 0
    %1320 = vmatprep.subr.bf16.mxu0 0
    %1321 = vmatpush1.bf16.msra.mxu0 0
    %1322 = vmatprep.subr.bf16.mxu0 0
    %1323 = vmatpush1.bf16.msra.mxu0 0
    %1324 = vmatprep.subr.bf16.mxu0 0
    %1325 = vmatpush1.bf16.msra.mxu0 0
    %1326 = vmatprep.subr.bf16.mxu0 0
    %1327 = vmatpush1.bf16.msra.mxu0 0
    %1328 = vmatprep.subr.bf16.mxu0 0
    %1329 = vmatpush1.bf16.msra.mxu0 0
    %1330 = vmatprep.subr.bf16.mxu0 0
    %1331 = vmatpush1.bf16.msra.mxu0 0
    %1332 = vmatprep.subr.bf16.mxu0 0
    %1333 = vmatpush1.bf16.msra.mxu0 0
    %1334 = vmatprep.subr.bf16.mxu0 0
    %1335 = vmatpush1.bf16.msra.mxu0 0
    %1336 = vmatprep.mubr.bf16.mxu0 0
    %1337 = vmatmul.mubr.bf16.gmra.mrb[0].mxu0 %v1299
    %v1338 = vpop.f32.mrb[0].mxu0
    %v1339 = vadd.f32 0.0, %v1338
    %v1340 = vpop.f32.mrb[0].mxu0
    %v1341 = vpop.f32.mrb[0].mxu0
    %v1342 = vadd.f32 0.0, %v1341
    %v1343 = vpop.f32.mrb[0].mxu0
    %1344 = vmatprep.mubr.bf16.mxu0 0
    %1345 = vmatmul.mubr.bf16.gmra.mrb[0].mxu0 %v1302
    %v1346 = vpop.f32.mrb[0].mxu0
    %v1347 = vadd.f32 0.0, %v1346
    %v1348 = vpop.f32.mrb[0].mxu0
    %v1349 = vpop.f32.mrb[0].mxu0
    %v1350 = vadd.f32 0.0, %v1349
    %v1351 = vpop.f32.mrb[0].mxu0
    %1352 = vdwg.mxu0
    %v1353 = vpack.c.bf16 %v1342, %v1339
    %v1354 = vpack.c.bf16 %v1350, %v1347
    %v1359 = vunpack.c.l.b16 %v186
    %v1360 = vunpack.c.l.b16 %v187
    %v1361 = vunpack.c.l.b16 %v188
    %v1362 = vunpack.c.l.b16 %v189
    %v1363 = vpack.c.b16 %v1360, %v1359
    %v1364 = vpack.c.b16 %v1362, %v1361
    %v1366 = vsel %vm327, %v1363, 0
    %v1369 = vsel %vm327, %v1364, 0
    %1371 = vmatprep.subr.bf16.mxu0 0
    %1372 = vmatpush1.bf16.msra.mxu0 %v1286
    %1373 = vmatprep.subr.bf16.mxu0 0
    %1374 = vmatpush1.bf16.msra.mxu0 %v1287
    %1375 = vmatprep.subr.bf16.mxu0 0
    %1376 = vmatpush1.bf16.msra.mxu0 0
    %1377 = vmatprep.subr.bf16.mxu0 0
    %1378 = vmatpush1.bf16.msra.mxu0 0
    %1379 = vmatprep.subr.bf16.mxu0 0
    %1380 = vmatpush1.bf16.msra.mxu0 0
    %1381 = vmatprep.subr.bf16.mxu0 0
    %1382 = vmatpush1.bf16.msra.mxu0 0
    %1383 = vmatprep.subr.bf16.mxu0 0
    %1384 = vmatpush1.bf16.msra.mxu0 0
    %1385 = vmatprep.subr.bf16.mxu0 0
    %1386 = vmatpush1.bf16.msra.mxu0 0
    %1387 = vmatprep.subr.bf16.mxu0 0
    %1388 = vmatpush1.bf16.msra.mxu0 0
    %1389 = vmatprep.subr.bf16.mxu0 0
    %1390 = vmatpush1.bf16.msra.mxu0 0
    %1391 = vmatprep.subr.bf16.mxu0 0
    %1392 = vmatpush1.bf16.msra.mxu0 0
    %1393 = vmatprep.subr.bf16.mxu0 0
    %1394 = vmatpush1.bf16.msra.mxu0 0
    %1395 = vmatprep.subr.bf16.mxu0 0
    %1396 = vmatpush1.bf16.msra.mxu0 0
    %1397 = vmatprep.subr.bf16.mxu0 0
    %1398 = vmatpush1.bf16.msra.mxu0 0
    %1399 = vmatprep.subr.bf16.mxu0 0
    %1400 = vmatpush1.bf16.msra.mxu0 0
    %1401 = vmatprep.subr.bf16.mxu0 0
    %1402 = vmatpush1.bf16.msra.mxu0 0
    %1403 = vmatprep.mubr.bf16.mxu0 0
    %1404 = vmatmul.mubr.bf16.gmra.mrb[0].mxu0 %v1366
    %v1405 = vpop.f32.mrb[0].mxu0
    %v1406 = vadd.f32 0.0, %v1405
    %v1407 = vpop.f32.mrb[0].mxu0
    %v1408 = vpop.f32.mrb[0].mxu0
    %v1409 = vadd.f32 0.0, %v1408
    %v1410 = vpop.f32.mrb[0].mxu0
    %1411 = vmatprep.mubr.bf16.mxu0 0
    %1412 = vmatmul.mubr.bf16.gmra.mrb[0].mxu0 %v1369
    %v1413 = vpop.f32.mrb[0].mxu0
    %v1414 = vadd.f32 0.0, %v1413
    %v1415 = vpop.f32.mrb[0].mxu0
    %v1416 = vpop.f32.mrb[0].mxu0
    %v1417 = vadd.f32 0.0, %v1416
    %v1418 = vpop.f32.mrb[0].mxu0
    %1419 = vdwg.mxu0
    %v1420 = vpack.c.bf16 %v1409, %v1406
    %v1421 = vpack.c.bf16 %v1417, %v1414
    %v1422 = vlaneseq
    %v1423 = vshrl.u32 %v1422, 7
    %v1424 = vsub.s32 1, %v1423
    %v1425 = vrot.slane %v116, %v1424
    %v1474 = vunpack.c.l.b16 %v133
    %v1475 = vunpack.c.l.b16 %v134
    %v1476 = vunpack.c.l.b16 %v135
    %v1477 = vunpack.c.l.b16 %v136
    %v1478 = vunpack.c.l.b16 %v137
    %v1479 = vunpack.c.l.b16 %v138
    %v1480 = vunpack.c.l.b16 %v139
    %v1481 = vunpack.c.l.b16 %v140
    %v1482 = vunpack.c.l.b16 %v141
    %v1483 = vunpack.c.l.b16 %v142
    %v1484 = vunpack.c.l.b16 %v143
    %v1485 = vunpack.c.l.b16 %v144
    %v1486 = vunpack.c.l.b16 %v145
    %v1487 = vunpack.c.l.b16 %v146
    %v1488 = vunpack.c.l.b16 %v147
    %v1489 = vunpack.c.l.b16 %v148
    %v1490 = vunpack.c.l.b16 %v149
    %v1491 = vunpack.c.l.b16 %v150
    %v1492 = vunpack.c.l.b16 %v151
    %v1493 = vunpack.c.l.b16 %v152
    %v1494 = vunpack.c.l.b16 %v153
    %v1495 = vunpack.c.l.b16 %v154
    %v1496 = vunpack.c.l.b16 %v155
    %v1497 = vunpack.c.l.b16 %v156
    %v1498 = vunpack.c.l.b16 %v157
    %v1499 = vunpack.c.l.b16 %v158
    %v1500 = vunpack.c.l.b16 %v159
    %v1501 = vunpack.c.l.b16 %v160
    %v1502 = vunpack.c.l.b16 %v161
    %v1503 = vunpack.c.l.b16 %v162
    %v1504 = vunpack.c.l.b16 %v163
    %v1505 = vunpack.c.l.b16 %v164
    %v1506 = vunpack.c.l.b16 %v165
    %v1507 = vunpack.c.l.b16 %v166
    %v1508 = vunpack.c.l.b16 %v167
    %v1509 = vunpack.c.l.b16 %v168
    %v1510 = vunpack.c.l.b16 %v169
    %v1511 = vunpack.c.l.b16 %v170
    %v1512 = vunpack.c.l.b16 %v171
    %v1513 = vunpack.c.l.b16 %v172
    %v1514 = vunpack.c.l.b16 %v173
    %v1515 = vunpack.c.l.b16 %v174
    %v1516 = vunpack.c.l.b16 %v175
    %v1517 = vunpack.c.l.b16 %v176
    %v1518 = vunpack.c.l.b16 %v177
    %v1519 = vunpack.c.l.b16 %v178
    %v1520 = vunpack.c.l.b16 %v179
    %v1521 = vunpack.c.l.b16 %v180
    %v1522 = vpack.c.b16 %v1475, %v1474
    %v1523 = vpack.c.b16 %v1477, %v1476
    %v1524 = vpack.c.b16 %v1479, %v1478
    %v1525 = vpack.c.b16 %v1481, %v1480
    %v1526 = vpack.c.b16 %v1483, %v1482
    %v1527 = vpack.c.b16 %v1485, %v1484
    %v1528 = vpack.c.b16 %v1487, %v1486
    %v1529 = vpack.c.b16 %v1489, %v1488
    %v1530 = vpack.c.b16 %v1491, %v1490
    %v1531 = vpack.c.b16 %v1493, %v1492
    %v1532 = vpack.c.b16 %v1495, %v1494
    %v1533 = vpack.c.b16 %v1497, %v1496
    %v1534 = vpack.c.b16 %v1499, %v1498
    %v1535 = vpack.c.b16 %v1501, %v1500
    %v1536 = vpack.c.b16 %v1503, %v1502
    %v1537 = vpack.c.b16 %v1505, %v1504
    %v1538 = vpack.c.b16 %v1507, %v1506
    %v1539 = vpack.c.b16 %v1509, %v1508
    %v1540 = vpack.c.b16 %v1511, %v1510
    %v1541 = vpack.c.b16 %v1513, %v1512
    %v1542 = vpack.c.b16 %v1515, %v1514
    %v1543 = vpack.c.b16 %v1517, %v1516
    %v1544 = vpack.c.b16 %v1519, %v1518
    %v1545 = vpack.c.b16 %v1521, %v1520
    %1570 = vmatprep.subr.bf16.mxu0 0
    %1571 = vmatpush1.bf16.msra.mxu0 %v1522
    %1572 = vmatprep.subr.bf16.mxu0 0
    %1573 = vmatpush1.bf16.msra.mxu0 %v1523
    %1574 = vmatprep.subr.bf16.mxu0 0
    %1575 = vmatpush1.bf16.msra.mxu0 %v1524
    %1576 = vmatprep.subr.bf16.mxu0 0
    %1577 = vmatpush1.bf16.msra.mxu0 %v1525
    %1578 = vmatprep.subr.bf16.mxu0 0
    %1579 = vmatpush1.bf16.msra.mxu0 %v1526
    %1580 = vmatprep.subr.bf16.mxu0 0
    %1581 = vmatpush1.bf16.msra.mxu0 %v1527
    %1582 = vmatprep.subr.bf16.mxu0 0
    %1583 = vmatpush1.bf16.msra.mxu0 %v1528
    %1584 = vmatprep.subr.bf16.mxu0 0
    %1585 = vmatpush1.bf16.msra.mxu0 %v1529
    %1586 = vmatprep.subr.bf16.mxu0 0
    %1587 = vmatpush1.bf16.msra.mxu0 %v1530
    %1588 = vmatprep.subr.bf16.mxu0 0
    %1589 = vmatpush1.bf16.msra.mxu0 %v1531
    %1590 = vmatprep.subr.bf16.mxu0 0
    %1591 = vmatpush1.bf16.msra.mxu0 %v1532
    %1592 = vmatprep.subr.bf16.mxu0 0
    %1593 = vmatpush1.bf16.msra.mxu0 %v1533
    %1594 = vmatprep.subr.bf16.mxu0 0
    %1595 = vmatpush1.bf16.msra.mxu0 %v1534
    %1596 = vmatprep.subr.bf16.mxu0 0
    %1597 = vmatpush1.bf16.msra.mxu0 %v1535
    %1598 = vmatprep.subr.bf16.mxu0 0
    %1599 = vmatpush1.bf16.msra.mxu0 %v1536
    %1600 = vmatprep.subr.bf16.mxu0 0
    %1601 = vmatpush1.bf16.msra.mxu0 %v1537
    %1602 = vmatprep.mubr.bf16.mxu0 %v1286
    %1603 = vmatmul.mubr.bf16.gmra.mrb[0].mxu0 %v1353
    %v1604 = vpop.f32.mrb[0].mxu0
    %v1605 = vadd.f32 %v1425, %v1604
    %v1606 = vpop.f32.mrb[0].mxu0
    %v1607 = vpop.f32.mrb[0].mxu0
    %v1608 = vadd.f32 %v1425, %v1607
    %v1609 = vpop.f32.mrb[0].mxu0
    %1610 = vmatprep.mubr.bf16.mxu0 %v1287
    %1611 = vmatmul.mubr.bf16.gmra.mrb[0].mxu0 %v1354
    %v1612 = vpop.f32.mrb[0].mxu0
    %v1613 = vadd.f32 %v1425, %v1612
    %v1614 = vpop.f32.mrb[0].mxu0
    %v1615 = vpop.f32.mrb[0].mxu0
    %v1616 = vadd.f32 %v1425, %v1615
    %v1617 = vpop.f32.mrb[0].mxu0
    %1618 = vdwg.mxu0
    %1619 = vmatprep.subr.bf16.mxu0 0
    %1620 = vmatpush1.bf16.msra.mxu0 %v1538
    %1621 = vmatprep.subr.bf16.mxu0 0
    %1622 = vmatpush1.bf16.msra.mxu0 %v1539
    %1623 = vmatprep.subr.bf16.mxu0 0
    %1624 = vmatpush1.bf16.msra.mxu0 %v1540
    %1625 = vmatprep.subr.bf16.mxu0 0
    %1626 = vmatpush1.bf16.msra.mxu0 %v1541
    %1627 = vmatprep.subr.bf16.mxu0 0
    %1628 = vmatpush1.bf16.msra.mxu0 %v1542
    %1629 = vmatprep.subr.bf16.mxu0 0
    %1630 = vmatpush1.bf16.msra.mxu0 %v1543
    %1631 = vmatprep.subr.bf16.mxu0 0
    %1632 = vmatpush1.bf16.msra.mxu0 %v1544
    %1633 = vmatprep.subr.bf16.mxu0 0
    %1634 = vmatpush1.bf16.msra.mxu0 %v1545
    %1635 = vmatprep.subr.bf16.mxu0 0
    %1636 = vmatpush1.bf16.msra.mxu0 0
    %1637 = vmatprep.subr.bf16.mxu0 0
    %1638 = vmatpush1.bf16.msra.mxu0 0
    %1639 = vmatprep.subr.bf16.mxu0 0
    %1640 = vmatpush1.bf16.msra.mxu0 0
    %1641 = vmatprep.subr.bf16.mxu0 0
    %1642 = vmatpush1.bf16.msra.mxu0 0
    %1643 = vmatprep.subr.bf16.mxu0 0
    %1644 = vmatpush1.bf16.msra.mxu0 0
    %1645 = vmatprep.subr.bf16.mxu0 0
    %1646 = vmatpush1.bf16.msra.mxu0 0
    %1647 = vmatprep.subr.bf16.mxu0 0
    %1648 = vmatpush1.bf16.msra.mxu0 0
    %1649 = vmatprep.subr.bf16.mxu0 0
    %1650 = vmatpush1.bf16.msra.mxu0 0
    %1651 = vmatprep.mubr.bf16.mxu0 0
    %1652 = vmatmul.mubr.bf16.gmra.mrb[0].mxu0 %v1420
    %v1653 = vpop.f32.mrb[0].mxu0
    %v1654 = vadd.f32 %v1605, %v1653
    %v1655 = vpop.f32.mrb[0].mxu0
    %v1656 = vpop.f32.mrb[0].mxu0
    %v1657 = vadd.f32 %v1608, %v1656
    %v1658 = vpop.f32.mrb[0].mxu0
    %1659 = vmatprep.mubr.bf16.mxu0 0
    %1660 = vmatmul.mubr.bf16.gmra.mrb[0].mxu0 %v1421
    %v1661 = vpop.f32.mrb[0].mxu0
    %v1662 = vadd.f32 %v1613, %v1661
    %v1663 = vpop.f32.mrb[0].mxu0
    %v1664 = vpop.f32.mrb[0].mxu0
    %v1665 = vadd.f32 %v1616, %v1664
    %v1666 = vpop.f32.mrb[0].mxu0
    %1667 = vdwg.mxu0
    %v1668 = vmax.f32 %v1654, 0.0
    %v1669 = vmax.f32 %v1657, 0.0
    %v1670 = vmax.f32 %v1662, 0.0
    %v1671 = vmax.f32 %v1665, 0.0
    %v1672 = vmul.f32 %v1268, %v1668
    %v1673 = vmul.f32 %v1273, %v1669
    %v1674 = vmul.f32 %v1278, %v1670
    %v1675 = vmul.f32 %v1283, %v1671
    %v1676 = vadd.f32 %v323, %v1672
    %v1677 = vadd.f32 %v324, %v1673
    %v1678 = vadd.f32 %v325, %v1674
    %v1679 = vadd.f32 %v326, %v1675
    %v1680 = vpack.c.bf16 %v1677, %v1676
    %v1681 = vpack.c.bf16 %v1679, %v1678
    %1682 = vmatprep.subr.bf16.mxu0 0
    %1683 = vmatpush1.bf16.msra.mxu0 %v1680
    %1684 = vmatprep.subr.bf16.mxu0 0
    %1685 = vmatpush1.bf16.msra.mxu0 %v1681
    %1686 = vmatprep.subr.bf16.mxu0 0
    %1687 = vmatpush1.bf16.msra.mxu0 0
    %1688 = vmatprep.subr.bf16.mxu0 0
    %1689 = vmatpush1.bf16.msra.mxu0 0
    %1690 = vmatprep.subr.bf16.mxu0 0
    %1691 = vmatpush1.bf16.msra.mxu0 0
    %1692 = vmatprep.subr.bf16.mxu0 0
    %1693 = vmatpush1.bf16.msra.mxu0 0
    %1694 = vmatprep.subr.bf16.mxu0 0
    %1695 = vmatpush1.bf16.msra.mxu0 0
    %1696 = vmatprep.subr.bf16.mxu0 0
    %1697 = vmatpush1.bf16.msra.mxu0 0
    %1698 = vmatprep.subr.bf16.mxu0 0
    %1699 = vmatpush1.bf16.msra.mxu0 0
    %1700 = vmatprep.subr.bf16.mxu0 0
    %1701 = vmatpush1.bf16.msra.mxu0 0
    %1702 = vmatprep.subr.bf16.mxu0 0
    %1703 = vmatpush1.bf16.msra.mxu0 0
    %1704 = vmatprep.subr.bf16.mxu0 0
    %1705 = vmatpush1.bf16.msra.mxu0 0
    %1706 = vmatprep.subr.bf16.mxu0 0
    %1707 = vmatpush1.bf16.msra.mxu0 0
    %1708 = vmatprep.subr.bf16.mxu0 0
    %1709 = vmatpush1.bf16.msra.mxu0 0
    %1710 = vmatprep.subr.bf16.mxu0 0
    %1711 = vmatpush1.bf16.msra.mxu0 0
    %1712 = vmatprep.subr.bf16.mxu0 0
    %1713 = vmatpush1.bf16.msra.mxu0 0
    %1714 = vmatprep.mubr.bf16.mxu0 0
    %1715 = vmatmul.mubr.bf16.gmra.mrb[0].mxu0 %v1299
    %v1716 = vpop.f32.mrb[0].mxu0
    %v1717 = vadd.f32 0.0, %v1716
    %v1718 = vpop.f32.mrb[0].mxu0
    %v1719 = vpop.f32.mrb[0].mxu0
    %v1720 = vadd.f32 0.0, %v1719
    %v1721 = vpop.f32.mrb[0].mxu0
    %1722 = vmatprep.mubr.bf16.mxu0 0
    %1723 = vmatmul.mubr.bf16.gmra.mrb[0].mxu0 %v1302
    %v1724 = vpop.f32.mrb[0].mxu0
    %v1725 = vadd.f32 0.0, %v1724
    %v1726 = vpop.f32.mrb[0].mxu0
    %v1727 = vpop.f32.mrb[0].mxu0
    %v1728 = vadd.f32 0.0, %v1727
    %v1729 = vpop.f32.mrb[0].mxu0
    %1730 = vdwg.mxu0
    %v1731 = vpack.c.bf16 %v1720, %v1717
    %v1732 = vpack.c.bf16 %v1728, %v1725
    %1733 = vmatprep.subr.bf16.mxu0 0
    %1734 = vmatpush1.bf16.msra.mxu0 %v1680
    %1735 = vmatprep.subr.bf16.mxu0 0
    %1736 = vmatpush1.bf16.msra.mxu0 %v1681
    %1737 = vmatprep.subr.bf16.mxu0 0
    %1738 = vmatpush1.bf16.msra.mxu0 0
    %1739 = vmatprep.subr.bf16.mxu0 0
    %1740 = vmatpush1.bf16.msra.mxu0 0
    %1741 = vmatprep.subr.bf16.mxu0 0
    %1742 = vmatpush1.bf16.msra.mxu0 0
    %1743 = vmatprep.subr.bf16.mxu0 0
    %1744 = vmatpush1.bf16.msra.mxu0 0
    %1745 = vmatprep.subr.bf16.mxu0 0
    %1746 = vmatpush1.bf16.msra.mxu0 0
    %1747 = vmatprep.subr.bf16.mxu0 0
    %1748 = vmatpush1.bf16.msra.mxu0 0
    %1749 = vmatprep.subr.bf16.mxu0 0
    %1750 = vmatpush1.bf16.msra.mxu0 0
    %1751 = vmatprep.subr.bf16.mxu0 0
    %1752 = vmatpush1.bf16.msra.mxu0 0
    %1753 = vmatprep.subr.bf16.mxu0 0
    %1754 = vmatpush1.bf16.msra.mxu0 0
    %1755 = vmatprep.subr.bf16.mxu0 0
    %1756 = vmatpush1.bf16.msra.mxu0 0
    %1757 = vmatprep.subr.bf16.mxu0 0
    %1758 = vmatpush1.bf16.msra.mxu0 0
    %1759 = vmatprep.subr.bf16.mxu0 0
    %1760 = vmatpush1.bf16.msra.mxu0 0
    %1761 = vmatprep.subr.bf16.mxu0 0
    %1762 = vmatpush1.bf16.msra.mxu0 0
    %1763 = vmatprep.subr.bf16.mxu0 0
    %1764 = vmatpush1.bf16.msra.mxu0 0
    %1765 = vmatprep.mubr.bf16.mxu0 0
    %1766 = vmatmul.mubr.bf16.gmra.mrb[0].mxu0 %v1366
    %v1767 = vpop.f32.mrb[0].mxu0
    %v1768 = vadd.f32 0.0, %v1767
    %v1769 = vpop.f32.mrb[0].mxu0
    %v1770 = vpop.f32.mrb[0].mxu0
    %v1771 = vadd.f32 0.0, %v1770
    %v1772 = vpop.f32.mrb[0].mxu0
    %1773 = vmatprep.mubr.bf16.mxu0 0
    %1774 = vmatmul.mubr.bf16.gmra.mrb[0].mxu0 %v1369
    %v1775 = vpop.f32.mrb[0].mxu0
    %v1776 = vadd.f32 0.0, %v1775
    %v1777 = vpop.f32.mrb[0].mxu0
    %v1778 = vpop.f32.mrb[0].mxu0
    %v1779 = vadd.f32 0.0, %v1778
    %v1780 = vpop.f32.mrb[0].mxu0
    %1781 = vdwg.mxu0
    %v1782 = vpack.c.bf16 %v1771, %v1768
    %v1783 = vpack.c.bf16 %v1779, %v1776
    %1784 = vmatprep.subr.bf16.mxu0 0
    %1785 = vmatpush1.bf16.msra.mxu0 %v1522
    %1786 = vmatprep.subr.bf16.mxu0 0
    %1787 = vmatpush1.bf16.msra.mxu0 %v1523
    %1788 = vmatprep.subr.bf16.mxu0 0
    %1789 = vmatpush1.bf16.msra.mxu0 %v1524
    %1790 = vmatprep.subr.bf16.mxu0 0
    %1791 = vmatpush1.bf16.msra.mxu0 %v1525
    %1792 = vmatprep.subr.bf16.mxu0 0
    %1793 = vmatpush1.bf16.msra.mxu0 %v1526
    %1794 = vmatprep.subr.bf16.mxu0 0
    %1795 = vmatpush1.bf16.msra.mxu0 %v1527
    %1796 = vmatprep.subr.bf16.mxu0 0
    %1797 = vmatpush1.bf16.msra.mxu0 %v1528
    %1798 = vmatprep.subr.bf16.mxu0 0
    %1799 = vmatpush1.bf16.msra.mxu0 %v1529
    %1800 = vmatprep.subr.bf16.mxu0 0
    %1801 = vmatpush1.bf16.msra.mxu0 %v1530
    %1802 = vmatprep.subr.bf16.mxu0 0
    %1803 = vmatpush1.bf16.msra.mxu0 %v1531
    %1804 = vmatprep.subr.bf16.mxu0 0
    %1805 = vmatpush1.bf16.msra.mxu0 %v1532
    %1806 = vmatprep.subr.bf16.mxu0 0
    %1807 = vmatpush1.bf16.msra.mxu0 %v1533
    %1808 = vmatprep.subr.bf16.mxu0 0
    %1809 = vmatpush1.bf16.msra.mxu0 %v1534
    %1810 = vmatprep.subr.bf16.mxu0 0
    %1811 = vmatpush1.bf16.msra.mxu0 %v1535
    %1812 = vmatprep.subr.bf16.mxu0 0
    %1813 = vmatpush1.bf16.msra.mxu0 %v1536
    %1814 = vmatprep.subr.bf16.mxu0 0
    %1815 = vmatpush1.bf16.msra.mxu0 %v1537
    %1816 = vmatprep.mubr.bf16.mxu0 %v1680
    %1817 = vmatmul.mubr.bf16.gmra.mrb[0].mxu0 %v1731
    %v1818 = vpop.f32.mrb[0].mxu0
    %v1819 = vadd.f32 %v1425, %v1818
    %v1820 = vpop.f32.mrb[0].mxu0
    %v1821 = vpop.f32.mrb[0].mxu0
    %v1822 = vadd.f32 %v1425, %v1821
    %v1823 = vpop.f32.mrb[0].mxu0
    %1824 = vmatprep.mubr.bf16.mxu0 %v1681
    %1825 = vmatmul.mubr.bf16.gmra.mrb[0].mxu0 %v1732
    %v1826 = vpop.f32.mrb[0].mxu0
    %v1827 = vadd.f32 %v1425, %v1826
    %v1828 = vpop.f32.mrb[0].mxu0
    %v1829 = vpop.f32.mrb[0].mxu0
    %v1830 = vadd.f32 %v1425, %v1829
    %v1831 = vpop.f32.mrb[0].mxu0
    %1832 = vdwg.mxu0
    %1833 = vmatprep.subr.bf16.mxu0 0
    %1834 = vmatpush1.bf16.msra.mxu0 %v1538
    %1835 = vmatprep.subr.bf16.mxu0 0
    %1836 = vmatpush1.bf16.msra.mxu0 %v1539
    %1837 = vmatprep.subr.bf16.mxu0 0
    %1838 = vmatpush1.bf16.msra.mxu0 %v1540
    %1839 = vmatprep.subr.bf16.mxu0 0
    %1840 = vmatpush1.bf16.msra.mxu0 %v1541
    %1841 = vmatprep.subr.bf16.mxu0 0
    %1842 = vmatpush1.bf16.msra.mxu0 %v1542
    %1843 = vmatprep.subr.bf16.mxu0 0
    %1844 = vmatpush1.bf16.msra.mxu0 %v1543
    %1845 = vmatprep.subr.bf16.mxu0 0
    %1846 = vmatpush1.bf16.msra.mxu0 %v1544
    %1847 = vmatprep.subr.bf16.mxu0 0
    %1848 = vmatpush1.bf16.msra.mxu0 %v1545
    %1849 = vmatprep.subr.bf16.mxu0 0
    %1850 = vmatpush1.bf16.msra.mxu0 0
    %1851 = vmatprep.subr.bf16.mxu0 0
    %1852 = vmatpush1.bf16.msra.mxu0 0
    %1853 = vmatprep.subr.bf16.mxu0 0
    %1854 = vmatpush1.bf16.msra.mxu0 0
    %1855 = vmatprep.subr.bf16.mxu0 0
    %1856 = vmatpush1.bf16.msra.mxu0 0
    %1857 = vmatprep.subr.bf16.mxu0 0
    %1858 = vmatpush1.bf16.msra.mxu0 0
    %1859 = vmatprep.subr.bf16.mxu0 0
    %1860 = vmatpush1.bf16.msra.mxu0 0
    %1861 = vmatprep.subr.bf16.mxu0 0
    %1862 = vmatpush1.bf16.msra.mxu0 0
    %1863 = vmatprep.subr.bf16.mxu0 0
    %1864 = vmatpush1.bf16.msra.mxu0 0
    %1865 = vmatprep.mubr.bf16.mxu0 0
    %1866 = vmatmul.mubr.bf16.gmra.mrb[0].mxu0 %v1782
    %v1867 = vpop.f32.mrb[0].mxu0
    %v1868 = vadd.f32 %v1819, %v1867
    %v1869 = vpop.f32.mrb[0].mxu0
    %v1870 = vpop.f32.mrb[0].mxu0
    %v1871 = vadd.f32 %v1822, %v1870
    %v1872 = vpop.f32.mrb[0].mxu0
    %1873 = vmatprep.mubr.bf16.mxu0 0
    %1874 = vmatmul.mubr.bf16.gmra.mrb[0].mxu0 %v1783
    %v1875 = vpop.f32.mrb[0].mxu0
    %v1876 = vadd.f32 %v1827, %v1875
    %v1877 = vpop.f32.mrb[0].mxu0
    %v1878 = vpop.f32.mrb[0].mxu0
    %v1879 = vadd.f32 %v1830, %v1878
    %v1880 = vpop.f32.mrb[0].mxu0
    %1881 = vdwg.mxu0
    %v1882 = vmax.f32 %v1868, 0.0
    %v1883 = vmax.f32 %v1871, 0.0
    %v1884 = vmax.f32 %v1876, 0.0
    %v1885 = vmax.f32 %v1879, 0.0
    %v1886 = vadd.f32 %v1676, %v1882
    %v1887 = vadd.f32 %v1677, %v1883
    %v1888 = vadd.f32 %v1678, %v1884
    %v1889 = vadd.f32 %v1679, %v1885
    %1890 = vmatprep.subr.mxu0 0.0
    %1891 = vmatpush1.msra.mxu0 %v1672
    %1892 = vmatprep.subr.mxu0 0.0
    %1893 = vmatpush1.msra.mxu0 %v1673
    %1894 = vmatprep.subr.mxu0 0.0
    %1895 = vmatpush1.msra.mxu0 %v1674
    %1896 = vmatprep.subr.mxu0 0.0
    %1897 = vmatpush1.msra.mxu0 %v1675
    %1898 = vmatprep.subr.mxu0 0.0
    %1899 = vmatpush1.msra.mxu0 0.0
    %1900 = vmatprep.subr.mxu0 0.0
    %1901 = vmatpush1.msra.mxu0 0.0
    %1902 = vmatprep.subr.mxu0 0.0
    %1903 = vmatpush1.msra.mxu0 0.0
    %1904 = vmatprep.subr.mxu0 0.0
    %1905 = vmatpush1.msra.mxu0 0.0
    %1906 = vmatprep.subr.mxu0 0.0
    %1907 = vmatpush1.msra.mxu0 0.0
    %1908 = vmatprep.subr.mxu0 0.0
    %1909 = vmatpush1.msra.mxu0 0.0
    %1910 = vmatprep.subr.mxu0 0.0
    %1911 = vmatpush1.msra.mxu0 0.0
    %1912 = vmatprep.subr.mxu0 0.0
    %1913 = vmatpush1.msra.mxu0 0.0
    %1914 = vmatprep.subr.mxu0 0.0
    %1915 = vmatpush1.msra.mxu0 0.0
    %1916 = vmatprep.subr.mxu0 0.0
    %1917 = vmatpush1.msra.mxu0 0.0
    %1918 = vmatprep.subr.mxu0 0.0
    %1919 = vmatpush1.msra.mxu0 0.0
    %1920 = vmatprep.subr.mxu0 0.0
    %1921 = vmatpush1.msra.mxu0 0.0
    %1922 = vmatprep.subr.mxu0 0.0
    %1923 = vmatpush1.msra.mxu0 0.0
    %1924 = vmatprep.subr.mxu0 0.0
    %1925 = vmatpush1.msra.mxu0 0.0
    %1926 = vmatprep.subr.mxu0 0.0
    %1927 = vmatpush1.msra.mxu0 0.0
    %1928 = vmatprep.subr.mxu0 0.0
    %1929 = vmatpush1.msra.mxu0 0.0
    %1930 = vmatprep.subr.mxu0 0.0
    %1931 = vmatpush1.msra.mxu0 0.0
    %1932 = vmatprep.subr.mxu0 0.0
    %1933 = vmatpush1.msra.mxu0 0.0
    %1934 = vmatprep.subr.mxu0 0.0
    %1935 = vmatpush1.msra.mxu0 0.0
    %1936 = vmatprep.subr.mxu0 0.0
    %1937 = vmatpush1.msra.mxu0 0.0
    %1938 = vmatprep.subr.mxu0 0.0
    %1939 = vmatpush1.msra.mxu0 0.0
    %1940 = vmatprep.subr.mxu0 0.0
    %1941 = vmatpush1.msra.mxu0 0.0
    %1942 = vmatprep.subr.mxu0 0.0
    %1943 = vmatpush1.msra.mxu0 0.0
    %1944 = vmatprep.subr.mxu0 0.0
    %1945 = vmatpush1.msra.mxu0 0.0
    %1946 = vmatprep.subr.mxu0 0.0
    %1947 = vmatpush1.msra.mxu0 0.0
    %1948 = vmatprep.subr.mxu0 0.0
    %1949 = vmatpush1.msra.mxu0 0.0
    %1950 = vmatprep.subr.mxu0 0.0
    %1951 = vmatpush1.msra.mxu0 0.0
    %1952 = vmatprep.subr.mxu0 0.0
    %1953 = vmatpush1.msra.mxu0 0.0
    %1954 = vmatprep.mubr.f32.mxu0 0.0
    %1955 = vmatmul.mubr.f32.gmra.mrb[0].mxu0 %v329
    %v1956 = vpop.f32.mrb[0].mxu0
    %v1957 = vadd.f32 0.0, %v1956
    %v1958 = vpop.f32.mrb[0].mxu0
    %1959 = vdwg.mxu0
    %1960 = vmatprep.subr.mxu0 0.0
    %1961 = vmatpush1.msra.mxu0 %v191
    %1962 = vmatprep.subr.mxu0 0.0
    %1963 = vmatpush1.msra.mxu0 %v192
    %1964 = vmatprep.subr.mxu0 0.0
    %1965 = vmatpush1.msra.mxu0 %v193
    %1966 = vmatprep.subr.mxu0 0.0
    %1967 = vmatpush1.msra.mxu0 %v194
    %1968 = vmatprep.subr.mxu0 0.0
    %1969 = vmatpush1.msra.mxu0 %v195
    %1970 = vmatprep.subr.mxu0 0.0
    %1971 = vmatpush1.msra.mxu0 %v196
    %1972 = vmatprep.subr.mxu0 0.0
    %1973 = vmatpush1.msra.mxu0 %v197
    %1974 = vmatprep.subr.mxu0 0.0
    %1975 = vmatpush1.msra.mxu0 %v198
    %1976 = vmatprep.subr.mxu0 0.0
    %1977 = vmatpush1.msra.mxu0 %v199
    %1978 = vmatprep.subr.mxu0 0.0
    %1979 = vmatpush1.msra.mxu0 %v200
    %1980 = vmatprep.subr.mxu0 0.0
    %1981 = vmatpush1.msra.mxu0 %v201
    %1982 = vmatprep.subr.mxu0 0.0
    %1983 = vmatpush1.msra.mxu0 %v202
    %1984 = vmatprep.subr.mxu0 0.0
    %1985 = vmatpush1.msra.mxu0 %v203
    %1986 = vmatprep.subr.mxu0 0.0
    %1987 = vmatpush1.msra.mxu0 %v204
    %1988 = vmatprep.subr.mxu0 0.0
    %1989 = vmatpush1.msra.mxu0 %v205
    %1990 = vmatprep.subr.mxu0 0.0
    %1991 = vmatpush1.msra.mxu0 %v206
    %1992 = vmatprep.subr.mxu0 0.0
    %1993 = vmatpush1.msra.mxu0 0.0
    %1994 = vmatprep.subr.mxu0 0.0
    %1995 = vmatpush1.msra.mxu0 0.0
    %1996 = vmatprep.subr.mxu0 0.0
    %1997 = vmatpush1.msra.mxu0 0.0
    %1998 = vmatprep.subr.mxu0 0.0
    %1999 = vmatpush1.msra.mxu0 0.0
    %2000 = vmatprep.subr.mxu0 0.0
    %2001 = vmatpush1.msra.mxu0 0.0
    %2002 = vmatprep.subr.mxu0 0.0
    %2003 = vmatpush1.msra.mxu0 0.0
    %2004 = vmatprep.subr.mxu0 0.0
    %2005 = vmatpush1.msra.mxu0 0.0
    %2006 = vmatprep.subr.mxu0 0.0
    %2007 = vmatpush1.msra.mxu0 0.0
    %2008 = vmatprep.subr.mxu0 0.0
    %2009 = vmatpush1.msra.mxu0 0.0
    %2010 = vmatprep.subr.mxu0 0.0
    %2011 = vmatpush1.msra.mxu0 0.0
    %2012 = vmatprep.subr.mxu0 0.0
    %2013 = vmatpush1.msra.mxu0 0.0
    %2014 = vmatprep.subr.mxu0 0.0
    %2015 = vmatpush1.msra.mxu0 0.0
    %2016 = vmatprep.subr.mxu0 0.0
    %2017 = vmatpush1.msra.mxu0 0.0
    %2018 = vmatprep.subr.mxu0 0.0
    %2019 = vmatpush1.msra.mxu0 0.0
    %2020 = vmatprep.subr.mxu0 0.0
    %2021 = vmatpush1.msra.mxu0 0.0
    %2022 = vmatprep.subr.mxu0 0.0
    %2023 = vmatpush1.msra.mxu0 0.0
    %2024 = vmatprep.mubr.f32.mxu0 0.0
    %2025 = vmatmul.mubr.f32.gmra.mrb[0].mxu0 %v1957
    %v2026 = vpop.f32.mrb[0].mxu0
    %v2027 = vadd.f32 0.0, %v2026
    %v2028 = vpop.f32.mrb[0].mxu0
    %2029 = vdwg.mxu0
    %v2030 = vmul.f32 %v471, %v2027
    %v2032 = vsel %vm327, %v2030, 0
    %2034 = vmatprep.subr.mxu0 0.0
    %2035 = vmatpush1.msra.mxu0 %v207
    %2036 = vmatprep.subr.mxu0 0.0
    %2037 = vmatpush1.msra.mxu0 %v208
    %2038 = vmatprep.subr.mxu0 0.0
    %2039 = vmatpush1.msra.mxu0 %v209
    %2040 = vmatprep.subr.mxu0 0.0
    %2041 = vmatpush1.msra.mxu0 %v210
    %2042 = vmatprep.subr.mxu0 0.0
    %2043 = vmatpush1.msra.mxu0 0.0
    %2044 = vmatprep.subr.mxu0 0.0
    %2045 = vmatpush1.msra.mxu0 0.0
    %2046 = vmatprep.subr.mxu0 0.0
    %2047 = vmatpush1.msra.mxu0 0.0
    %2048 = vmatprep.subr.mxu0 0.0
    %2049 = vmatpush1.msra.mxu0 0.0
    %2050 = vmatprep.subr.mxu0 0.0
    %2051 = vmatpush1.msra.mxu0 0.0
    %2052 = vmatprep.subr.mxu0 0.0
    %2053 = vmatpush1.msra.mxu0 0.0
    %2054 = vmatprep.subr.mxu0 0.0
    %2055 = vmatpush1.msra.mxu0 0.0
    %2056 = vmatprep.subr.mxu0 0.0
    %2057 = vmatpush1.msra.mxu0 0.0
    %2058 = vmatprep.subr.mxu0 0.0
    %2059 = vmatpush1.msra.mxu0 0.0
    %2060 = vmatprep.subr.mxu0 0.0
    %2061 = vmatpush1.msra.mxu0 0.0
    %2062 = vmatprep.subr.mxu0 0.0
    %2063 = vmatpush1.msra.mxu0 0.0
    %2064 = vmatprep.subr.mxu0 0.0
    %2065 = vmatpush1.msra.mxu0 0.0
    %2066 = vmatprep.subr.mxu0 0.0
    %2067 = vmatpush1.msra.mxu0 0.0
    %2068 = vmatprep.subr.mxu0 0.0
    %2069 = vmatpush1.msra.mxu0 0.0
    %2070 = vmatprep.subr.mxu0 0.0
    %2071 = vmatpush1.msra.mxu0 0.0
    %2072 = vmatprep.subr.mxu0 0.0
    %2073 = vmatpush1.msra.mxu0 0.0
    %2074 = vmatprep.subr.mxu0 0.0
    %2075 = vmatpush1.msra.mxu0 0.0
    %2076 = vmatprep.subr.mxu0 0.0
    %2077 = vmatpush1.msra.mxu0 0.0
    %2078 = vmatprep.subr.mxu0 0.0
    %2079 = vmatpush1.msra.mxu0 0.0
    %2080 = vmatprep.subr.mxu0 0.0
    %2081 = vmatpush1.msra.mxu0 0.0
    %2082 = vmatprep.subr.mxu0 0.0
    %2083 = vmatpush1.msra.mxu0 0.0
    %2084 = vmatprep.subr.mxu0 0.0
    %2085 = vmatpush1.msra.mxu0 0.0
    %2086 = vmatprep.subr.mxu0 0.0
    %2087 = vmatpush1.msra.mxu0 0.0
    %2088 = vmatprep.subr.mxu0 0.0
    %2089 = vmatpush1.msra.mxu0 0.0
    %2090 = vmatprep.subr.mxu0 0.0
    %2091 = vmatpush1.msra.mxu0 0.0
    %2092 = vmatprep.subr.mxu0 0.0
    %2093 = vmatpush1.msra.mxu0 0.0
    %2094 = vmatprep.subr.mxu0 0.0
    %2095 = vmatpush1.msra.mxu0 0.0
    %2096 = vmatprep.subr.mxu0 0.0
    %2097 = vmatpush1.msra.mxu0 0.0
    %2098 = vmatprep.mubr.f32.mxu0 0.0
    %2099 = vmatmul.mubr.f32.gmra.mrb[0].mxu0 %v2032
    %v2100 = vpop.f32.mrb[0].mxu0
    %v2101 = vadd.f32 0.0, %v2100
    %v2102 = vpop.f32.mrb[0].mxu0
    %2103 = vdwg.mxu0
    %v2104 = vsel %vm546, %v2101, inf
    %2105 = vmin.xlane.f32.xlu0 %v2104
    %v2106 = vpop.xlane.xlu0 %2105
    %v2107 = vrot.slane %v2106, 4
    %v2108 = vmin.f32 %v2106, %v2107
    %v2109 = vrot.slane %v2108, 2
    %v2110 = vmin.f32 %v2108, %v2109
    %v2111 = vrot.slane %v2110, 1
    %v2112 = vmin.f32 %v2110, %v2111
    %s2113 = vtos %v2112
    %v2114 = vstv %s2113
    %v2115 = vsub.f32 %v2101, %v2114
    %v2116 = vsel %vm546, %v2115, -inf
    %2117 = vmax.xlane.f32.xlu0 %v2116
    %v2118 = vpop.xlane.xlu0 %2117
    %v2119 = vrot.slane %v2118, 4
    %v2120 = vmax.f32 %v2118, %v2119
    %v2121 = vrot.slane %v2120, 2
    %v2122 = vmax.f32 %v2120, %v2121
    %v2123 = vrot.slane %v2122, 1
    %v2124 = vmax.f32 %v2122, %v2123
    %s2125 = vtos %v2124
    %v2126 = vstv %s2125
    %v2127 = vrcp.pop %v2126
    %v2128 = vmul.f32 %v2115, %v2127
    %v2129 = vadd.f32 %v2128, 0.0
    %v2130 = vmul.f32 %v574, %v2027
    %v2132 = vsel %vm327, %v2130, 0
    %2134 = vmatprep.subr.mxu0 0.0
    %2135 = vmatpush1.msra.mxu0 %v207
    %2136 = vmatprep.subr.mxu0 0.0
    %2137 = vmatpush1.msra.mxu0 %v208
    %2138 = vmatprep.subr.mxu0 0.0
    %2139 = vmatpush1.msra.mxu0 %v209
    %2140 = vmatprep.subr.mxu0 0.0
    %2141 = vmatpush1.msra.mxu0 %v210
    %2142 = vmatprep.subr.mxu0 0.0
    %2143 = vmatpush1.msra.mxu0 0.0
    %2144 = vmatprep.subr.mxu0 0.0
    %2145 = vmatpush1.msra.mxu0 0.0
    %2146 = vmatprep.subr.mxu0 0.0
    %2147 = vmatpush1.msra.mxu0 0.0
    %2148 = vmatprep.subr.mxu0 0.0
    %2149 = vmatpush1.msra.mxu0 0.0
    %2150 = vmatprep.subr.mxu0 0.0
    %2151 = vmatpush1.msra.mxu0 0.0
    %2152 = vmatprep.subr.mxu0 0.0
    %2153 = vmatpush1.msra.mxu0 0.0
    %2154 = vmatprep.subr.mxu0 0.0
    %2155 = vmatpush1.msra.mxu0 0.0
    %2156 = vmatprep.subr.mxu0 0.0
    %2157 = vmatpush1.msra.mxu0 0.0
    %2158 = vmatprep.subr.mxu0 0.0
    %2159 = vmatpush1.msra.mxu0 0.0
    %2160 = vmatprep.subr.mxu0 0.0
    %2161 = vmatpush1.msra.mxu0 0.0
    %2162 = vmatprep.subr.mxu0 0.0
    %2163 = vmatpush1.msra.mxu0 0.0
    %2164 = vmatprep.subr.mxu0 0.0
    %2165 = vmatpush1.msra.mxu0 0.0
    %2166 = vmatprep.subr.mxu0 0.0
    %2167 = vmatpush1.msra.mxu0 0.0
    %2168 = vmatprep.subr.mxu0 0.0
    %2169 = vmatpush1.msra.mxu0 0.0
    %2170 = vmatprep.subr.mxu0 0.0
    %2171 = vmatpush1.msra.mxu0 0.0
    %2172 = vmatprep.subr.mxu0 0.0
    %2173 = vmatpush1.msra.mxu0 0.0
    %2174 = vmatprep.subr.mxu0 0.0
    %2175 = vmatpush1.msra.mxu0 0.0
    %2176 = vmatprep.subr.mxu0 0.0
    %2177 = vmatpush1.msra.mxu0 0.0
    %2178 = vmatprep.subr.mxu0 0.0
    %2179 = vmatpush1.msra.mxu0 0.0
    %2180 = vmatprep.subr.mxu0 0.0
    %2181 = vmatpush1.msra.mxu0 0.0
    %2182 = vmatprep.subr.mxu0 0.0
    %2183 = vmatpush1.msra.mxu0 0.0
    %2184 = vmatprep.subr.mxu0 0.0
    %2185 = vmatpush1.msra.mxu0 0.0
    %2186 = vmatprep.subr.mxu0 0.0
    %2187 = vmatpush1.msra.mxu0 0.0
    %2188 = vmatprep.subr.mxu0 0.0
    %2189 = vmatpush1.msra.mxu0 0.0
    %2190 = vmatprep.subr.mxu0 0.0
    %2191 = vmatpush1.msra.mxu0 0.0
    %2192 = vmatprep.subr.mxu0 0.0
    %2193 = vmatpush1.msra.mxu0 0.0
    %2194 = vmatprep.subr.mxu0 0.0
    %2195 = vmatpush1.msra.mxu0 0.0
    %2196 = vmatprep.subr.mxu0 0.0
    %2197 = vmatpush1.msra.mxu0 0.0
    %2198 = vmatprep.mubr.f32.mxu0 0.0
    %2199 = vmatmul.mubr.f32.gmra.mrb[0].mxu0 %v2132
    %v2200 = vpop.f32.mrb[0].mxu0
    %v2201 = vadd.f32 0.0, %v2200
    %v2202 = vpop.f32.mrb[0].mxu0
    %2203 = vdwg.mxu0
    %v2204 = vsel %vm546, %v2201, inf
    %2205 = vmin.xlane.f32.xlu0 %v2204
    %v2206 = vpop.xlane.xlu0 %2205
    %v2207 = vrot.slane %v2206, 4
    %v2208 = vmin.f32 %v2206, %v2207
    %v2209 = vrot.slane %v2208, 2
    %v2210 = vmin.f32 %v2208, %v2209
    %v2211 = vrot.slane %v2210, 1
    %v2212 = vmin.f32 %v2210, %v2211
    %s2213 = vtos %v2212
    %v2214 = vstv %s2213
    %v2215 = vsub.f32 %v2201, %v2214
    %v2216 = vsel %vm546, %v2215, -inf
    %2217 = vmax.xlane.f32.xlu0 %v2216
    %v2218 = vpop.xlane.xlu0 %2217
    %v2219 = vrot.slane %v2218, 4
    %v2220 = vmax.f32 %v2218, %v2219
    %v2221 = vrot.slane %v2220, 2
    %v2222 = vmax.f32 %v2220, %v2221
    %v2223 = vrot.slane %v2222, 1
    %v2224 = vmax.f32 %v2222, %v2223
    %s2225 = vtos %v2224
    %v2226 = vstv %s2225
    %v2227 = vrcp.pop %v2226
    %v2228 = vmul.f32 %v2215, %v2227
    %v2229 = vadd.f32 %v2129, %v2228
    %v2230 = vmul.f32 %v676, %v2027
    %v2232 = vsel %vm327, %v2230, 0
    %2234 = vmatprep.subr.mxu0 0.0
    %2235 = vmatpush1.msra.mxu0 %v207
    %2236 = vmatprep.subr.mxu0 0.0
    %2237 = vmatpush1.msra.mxu0 %v208
    %2238 = vmatprep.subr.mxu0 0.0
    %2239 = vmatpush1.msra.mxu0 %v209
    %2240 = vmatprep.subr.mxu0 0.0
    %2241 = vmatpush1.msra.mxu0 %v210
    %2242 = vmatprep.subr.mxu0 0.0
    %2243 = vmatpush1.msra.mxu0 0.0
    %2244 = vmatprep.subr.mxu0 0.0
    %2245 = vmatpush1.msra.mxu0 0.0
    %2246 = vmatprep.subr.mxu0 0.0
    %2247 = vmatpush1.msra.mxu0 0.0
    %2248 = vmatprep.subr.mxu0 0.0
    %2249 = vmatpush1.msra.mxu0 0.0
    %2250 = vmatprep.subr.mxu0 0.0
    %2251 = vmatpush1.msra.mxu0 0.0
    %2252 = vmatprep.subr.mxu0 0.0
    %2253 = vmatpush1.msra.mxu0 0.0
    %2254 = vmatprep.subr.mxu0 0.0
    %2255 = vmatpush1.msra.mxu0 0.0
    %2256 = vmatprep.subr.mxu0 0.0
    %2257 = vmatpush1.msra.mxu0 0.0
    %2258 = vmatprep.subr.mxu0 0.0
    %2259 = vmatpush1.msra.mxu0 0.0
    %2260 = vmatprep.subr.mxu0 0.0
    %2261 = vmatpush1.msra.mxu0 0.0
    %2262 = vmatprep.subr.mxu0 0.0
    %2263 = vmatpush1.msra.mxu0 0.0
    %2264 = vmatprep.subr.mxu0 0.0
    %2265 = vmatpush1.msra.mxu0 0.0
    %2266 = vmatprep.subr.mxu0 0.0
    %2267 = vmatpush1.msra.mxu0 0.0
    %2268 = vmatprep.subr.mxu0 0.0
    %2269 = vmatpush1.msra.mxu0 0.0
    %2270 = vmatprep.subr.mxu0 0.0
    %2271 = vmatpush1.msra.mxu0 0.0
    %2272 = vmatprep.subr.mxu0 0.0
    %2273 = vmatpush1.msra.mxu0 0.0
    %2274 = vmatprep.subr.mxu0 0.0
    %2275 = vmatpush1.msra.mxu0 0.0
    %2276 = vmatprep.subr.mxu0 0.0
    %2277 = vmatpush1.msra.mxu0 0.0
    %2278 = vmatprep.subr.mxu0 0.0
    %2279 = vmatpush1.msra.mxu0 0.0
    %2280 = vmatprep.subr.mxu0 0.0
    %2281 = vmatpush1.msra.mxu0 0.0
    %2282 = vmatprep.subr.mxu0 0.0
    %2283 = vmatpush1.msra.mxu0 0.0
    %2284 = vmatprep.subr.mxu0 0.0
    %2285 = vmatpush1.msra.mxu0 0.0
    %2286 = vmatprep.subr.mxu0 0.0
    %2287 = vmatpush1.msra.mxu0 0.0
    %2288 = vmatprep.subr.mxu0 0.0
    %2289 = vmatpush1.msra.mxu0 0.0
    %2290 = vmatprep.subr.mxu0 0.0
    %2291 = vmatpush1.msra.mxu0 0.0
    %2292 = vmatprep.subr.mxu0 0.0
    %2293 = vmatpush1.msra.mxu0 0.0
    %2294 = vmatprep.subr.mxu0 0.0
    %2295 = vmatpush1.msra.mxu0 0.0
    %2296 = vmatprep.subr.mxu0 0.0
    %2297 = vmatpush1.msra.mxu0 0.0
    %2298 = vmatprep.mubr.f32.mxu0 0.0
    %2299 = vmatmul.mubr.f32.gmra.mrb[0].mxu0 %v2232
    %v2300 = vpop.f32.mrb[0].mxu0
    %v2301 = vadd.f32 0.0, %v2300
    %v2302 = vpop.f32.mrb[0].mxu0
    %2303 = vdwg.mxu0
    %v2304 = vsel %vm546, %v2301, inf
    %2305 = vmin.xlane.f32.xlu0 %v2304
    %v2306 = vpop.xlane.xlu0 %2305
    %v2307 = vrot.slane %v2306, 4
    %v2308 = vmin.f32 %v2306, %v2307
    %v2309 = vrot.slane %v2308, 2
    %v2310 = vmin.f32 %v2308, %v2309
    %v2311 = vrot.slane %v2310, 1
    %v2312 = vmin.f32 %v2310, %v2311
    %s2313 = vtos %v2312
    %v2314 = vstv %s2313
    %v2315 = vsub.f32 %v2301, %v2314
    %v2316 = vsel %vm546, %v2315, -inf
    %2317 = vmax.xlane.f32.xlu0 %v2316
    %v2318 = vpop.xlane.xlu0 %2317
    %v2319 = vrot.slane %v2318, 4
    %v2320 = vmax.f32 %v2318, %v2319
    %v2321 = vrot.slane %v2320, 2
    %v2322 = vmax.f32 %v2320, %v2321
    %v2323 = vrot.slane %v2322, 1
    %v2324 = vmax.f32 %v2322, %v2323
    %s2325 = vtos %v2324
    %v2326 = vstv %s2325
    %v2327 = vrcp.pop %v2326
    %v2328 = vmul.f32 %v2315, %v2327
    %v2329 = vadd.f32 %v2229, %v2328
    %v2330 = vmul.f32 %v2329, 0.33333334
    %v2332 = vrot.slane %v2027, 4
    %v2334 = vmul.f32 %v471, %v2332
    %v2336 = vsel %vm327, %v2334, 0
    %2338 = vmatprep.subr.mxu0 0.0
    %2339 = vmatpush1.msra.mxu0 %v207
    %2340 = vmatprep.subr.mxu0 0.0
    %2341 = vmatpush1.msra.mxu0 %v208
    %2342 = vmatprep.subr.mxu0 0.0
    %2343 = vmatpush1.msra.mxu0 %v209
    %2344 = vmatprep.subr.mxu0 0.0
    %2345 = vmatpush1.msra.mxu0 %v210
    %2346 = vmatprep.subr.mxu0 0.0
    %2347 = vmatpush1.msra.mxu0 0.0
    %2348 = vmatprep.subr.mxu0 0.0
    %2349 = vmatpush1.msra.mxu0 0.0
    %2350 = vmatprep.subr.mxu0 0.0
    %2351 = vmatpush1.msra.mxu0 0.0
    %2352 = vmatprep.subr.mxu0 0.0
    %2353 = vmatpush1.msra.mxu0 0.0
    %2354 = vmatprep.subr.mxu0 0.0
    %2355 = vmatpush1.msra.mxu0 0.0
    %2356 = vmatprep.subr.mxu0 0.0
    %2357 = vmatpush1.msra.mxu0 0.0
    %2358 = vmatprep.subr.mxu0 0.0
    %2359 = vmatpush1.msra.mxu0 0.0
    %2360 = vmatprep.subr.mxu0 0.0
    %2361 = vmatpush1.msra.mxu0 0.0
    %2362 = vmatprep.subr.mxu0 0.0
    %2363 = vmatpush1.msra.mxu0 0.0
    %2364 = vmatprep.subr.mxu0 0.0
    %2365 = vmatpush1.msra.mxu0 0.0
    %2366 = vmatprep.subr.mxu0 0.0
    %2367 = vmatpush1.msra.mxu0 0.0
    %2368 = vmatprep.subr.mxu0 0.0
    %2369 = vmatpush1.msra.mxu0 0.0
    %2370 = vmatprep.subr.mxu0 0.0
    %2371 = vmatpush1.msra.mxu0 0.0
    %2372 = vmatprep.subr.mxu0 0.0
    %2373 = vmatpush1.msra.mxu0 0.0
    %2374 = vmatprep.subr.mxu0 0.0
    %2375 = vmatpush1.msra.mxu0 0.0
    %2376 = vmatprep.subr.mxu0 0.0
    %2377 = vmatpush1.msra.mxu0 0.0
    %2378 = vmatprep.subr.mxu0 0.0
    %2379 = vmatpush1.msra.mxu0 0.0
    %2380 = vmatprep.subr.mxu0 0.0
    %2381 = vmatpush1.msra.mxu0 0.0
    %2382 = vmatprep.subr.mxu0 0.0
    %2383 = vmatpush1.msra.mxu0 0.0
    %2384 = vmatprep.subr.mxu0 0.0
    %2385 = vmatpush1.msra.mxu0 0.0
    %2386 = vmatprep.subr.mxu0 0.0
    %2387 = vmatpush1.msra.mxu0 0.0
    %2388 = vmatprep.subr.mxu0 0.0
    %2389 = vmatpush1.msra.mxu0 0.0
    %2390 = vmatprep.subr.mxu0 0.0
    %2391 = vmatpush1.msra.mxu0 0.0
    %2392 = vmatprep.subr.mxu0 0.0
    %2393 = vmatpush1.msra.mxu0 0.0
    %2394 = vmatprep.subr.mxu0 0.0
    %2395 = vmatpush1.msra.mxu0 0.0
    %2396 = vmatprep.subr.mxu0 0.0
    %2397 = vmatpush1.msra.mxu0 0.0
    %2398 = vmatprep.subr.mxu0 0.0
    %2399 = vmatpush1.msra.mxu0 0.0
    %2400 = vmatprep.subr.mxu0 0.0
    %2401 = vmatpush1.msra.mxu0 0.0
    %2402 = vmatprep.mubr.f32.mxu0 0.0
    %2403 = vmatmul.mubr.f32.gmra.mrb[0].mxu0 %v2336
    %v2404 = vpop.f32.mrb[0].mxu0
    %v2405 = vadd.f32 0.0, %v2404
    %v2406 = vpop.f32.mrb[0].mxu0
    %2407 = vdwg.mxu0
    %v2408 = vsel %vm546, %v2405, inf
    %2409 = vmin.xlane.f32.xlu0 %v2408
    %v2410 = vpop.xlane.xlu0 %2409
    %v2411 = vrot.slane %v2410, 4
    %v2412 = vmin.f32 %v2410, %v2411
    %v2413 = vrot.slane %v2412, 2
    %v2414 = vmin.f32 %v2412, %v2413
    %v2415 = vrot.slane %v2414, 1
    %v2416 = vmin.f32 %v2414, %v2415
    %s2417 = vtos %v2416
    %v2418 = vstv %s2417
    %v2419 = vsub.f32 %v2405, %v2418
    %v2420 = vsel %vm546, %v2419, -inf
    %2421 = vmax.xlane.f32.xlu0 %v2420
    %v2422 = vpop.xlane.xlu0 %2421
    %v2423 = vrot.slane %v2422, 4
    %v2424 = vmax.f32 %v2422, %v2423
    %v2425 = vrot.slane %v2424, 2
    %v2426 = vmax.f32 %v2424, %v2425
    %v2427 = vrot.slane %v2426, 1
    %v2428 = vmax.f32 %v2426, %v2427
    %s2429 = vtos %v2428
    %v2430 = vstv %s2429
    %v2431 = vrcp.pop %v2430
    %v2432 = vmul.f32 %v2419, %v2431
    %v2433 = vadd.f32 %v2432, 0.0
    %v2434 = vmul.f32 %v574, %v2332
    %v2436 = vsel %vm327, %v2434, 0
    %2438 = vmatprep.subr.mxu0 0.0
    %2439 = vmatpush1.msra.mxu0 %v207
    %2440 = vmatprep.subr.mxu0 0.0
    %2441 = vmatpush1.msra.mxu0 %v208
    %2442 = vmatprep.subr.mxu0 0.0
    %2443 = vmatpush1.msra.mxu0 %v209
    %2444 = vmatprep.subr.mxu0 0.0
    %2445 = vmatpush1.msra.mxu0 %v210
    %2446 = vmatprep.subr.mxu0 0.0
    %2447 = vmatpush1.msra.mxu0 0.0
    %2448 = vmatprep.subr.mxu0 0.0
    %2449 = vmatpush1.msra.mxu0 0.0
    %2450 = vmatprep.subr.mxu0 0.0
    %2451 = vmatpush1.msra.mxu0 0.0
    %2452 = vmatprep.subr.mxu0 0.0
    %2453 = vmatpush1.msra.mxu0 0.0
    %2454 = vmatprep.subr.mxu0 0.0
    %2455 = vmatpush1.msra.mxu0 0.0
    %2456 = vmatprep.subr.mxu0 0.0
    %2457 = vmatpush1.msra.mxu0 0.0
    %2458 = vmatprep.subr.mxu0 0.0
    %2459 = vmatpush1.msra.mxu0 0.0
    %2460 = vmatprep.subr.mxu0 0.0
    %2461 = vmatpush1.msra.mxu0 0.0
    %2462 = vmatprep.subr.mxu0 0.0
    %2463 = vmatpush1.msra.mxu0 0.0
    %2464 = vmatprep.subr.mxu0 0.0
    %2465 = vmatpush1.msra.mxu0 0.0
    %2466 = vmatprep.subr.mxu0 0.0
    %2467 = vmatpush1.msra.mxu0 0.0
    %2468 = vmatprep.subr.mxu0 0.0
    %2469 = vmatpush1.msra.mxu0 0.0
    %2470 = vmatprep.subr.mxu0 0.0
    %2471 = vmatpush1.msra.mxu0 0.0
    %2472 = vmatprep.subr.mxu0 0.0
    %2473 = vmatpush1.msra.mxu0 0.0
    %2474 = vmatprep.subr.mxu0 0.0
    %2475 = vmatpush1.msra.mxu0 0.0
    %2476 = vmatprep.subr.mxu0 0.0
    %2477 = vmatpush1.msra.mxu0 0.0
    %2478 = vmatprep.subr.mxu0 0.0
    %2479 = vmatpush1.msra.mxu0 0.0
    %2480 = vmatprep.subr.mxu0 0.0
    %2481 = vmatpush1.msra.mxu0 0.0
    %2482 = vmatprep.subr.mxu0 0.0
    %2483 = vmatpush1.msra.mxu0 0.0
    %2484 = vmatprep.subr.mxu0 0.0
    %2485 = vmatpush1.msra.mxu0 0.0
    %2486 = vmatprep.subr.mxu0 0.0
    %2487 = vmatpush1.msra.mxu0 0.0
    %2488 = vmatprep.subr.mxu0 0.0
    %2489 = vmatpush1.msra.mxu0 0.0
    %2490 = vmatprep.subr.mxu0 0.0
    %2491 = vmatpush1.msra.mxu0 0.0
    %2492 = vmatprep.subr.mxu0 0.0
    %2493 = vmatpush1.msra.mxu0 0.0
    %2494 = vmatprep.subr.mxu0 0.0
    %2495 = vmatpush1.msra.mxu0 0.0
    %2496 = vmatprep.subr.mxu0 0.0
    %2497 = vmatpush1.msra.mxu0 0.0
    %2498 = vmatprep.subr.mxu0 0.0
    %2499 = vmatpush1.msra.mxu0 0.0
    %2500 = vmatprep.subr.mxu0 0.0
    %2501 = vmatpush1.msra.mxu0 0.0
    %2502 = vmatprep.mubr.f32.mxu0 0.0
    %2503 = vmatmul.mubr.f32.gmra.mrb[0].mxu0 %v2436
    %v2504 = vpop.f32.mrb[0].mxu0
    %v2505 = vadd.f32 0.0, %v2504
    %v2506 = vpop.f32.mrb[0].mxu0
    %2507 = vdwg.mxu0
    %v2508 = vsel %vm546, %v2505, inf
    %2509 = vmin.xlane.f32.xlu0 %v2508
    %v2510 = vpop.xlane.xlu0 %2509
    %v2511 = vrot.slane %v2510, 4
    %v2512 = vmin.f32 %v2510, %v2511
    %v2513 = vrot.slane %v2512, 2
    %v2514 = vmin.f32 %v2512, %v2513
    %v2515 = vrot.slane %v2514, 1
    %v2516 = vmin.f32 %v2514, %v2515
    %s2517 = vtos %v2516
    %v2518 = vstv %s2517
    %v2519 = vsub.f32 %v2505, %v2518
    %v2520 = vsel %vm546, %v2519, -inf
    %2521 = vmax.xlane.f32.xlu0 %v2520
    %v2522 = vpop.xlane.xlu0 %2521
    %v2523 = vrot.slane %v2522, 4
    %v2524 = vmax.f32 %v2522, %v2523
    %v2525 = vrot.slane %v2524, 2
    %v2526 = vmax.f32 %v2524, %v2525
    %v2527 = vrot.slane %v2526, 1
    %v2528 = vmax.f32 %v2526, %v2527
    %s2529 = vtos %v2528
    %v2530 = vstv %s2529
    %v2531 = vrcp.pop %v2530
    %v2532 = vmul.f32 %v2519, %v2531
    %v2533 = vadd.f32 %v2433, %v2532
    %v2534 = vmul.f32 %v676, %v2332
    %v2536 = vsel %vm327, %v2534, 0
    %2538 = vmatprep.subr.mxu0 0.0
    %2539 = vmatpush1.msra.mxu0 %v207
    %2540 = vmatprep.subr.mxu0 0.0
    %2541 = vmatpush1.msra.mxu0 %v208
    %2542 = vmatprep.subr.mxu0 0.0
    %2543 = vmatpush1.msra.mxu0 %v209
    %2544 = vmatprep.subr.mxu0 0.0
    %2545 = vmatpush1.msra.mxu0 %v210
    %2546 = vmatprep.subr.mxu0 0.0
    %2547 = vmatpush1.msra.mxu0 0.0
    %2548 = vmatprep.subr.mxu0 0.0
    %2549 = vmatpush1.msra.mxu0 0.0
    %2550 = vmatprep.subr.mxu0 0.0
    %2551 = vmatpush1.msra.mxu0 0.0
    %2552 = vmatprep.subr.mxu0 0.0
    %2553 = vmatpush1.msra.mxu0 0.0
    %2554 = vmatprep.subr.mxu0 0.0
    %2555 = vmatpush1.msra.mxu0 0.0
    %2556 = vmatprep.subr.mxu0 0.0
    %2557 = vmatpush1.msra.mxu0 0.0
    %2558 = vmatprep.subr.mxu0 0.0
    %2559 = vmatpush1.msra.mxu0 0.0
    %2560 = vmatprep.subr.mxu0 0.0
    %2561 = vmatpush1.msra.mxu0 0.0
    %2562 = vmatprep.subr.mxu0 0.0
    %2563 = vmatpush1.msra.mxu0 0.0
    %2564 = vmatprep.subr.mxu0 0.0
    %2565 = vmatpush1.msra.mxu0 0.0
    %2566 = vmatprep.subr.mxu0 0.0
    %2567 = vmatpush1.msra.mxu0 0.0
    %2568 = vmatprep.subr.mxu0 0.0
    %2569 = vmatpush1.msra.mxu0 0.0
    %2570 = vmatprep.subr.mxu0 0.0
    %2571 = vmatpush1.msra.mxu0 0.0
    %2572 = vmatprep.subr.mxu0 0.0
    %2573 = vmatpush1.msra.mxu0 0.0
    %2574 = vmatprep.subr.mxu0 0.0
    %2575 = vmatpush1.msra.mxu0 0.0
    %2576 = vmatprep.subr.mxu0 0.0
    %2577 = vmatpush1.msra.mxu0 0.0
    %2578 = vmatprep.subr.mxu0 0.0
    %2579 = vmatpush1.msra.mxu0 0.0
    %2580 = vmatprep.subr.mxu0 0.0
    %2581 = vmatpush1.msra.mxu0 0.0
    %2582 = vmatprep.subr.mxu0 0.0
    %2583 = vmatpush1.msra.mxu0 0.0
    %2584 = vmatprep.subr.mxu0 0.0
    %2585 = vmatpush1.msra.mxu0 0.0
    %2586 = vmatprep.subr.mxu0 0.0
    %2587 = vmatpush1.msra.mxu0 0.0
    %2588 = vmatprep.subr.mxu0 0.0
    %2589 = vmatpush1.msra.mxu0 0.0
    %2590 = vmatprep.subr.mxu0 0.0
    %2591 = vmatpush1.msra.mxu0 0.0
    %2592 = vmatprep.subr.mxu0 0.0
    %2593 = vmatpush1.msra.mxu0 0.0
    %2594 = vmatprep.subr.mxu0 0.0
    %2595 = vmatpush1.msra.mxu0 0.0
    %2596 = vmatprep.subr.mxu0 0.0
    %2597 = vmatpush1.msra.mxu0 0.0
    %2598 = vmatprep.subr.mxu0 0.0
    %2599 = vmatpush1.msra.mxu0 0.0
    %2600 = vmatprep.subr.mxu0 0.0
    %2601 = vmatpush1.msra.mxu0 0.0
    %2602 = vmatprep.mubr.f32.mxu0 0.0
    %2603 = vmatmul.mubr.f32.gmra.mrb[0].mxu0 %v2536
    %v2604 = vpop.f32.mrb[0].mxu0
    %v2605 = vadd.f32 0.0, %v2604
    %v2606 = vpop.f32.mrb[0].mxu0
    %2607 = vdwg.mxu0
    %v2608 = vsel %vm546, %v2605, inf
    %2609 = vmin.xlane.f32.xlu0 %v2608
    %v2610 = vpop.xlane.xlu0 %2609
    %v2611 = vrot.slane %v2610, 4
    %v2612 = vmin.f32 %v2610, %v2611
    %v2613 = vrot.slane %v2612, 2
    %v2614 = vmin.f32 %v2612, %v2613
    %v2615 = vrot.slane %v2614, 1
    %v2616 = vmin.f32 %v2614, %v2615
    %s2617 = vtos %v2616
    %v2618 = vstv %s2617
    %v2619 = vsub.f32 %v2605, %v2618
    %v2620 = vsel %vm546, %v2619, -inf
    %2621 = vmax.xlane.f32.xlu0 %v2620
    %v2622 = vpop.xlane.xlu0 %2621
    %v2623 = vrot.slane %v2622, 4
    %v2624 = vmax.f32 %v2622, %v2623
    %v2625 = vrot.slane %v2624, 2
    %v2626 = vmax.f32 %v2624, %v2625
    %v2627 = vrot.slane %v2626, 1
    %v2628 = vmax.f32 %v2626, %v2627
    %s2629 = vtos %v2628
    %v2630 = vstv %s2629
    %v2631 = vrcp.pop %v2630
    %v2632 = vmul.f32 %v2619, %v2631
    %v2633 = vadd.f32 %v2533, %v2632
    %v2634 = vmul.f32 %v2633, 0.33333334
    %v2636 = vrot.slane %v2634, 4
    %v2638 = vsel %vm1085, %v2330, %v2636
    %2639 = vmatprep.subr.mxu0 0.0
    %2640 = vmatpush1.msra.mxu0 %v2638
    %2641 = vmatprep.subr.mxu0 0.0
    %2642 = vmatpush1.msra.mxu0 0.0
    %2643 = vmatprep.subr.mxu0 0.0
    %2644 = vmatpush1.msra.mxu0 0.0
    %2645 = vmatprep.subr.mxu0 0.0
    %2646 = vmatpush1.msra.mxu0 0.0
    %2647 = vmatprep.subr.mxu0 0.0
    %2648 = vmatpush1.msra.mxu0 0.0
    %2649 = vmatprep.subr.mxu0 0.0
    %2650 = vmatpush1.msra.mxu0 0.0
    %2651 = vmatprep.subr.mxu0 0.0
    %2652 = vmatpush1.msra.mxu0 0.0
    %2653 = vmatprep.subr.mxu0 0.0
    %2654 = vmatpush1.msra.mxu0 0.0
    %2655 = vmatprep.subr.mxu0 0.0
    %2656 = vmatpush1.msra.mxu0 0.0
    %2657 = vmatprep.subr.mxu0 0.0
    %2658 = vmatpush1.msra.mxu0 0.0
    %2659 = vmatprep.subr.mxu0 0.0
    %2660 = vmatpush1.msra.mxu0 0.0
    %2661 = vmatprep.subr.mxu0 0.0
    %2662 = vmatpush1.msra.mxu0 0.0
    %2663 = vmatprep.subr.mxu0 0.0
    %2664 = vmatpush1.msra.mxu0 0.0
    %2665 = vmatprep.subr.mxu0 0.0
    %2666 = vmatpush1.msra.mxu0 0.0
    %2667 = vmatprep.subr.mxu0 0.0
    %2668 = vmatpush1.msra.mxu0 0.0
    %2669 = vmatprep.subr.mxu0 0.0
    %2670 = vmatpush1.msra.mxu0 0.0
    %2671 = vmatprep.subr.mxu0 0.0
    %2672 = vmatpush1.msra.mxu0 0.0
    %2673 = vmatprep.subr.mxu0 0.0
    %2674 = vmatpush1.msra.mxu0 0.0
    %2675 = vmatprep.subr.mxu0 0.0
    %2676 = vmatpush1.msra.mxu0 0.0
    %2677 = vmatprep.subr.mxu0 0.0
    %2678 = vmatpush1.msra.mxu0 0.0
    %2679 = vmatprep.subr.mxu0 0.0
    %2680 = vmatpush1.msra.mxu0 0.0
    %2681 = vmatprep.subr.mxu0 0.0
    %2682 = vmatpush1.msra.mxu0 0.0
    %2683 = vmatprep.subr.mxu0 0.0
    %2684 = vmatpush1.msra.mxu0 0.0
    %2685 = vmatprep.subr.mxu0 0.0
    %2686 = vmatpush1.msra.mxu0 0.0
    %2687 = vmatprep.subr.mxu0 0.0
    %2688 = vmatpush1.msra.mxu0 0.0
    %2689 = vmatprep.subr.mxu0 0.0
    %2690 = vmatpush1.msra.mxu0 0.0
    %2691 = vmatprep.subr.mxu0 0.0
    %2692 = vmatpush1.msra.mxu0 0.0
    %2693 = vmatprep.subr.mxu0 0.0
    %2694 = vmatpush1.msra.mxu0 0.0
    %2695 = vmatprep.subr.mxu0 0.0
    %2696 = vmatpush1.msra.mxu0 0.0
    %2697 = vmatprep.subr.mxu0 0.0
    %2698 = vmatpush1.msra.mxu0 0.0
    %2699 = vmatprep.subr.mxu0 0.0
    %2700 = vmatpush1.msra.mxu0 0.0
    %2701 = vmatprep.subr.mxu0 0.0
    %2702 = vmatpush1.msra.mxu0 0.0
    %2703 = vmatprep.mubr.f32.mxu0 0.0
    %2704 = vmatmul.mubr.f32.gmra.mrb[0].mxu0 %v1089
    %v2705 = vpop.f32.mrb[0].mxu0
    %v2706 = vadd.f32 0.0, %v2705
    %v2707 = vpop.f32.mrb[0].mxu0
    %2708 = vmatprep.mubr.f32.mxu0 0.0
    %2709 = vmatmul.mubr.f32.gmra.mrb[0].mxu0 %v1092
    %v2710 = vpop.f32.mrb[0].mxu0
    %v2711 = vadd.f32 0.0, %v2710
    %v2712 = vpop.f32.mrb[0].mxu0
    %2713 = vmatprep.mubr.f32.mxu0 0.0
    %2714 = vmatmul.mubr.f32.gmra.mrb[0].mxu0 %v1095
    %v2715 = vpop.f32.mrb[0].mxu0
    %v2716 = vadd.f32 0.0, %v2715
    %v2717 = vpop.f32.mrb[0].mxu0
    %2718 = vmatprep.mubr.f32.mxu0 0.0
    %2719 = vmatmul.mubr.f32.gmra.mrb[0].mxu0 %v1098
    %v2720 = vpop.f32.mrb[0].mxu0
    %v2721 = vadd.f32 0.0, %v2720
    %v2722 = vpop.f32.mrb[0].mxu0
    %2723 = vdwg.mxu0
    %v2725 = vsel %vm1185, %v2706, 0
    %v2728 = vsel %vm1185, %v2711, 0
    %v2731 = vsel %vm1185, %v2716, 0
    %v2734 = vsel %vm1185, %v2721, 0
    %2736 = vmatprep.subr.mxu0 0.0
    %2737 = vmatpush1.msra.mxu0 %v1199
    %2738 = vmatprep.subr.mxu0 0.0
    %2739 = vmatpush1.msra.mxu0 0.0
    %2740 = vmatprep.subr.mxu0 0.0
    %2741 = vmatpush1.msra.mxu0 0.0
    %2742 = vmatprep.subr.mxu0 0.0
    %2743 = vmatpush1.msra.mxu0 0.0
    %2744 = vmatprep.subr.mxu0 0.0
    %2745 = vmatpush1.msra.mxu0 0.0
    %2746 = vmatprep.subr.mxu0 0.0
    %2747 = vmatpush1.msra.mxu0 0.0
    %2748 = vmatprep.subr.mxu0 0.0
    %2749 = vmatpush1.msra.mxu0 0.0
    %2750 = vmatprep.subr.mxu0 0.0
    %2751 = vmatpush1.msra.mxu0 0.0
    %2752 = vmatprep.subr.mxu0 0.0
    %2753 = vmatpush1.msra.mxu0 0.0
    %2754 = vmatprep.subr.mxu0 0.0
    %2755 = vmatpush1.msra.mxu0 0.0
    %2756 = vmatprep.subr.mxu0 0.0
    %2757 = vmatpush1.msra.mxu0 0.0
    %2758 = vmatprep.subr.mxu0 0.0
    %2759 = vmatpush1.msra.mxu0 0.0
    %2760 = vmatprep.subr.mxu0 0.0
    %2761 = vmatpush1.msra.mxu0 0.0
    %2762 = vmatprep.subr.mxu0 0.0
    %2763 = vmatpush1.msra.mxu0 0.0
    %2764 = vmatprep.subr.mxu0 0.0
    %2765 = vmatpush1.msra.mxu0 0.0
    %2766 = vmatprep.subr.mxu0 0.0
    %2767 = vmatpush1.msra.mxu0 0.0
    %2768 = vmatprep.subr.mxu0 0.0
    %2769 = vmatpush1.msra.mxu0 0.0
    %2770 = vmatprep.subr.mxu0 0.0
    %2771 = vmatpush1.msra.mxu0 0.0
    %2772 = vmatprep.subr.mxu0 0.0
    %2773 = vmatpush1.msra.mxu0 0.0
    %2774 = vmatprep.subr.mxu0 0.0
    %2775 = vmatpush1.msra.mxu0 0.0
    %2776 = vmatprep.subr.mxu0 0.0
    %2777 = vmatpush1.msra.mxu0 0.0
    %2778 = vmatprep.subr.mxu0 0.0
    %2779 = vmatpush1.msra.mxu0 0.0
    %2780 = vmatprep.subr.mxu0 0.0
    %2781 = vmatpush1.msra.mxu0 0.0
    %2782 = vmatprep.subr.mxu0 0.0
    %2783 = vmatpush1.msra.mxu0 0.0
    %2784 = vmatprep.subr.mxu0 0.0
    %2785 = vmatpush1.msra.mxu0 0.0
    %2786 = vmatprep.subr.mxu0 0.0
    %2787 = vmatpush1.msra.mxu0 0.0
    %2788 = vmatprep.subr.mxu0 0.0
    %2789 = vmatpush1.msra.mxu0 0.0
    %2790 = vmatprep.subr.mxu0 0.0
    %2791 = vmatpush1.msra.mxu0 0.0
    %2792 = vmatprep.subr.mxu0 0.0
    %2793 = vmatpush1.msra.mxu0 0.0
    %2794 = vmatprep.subr.mxu0 0.0
    %2795 = vmatpush1.msra.mxu0 0.0
    %2796 = vmatprep.subr.mxu0 0.0
    %2797 = vmatpush1.msra.mxu0 0.0
    %2798 = vmatprep.subr.mxu0 0.0
    %2799 = vmatpush1.msra.mxu0 0.0
    %2800 = vmatprep.mubr.f32.mxu0 0.0
    %2801 = vmatmul.mubr.f32.gmra.mrb[0].mxu0 %v2725
    %v2802 = vpop.f32.mrb[0].mxu0
    %v2803 = vadd.f32 0.0, %v2802
    %v2804 = vpop.f32.mrb[0].mxu0
    %2805 = vmatprep.mubr.f32.mxu0 0.0
    %2806 = vmatmul.mubr.f32.gmra.mrb[0].mxu0 %v2728
    %v2807 = vpop.f32.mrb[0].mxu0
    %v2808 = vadd.f32 0.0, %v2807
    %v2809 = vpop.f32.mrb[0].mxu0
    %2810 = vmatprep.mubr.f32.mxu0 0.0
    %2811 = vmatmul.mubr.f32.gmra.mrb[0].mxu0 %v2731
    %v2812 = vpop.f32.mrb[0].mxu0
    %v2813 = vadd.f32 0.0, %v2812
    %v2814 = vpop.f32.mrb[0].mxu0
    %2815 = vmatprep.mubr.f32.mxu0 0.0
    %2816 = vmatmul.mubr.f32.gmra.mrb[0].mxu0 %v2734
    %v2817 = vpop.f32.mrb[0].mxu0
    %v2818 = vadd.f32 0.0, %v2817
    %v2819 = vpop.f32.mrb[0].mxu0
    %2820 = vdwg.mxu0
    %v2821 = vpack.c.bf16 %v1887, %v1886
    %v2822 = vpack.c.bf16 %v1889, %v1888
    %2823 = vmatprep.subr.bf16.mxu0 0
    %2824 = vmatpush1.bf16.msra.mxu0 %v2821
    %2825 = vmatprep.subr.bf16.mxu0 0
    %2826 = vmatpush1.bf16.msra.mxu0 %v2822
    %2827 = vmatprep.subr.bf16.mxu0 0
    %2828 = vmatpush1.bf16.msra.mxu0 0
    %2829 = vmatprep.subr.bf16.mxu0 0
    %2830 = vmatpush1.bf16.msra.mxu0 0
    %2831 = vmatprep.subr.bf16.mxu0 0
    %2832 = vmatpush1.bf16.msra.mxu0 0
    %2833 = vmatprep.subr.bf16.mxu0 0
    %2834 = vmatpush1.bf16.msra.mxu0 0
    %2835 = vmatprep.subr.bf16.mxu0 0
    %2836 = vmatpush1.bf16.msra.mxu0 0
    %2837 = vmatprep.subr.bf16.mxu0 0
    %2838 = vmatpush1.bf16.msra.mxu0 0
    %2839 = vmatprep.subr.bf16.mxu0 0
    %2840 = vmatpush1.bf16.msra.mxu0 0
    %2841 = vmatprep.subr.bf16.mxu0 0
    %2842 = vmatpush1.bf16.msra.mxu0 0
    %2843 = vmatprep.subr.bf16.mxu0 0
    %2844 = vmatpush1.bf16.msra.mxu0 0
    %2845 = vmatprep.subr.bf16.mxu0 0
    %2846 = vmatpush1.bf16.msra.mxu0 0
    %2847 = vmatprep.subr.bf16.mxu0 0
    %2848 = vmatpush1.bf16.msra.mxu0 0
    %2849 = vmatprep.subr.bf16.mxu0 0
    %2850 = vmatpush1.bf16.msra.mxu0 0
    %2851 = vmatprep.subr.bf16.mxu0 0
    %2852 = vmatpush1.bf16.msra.mxu0 0
    %2853 = vmatprep.subr.bf16.mxu0 0
    %2854 = vmatpush1.bf16.msra.mxu0 0
    %2855 = vmatprep.mubr.bf16.mxu0 0
    %2856 = vmatmul.mubr.bf16.gmra.mrb[0].mxu0 %v1299
    %v2857 = vpop.f32.mrb[0].mxu0
    %v2858 = vadd.f32 0.0, %v2857
    %v2859 = vpop.f32.mrb[0].mxu0
    %v2860 = vpop.f32.mrb[0].mxu0
    %v2861 = vadd.f32 0.0, %v2860
    %v2862 = vpop.f32.mrb[0].mxu0
    %2863 = vmatprep.mubr.bf16.mxu0 0
    %2864 = vmatmul.mubr.bf16.gmra.mrb[0].mxu0 %v1302
    %v2865 = vpop.f32.mrb[0].mxu0
    %v2866 = vadd.f32 0.0, %v2865
    %v2867 = vpop.f32.mrb[0].mxu0
    %v2868 = vpop.f32.mrb[0].mxu0
    %v2869 = vadd.f32 0.0, %v2868
    %v2870 = vpop.f32.mrb[0].mxu0
    %2871 = vdwg.mxu0
    %v2872 = vpack.c.bf16 %v2861, %v2858
    %v2873 = vpack.c.bf16 %v2869, %v2866
    %2874 = vmatprep.subr.bf16.mxu0 0
    %2875 = vmatpush1.bf16.msra.mxu0 %v2821
    %2876 = vmatprep.subr.bf16.mxu0 0
    %2877 = vmatpush1.bf16.msra.mxu0 %v2822
    %2878 = vmatprep.subr.bf16.mxu0 0
    %2879 = vmatpush1.bf16.msra.mxu0 0
    %2880 = vmatprep.subr.bf16.mxu0 0
    %2881 = vmatpush1.bf16.msra.mxu0 0
    %2882 = vmatprep.subr.bf16.mxu0 0
    %2883 = vmatpush1.bf16.msra.mxu0 0
    %2884 = vmatprep.subr.bf16.mxu0 0
    %2885 = vmatpush1.bf16.msra.mxu0 0
    %2886 = vmatprep.subr.bf16.mxu0 0
    %2887 = vmatpush1.bf16.msra.mxu0 0
    %2888 = vmatprep.subr.bf16.mxu0 0
    %2889 = vmatpush1.bf16.msra.mxu0 0
    %2890 = vmatprep.subr.bf16.mxu0 0
    %2891 = vmatpush1.bf16.msra.mxu0 0
    %2892 = vmatprep.subr.bf16.mxu0 0
    %2893 = vmatpush1.bf16.msra.mxu0 0
    %2894 = vmatprep.subr.bf16.mxu0 0
    %2895 = vmatpush1.bf16.msra.mxu0 0
    %2896 = vmatprep.subr.bf16.mxu0 0
    %2897 = vmatpush1.bf16.msra.mxu0 0
    %2898 = vmatprep.subr.bf16.mxu0 0
    %2899 = vmatpush1.bf16.msra.mxu0 0
    %2900 = vmatprep.subr.bf16.mxu0 0
    %2901 = vmatpush1.bf16.msra.mxu0 0
    %2902 = vmatprep.subr.bf16.mxu0 0
    %2903 = vmatpush1.bf16.msra.mxu0 0
    %2904 = vmatprep.subr.bf16.mxu0 0
    %2905 = vmatpush1.bf16.msra.mxu0 0
    %2906 = vmatprep.mubr.bf16.mxu0 0
    %2907 = vmatmul.mubr.bf16.gmra.mrb[0].mxu0 %v1366
    %v2908 = vpop.f32.mrb[0].mxu0
    %v2909 = vadd.f32 0.0, %v2908
    %v2910 = vpop.f32.mrb[0].mxu0
    %v2911 = vpop.f32.mrb[0].mxu0
    %v2912 = vadd.f32 0.0, %v2911
    %v2913 = vpop.f32.mrb[0].mxu0
    %2914 = vmatprep.mubr.bf16.mxu0 0
    %2915 = vmatmul.mubr.bf16.gmra.mrb[0].mxu0 %v1369
    %v2916 = vpop.f32.mrb[0].mxu0
    %v2917 = vadd.f32 0.0, %v2916
    %v2918 = vpop.f32.mrb[0].mxu0
    %v2919 = vpop.f32.mrb[0].mxu0
    %v2920 = vadd.f32 0.0, %v2919
    %v2921 = vpop.f32.mrb[0].mxu0
    %2922 = vdwg.mxu0
    %v2923 = vpack.c.bf16 %v2912, %v2909
    %v2924 = vpack.c.bf16 %v2920, %v2917
    %2925 = vmatprep.subr.bf16.mxu0 0
    %2926 = vmatpush1.bf16.msra.mxu0 %v1522
    %2927 = vmatprep.subr.bf16.mxu0 0
    %2928 = vmatpush1.bf16.msra.mxu0 %v1523
    %2929 = vmatprep.subr.bf16.mxu0 0
    %2930 = vmatpush1.bf16.msra.mxu0 %v1524
    %2931 = vmatprep.subr.bf16.mxu0 0
    %2932 = vmatpush1.bf16.msra.mxu0 %v1525
    %2933 = vmatprep.subr.bf16.mxu0 0
    %2934 = vmatpush1.bf16.msra.mxu0 %v1526
    %2935 = vmatprep.subr.bf16.mxu0 0
    %2936 = vmatpush1.bf16.msra.mxu0 %v1527
    %2937 = vmatprep.subr.bf16.mxu0 0
    %2938 = vmatpush1.bf16.msra.mxu0 %v1528
    %2939 = vmatprep.subr.bf16.mxu0 0
    %2940 = vmatpush1.bf16.msra.mxu0 %v1529
    %2941 = vmatprep.subr.bf16.mxu0 0
    %2942 = vmatpush1.bf16.msra.mxu0 %v1530
    %2943 = vmatprep.subr.bf16.mxu0 0
    %2944 = vmatpush1.bf16.msra.mxu0 %v1531
    %2945 = vmatprep.subr.bf16.mxu0 0
    %2946 = vmatpush1.bf16.msra.mxu0 %v1532
    %2947 = vmatprep.subr.bf16.mxu0 0
    %2948 = vmatpush1.bf16.msra.mxu0 %v1533
    %2949 = vmatprep.subr.bf16.mxu0 0
    %2950 = vmatpush1.bf16.msra.mxu0 %v1534
    %2951 = vmatprep.subr.bf16.mxu0 0
    %2952 = vmatpush1.bf16.msra.mxu0 %v1535
    %2953 = vmatprep.subr.bf16.mxu0 0
    %2954 = vmatpush1.bf16.msra.mxu0 %v1536
    %2955 = vmatprep.subr.bf16.mxu0 0
    %2956 = vmatpush1.bf16.msra.mxu0 %v1537
    %2957 = vmatprep.mubr.bf16.mxu0 %v2821
    %2958 = vmatmul.mubr.bf16.gmra.mrb[0].mxu0 %v2872
    %v2959 = vpop.f32.mrb[0].mxu0
    %v2960 = vadd.f32 %v1425, %v2959
    %v2961 = vpop.f32.mrb[0].mxu0
    %v2962 = vpop.f32.mrb[0].mxu0
    %v2963 = vadd.f32 %v1425, %v2962
    %v2964 = vpop.f32.mrb[0].mxu0
    %2965 = vmatprep.mubr.bf16.mxu0 %v2822
    %2966 = vmatmul.mubr.bf16.gmra.mrb[0].mxu0 %v2873
    %v2967 = vpop.f32.mrb[0].mxu0
    %v2968 = vadd.f32 %v1425, %v2967
    %v2969 = vpop.f32.mrb[0].mxu0
    %v2970 = vpop.f32.mrb[0].mxu0
    %v2971 = vadd.f32 %v1425, %v2970
    %v2972 = vpop.f32.mrb[0].mxu0
    %2973 = vdwg.mxu0
    %2974 = vmatprep.subr.bf16.mxu0 0
    %2975 = vmatpush1.bf16.msra.mxu0 %v1538
    %2976 = vmatprep.subr.bf16.mxu0 0
    %2977 = vmatpush1.bf16.msra.mxu0 %v1539
    %2978 = vmatprep.subr.bf16.mxu0 0
    %2979 = vmatpush1.bf16.msra.mxu0 %v1540
    %2980 = vmatprep.subr.bf16.mxu0 0
    %2981 = vmatpush1.bf16.msra.mxu0 %v1541
    %2982 = vmatprep.subr.bf16.mxu0 0
    %2983 = vmatpush1.bf16.msra.mxu0 %v1542
    %2984 = vmatprep.subr.bf16.mxu0 0
    %2985 = vmatpush1.bf16.msra.mxu0 %v1543
    %2986 = vmatprep.subr.bf16.mxu0 0
    %2987 = vmatpush1.bf16.msra.mxu0 %v1544
    %2988 = vmatprep.subr.bf16.mxu0 0
    %2989 = vmatpush1.bf16.msra.mxu0 %v1545
    %2990 = vmatprep.subr.bf16.mxu0 0
    %2991 = vmatpush1.bf16.msra.mxu0 0
    %2992 = vmatprep.subr.bf16.mxu0 0
    %2993 = vmatpush1.bf16.msra.mxu0 0
    %2994 = vmatprep.subr.bf16.mxu0 0
    %2995 = vmatpush1.bf16.msra.mxu0 0
    %2996 = vmatprep.subr.bf16.mxu0 0
    %2997 = vmatpush1.bf16.msra.mxu0 0
    %2998 = vmatprep.subr.bf16.mxu0 0
    %2999 = vmatpush1.bf16.msra.mxu0 0
    %3000 = vmatprep.subr.bf16.mxu0 0
    %3001 = vmatpush1.bf16.msra.mxu0 0
    %3002 = vmatprep.subr.bf16.mxu0 0
    %3003 = vmatpush1.bf16.msra.mxu0 0
    %3004 = vmatprep.subr.bf16.mxu0 0
    %3005 = vmatpush1.bf16.msra.mxu0 0
    %3006 = vmatprep.mubr.bf16.mxu0 0
    %3007 = vmatmul.mubr.bf16.gmra.mrb[0].mxu0 %v2923
    %v3008 = vpop.f32.mrb[0].mxu0
    %v3009 = vadd.f32 %v2960, %v3008
    %v3010 = vpop.f32.mrb[0].mxu0
    %v3011 = vpop.f32.mrb[0].mxu0
    %v3012 = vadd.f32 %v2963, %v3011
    %v3013 = vpop.f32.mrb[0].mxu0
    %3014 = vmatprep.mubr.bf16.mxu0 0
    %3015 = vmatmul.mubr.bf16.gmra.mrb[0].mxu0 %v2924
    %v3016 = vpop.f32.mrb[0].mxu0
    %v3017 = vadd.f32 %v2968, %v3016
    %v3018 = vpop.f32.mrb[0].mxu0
    %v3019 = vpop.f32.mrb[0].mxu0
    %v3020 = vadd.f32 %v2971, %v3019
    %v3021 = vpop.f32.mrb[0].mxu0
    %3022 = vdwg.mxu0
    %v3023 = vmax.f32 %v3009, 0.0
    %v3024 = vmax.f32 %v3012, 0.0
    %v3025 = vmax.f32 %v3017, 0.0
    %v3026 = vmax.f32 %v3020, 0.0
    %v3027 = vmul.f32 %v2803, %v3023
    %v3028 = vmul.f32 %v2808, %v3024
    %v3029 = vmul.f32 %v2813, %v3025
    %v3030 = vmul.f32 %v2818, %v3026
    %v3031 = vpack.c.bf16 %v3028, %v3027
    %v3032 = vpack.c.bf16 %v3030, %v3029
    %v3033 = vld [vmem:[%s11] sm:$0xf]
    %v3034 = vld [vmem:[%s11 + $0x4] sm:$0xf]
    %v3037 = vunpack.c.l.b16 %v3033
    %v3038 = vunpack.c.l.b16 %v3034
    %v3039 = vpack.c.b16 %v3038, %v3037
    %v3041 = vsel %vm327, %v3039, 0
    %3043 = vmatprep.subr.bf16.mxu0 0
    %3044 = vmatpush1.bf16.msra.mxu0 %v3031
    %3045 = vmatprep.subr.bf16.mxu0 0
    %3046 = vmatpush1.bf16.msra.mxu0 %v3032
    %3047 = vmatprep.subr.bf16.mxu0 0
    %3048 = vmatpush1.bf16.msra.mxu0 0
    %3049 = vmatprep.subr.bf16.mxu0 0
    %3050 = vmatpush1.bf16.msra.mxu0 0
    %3051 = vmatprep.subr.bf16.mxu0 0
    %3052 = vmatpush1.bf16.msra.mxu0 0
    %3053 = vmatprep.subr.bf16.mxu0 0
    %3054 = vmatpush1.bf16.msra.mxu0 0
    %3055 = vmatprep.subr.bf16.mxu0 0
    %3056 = vmatpush1.bf16.msra.mxu0 0
    %3057 = vmatprep.subr.bf16.mxu0 0
    %3058 = vmatpush1.bf16.msra.mxu0 0
    %3059 = vmatprep.subr.bf16.mxu0 0
    %3060 = vmatpush1.bf16.msra.mxu0 0
    %3061 = vmatprep.subr.bf16.mxu0 0
    %3062 = vmatpush1.bf16.msra.mxu0 0
    %3063 = vmatprep.subr.bf16.mxu0 0
    %3064 = vmatpush1.bf16.msra.mxu0 0
    %3065 = vmatprep.subr.bf16.mxu0 0
    %3066 = vmatpush1.bf16.msra.mxu0 0
    %3067 = vmatprep.subr.bf16.mxu0 0
    %3068 = vmatpush1.bf16.msra.mxu0 0
    %3069 = vmatprep.subr.bf16.mxu0 0
    %3070 = vmatpush1.bf16.msra.mxu0 0
    %3071 = vmatprep.subr.bf16.mxu0 0
    %3072 = vmatpush1.bf16.msra.mxu0 0
    %3073 = vmatprep.subr.bf16.mxu0 0
    %3074 = vmatpush1.bf16.msra.mxu0 0
    %3075 = vmatprep.mubr.bf16.mxu0 0
    %3076 = vmatmul.mubr.bf16.gmra.mrb[0].mxu0 %v3041
    %v3077 = vpop.f32.mrb[0].mxu0
    %v3078 = vadd.f32 0.0, %v3077
    %v3079 = vpop.f32.mrb[0].mxu0
    %v3080 = vpop.f32.mrb[0].mxu0
    %v3081 = vadd.f32 0.0, %v3080
    %v3082 = vpop.f32.mrb[0].mxu0
    %3083 = vdwg.mxu0
    %s3084 = scalar_lea.vmem %s11, 8
    %v3085 = vld [vmem:[%s3084] sm:$0xf]
    %v3086 = vld [vmem:[%s3084 + $0x4] sm:$0xf]
    %v3089 = vunpack.c.l.b16 %v3085
    %v3090 = vunpack.c.l.b16 %v3086
    %v3091 = vpack.c.b16 %v3090, %v3089
    %v3093 = vsel %vm327, %v3091, 0
    %3095 = vmatprep.subr.bf16.mxu0 0
    %3096 = vmatpush1.bf16.msra.mxu0 %v3031
    %3097 = vmatprep.subr.bf16.mxu0 0
    %3098 = vmatpush1.bf16.msra.mxu0 %v3032
    %3099 = vmatprep.subr.bf16.mxu0 0
    %3100 = vmatpush1.bf16.msra.mxu0 0
    %3101 = vmatprep.subr.bf16.mxu0 0
    %3102 = vmatpush1.bf16.msra.mxu0 0
    %3103 = vmatprep.subr.bf16.mxu0 0
    %3104 = vmatpush1.bf16.msra.mxu0 0
    %3105 = vmatprep.subr.bf16.mxu0 0
    %3106 = vmatpush1.bf16.msra.mxu0 0
    %3107 = vmatprep.subr.bf16.mxu0 0
    %3108 = vmatpush1.bf16.msra.mxu0 0
    %3109 = vmatprep.subr.bf16.mxu0 0
    %3110 = vmatpush1.bf16.msra.mxu0 0
    %3111 = vmatprep.subr.bf16.mxu0 0
    %3112 = vmatpush1.bf16.msra.mxu0 0
    %3113 = vmatprep.subr.bf16.mxu0 0
    %3114 = vmatpush1.bf16.msra.mxu0 0
    %3115 = vmatprep.subr.bf16.mxu0 0
    %3116 = vmatpush1.bf16.msra.mxu0 0
    %3117 = vmatprep.subr.bf16.mxu0 0
    %3118 = vmatpush1.bf16.msra.mxu0 0
    %3119 = vmatprep.subr.bf16.mxu0 0
    %3120 = vmatpush1.bf16.msra.mxu0 0
    %3121 = vmatprep.subr.bf16.mxu0 0
    %3122 = vmatpush1.bf16.msra.mxu0 0
    %3123 = vmatprep.subr.bf16.mxu0 0
    %3124 = vmatpush1.bf16.msra.mxu0 0
    %3125 = vmatprep.subr.bf16.mxu0 0
    %3126 = vmatpush1.bf16.msra.mxu0 0
    %3127 = vmatprep.mubr.bf16.mxu0 0
    %3128 = vmatmul.mubr.bf16.gmra.mrb[0].mxu0 %v3093
    %v3129 = vpop.f32.mrb[0].mxu0
    %v3130 = vadd.f32 0.0, %v3129
    %v3131 = vpop.f32.mrb[0].mxu0
    %v3132 = vpop.f32.mrb[0].mxu0
    %v3133 = vadd.f32 0.0, %v3132
    %v3134 = vpop.f32.mrb[0].mxu0
    %3135 = vdwg.mxu0
    %v3136 = vmax.f32 %v3078, %v3130
    %v3137 = vmax.f32 %v3081, %v3133
    %v3138 = vpack.c.bf16 %v3137, %v3136
    %v3139 = vld [vmem:[#allocation10] sm:$0xf]
    %v3140 = vld [vmem:[#allocation10 + $0x4] sm:$0xf]
    %v3141 = vld [vmem:[#allocation10 + $0x8] sm:$0xf]
    %v3142 = vld [vmem:[#allocation10 + $0xc] sm:$0xf]
    %v3143 = vld [vmem:[#allocation10 + $0x10] sm:$0xf]
    %v3144 = vld [vmem:[#allocation10 + $0x14] sm:$0xf]
    %v3145 = vld [vmem:[#allocation10 + $0x18] sm:$0xf]
    %v3146 = vld [vmem:[#allocation10 + $0x1c] sm:$0xf]
    %v3147 = vld [vmem:[#allocation10 + $0x20] sm:$0xf]
    %v3148 = vld [vmem:[#allocation10 + $0x24] sm:$0xf]
    %v3149 = vld [vmem:[#allocation10 + $0x28] sm:$0xf]
    %v3150 = vld [vmem:[#allocation10 + $0x2c] sm:$0xf]
    %v3151 = vld [vmem:[#allocation10 + $0x30] sm:$0xf]
    %v3152 = vld [vmem:[#allocation10 + $0x34] sm:$0xf]
    %v3153 = vld [vmem:[#allocation10 + $0x38] sm:$0xf]
    %v3154 = vld [vmem:[#allocation10 + $0x3c] sm:$0xf]
    %v3171 = vunpack.c.l.b16 %v3139
    %v3172 = vunpack.c.l.b16 %v3140
    %v3173 = vunpack.c.l.b16 %v3141
    %v3174 = vunpack.c.l.b16 %v3142
    %v3175 = vunpack.c.l.b16 %v3143
    %v3176 = vunpack.c.l.b16 %v3144
    %v3177 = vunpack.c.l.b16 %v3145
    %v3178 = vunpack.c.l.b16 %v3146
    %v3179 = vunpack.c.l.b16 %v3147
    %v3180 = vunpack.c.l.b16 %v3148
    %v3181 = vunpack.c.l.b16 %v3149
    %v3182 = vunpack.c.l.b16 %v3150
    %v3183 = vunpack.c.l.b16 %v3151
    %v3184 = vunpack.c.l.b16 %v3152
    %v3185 = vunpack.c.l.b16 %v3153
    %v3186 = vunpack.c.l.b16 %v3154
    %v3187 = vpack.c.b16 %v3172, %v3171
    %v3188 = vpack.c.b16 %v3174, %v3173
    %v3189 = vpack.c.b16 %v3176, %v3175
    %v3190 = vpack.c.b16 %v3178, %v3177
    %v3191 = vpack.c.b16 %v3180, %v3179
    %v3192 = vpack.c.b16 %v3182, %v3181
    %v3193 = vpack.c.b16 %v3184, %v3183
    %v3194 = vpack.c.b16 %v3186, %v3185
    %3203 = vmatprep.subr.bf16.mxu0 0
    %3204 = vmatpush1.bf16.msra.mxu0 %v3187
    %3205 = vmatprep.subr.bf16.mxu0 0
    %3206 = vmatpush1.bf16.msra.mxu0 %v3188
    %3207 = vmatprep.subr.bf16.mxu0 0
    %3208 = vmatpush1.bf16.msra.mxu0 %v3189
    %3209 = vmatprep.subr.bf16.mxu0 0
    %3210 = vmatpush1.bf16.msra.mxu0 %v3190
    %3211 = vmatprep.subr.bf16.mxu0 0
    %3212 = vmatpush1.bf16.msra.mxu0 %v3191
    %3213 = vmatprep.subr.bf16.mxu0 0
    %3214 = vmatpush1.bf16.msra.mxu0 %v3192
    %3215 = vmatprep.subr.bf16.mxu0 0
    %3216 = vmatpush1.bf16.msra.mxu0 %v3193
    %3217 = vmatprep.subr.bf16.mxu0 0
    %3218 = vmatpush1.bf16.msra.mxu0 %v3194
    %3219 = vmatprep.subr.bf16.mxu0 0
    %3220 = vmatpush1.bf16.msra.mxu0 0
    %3221 = vmatprep.subr.bf16.mxu0 0
    %3222 = vmatpush1.bf16.msra.mxu0 0
    %3223 = vmatprep.subr.bf16.mxu0 0
    %3224 = vmatpush1.bf16.msra.mxu0 0
    %3225 = vmatprep.subr.bf16.mxu0 0
    %3226 = vmatpush1.bf16.msra.mxu0 0
    %3227 = vmatprep.subr.bf16.mxu0 0
    %3228 = vmatpush1.bf16.msra.mxu0 0
    %3229 = vmatprep.subr.bf16.mxu0 0
    %3230 = vmatpush1.bf16.msra.mxu0 0
    %3231 = vmatprep.subr.bf16.mxu0 0
    %3232 = vmatpush1.bf16.msra.mxu0 0
    %3233 = vmatprep.subr.bf16.mxu0 0
    %3234 = vmatpush1.bf16.msra.mxu0 0
    %3235 = vmatprep.mubr.bf16.mxu0 0
    %3236 = vmatmul.mubr.bf16.gmra.mrb[0].mxu0 %v3138
    %v3237 = vpop.f32.mrb[0].mxu0
    %v3238 = vadd.f32 0.0, %v3237
    %v3239 = vpop.f32.mrb[0].mxu0
    %v3240 = vpop.f32.mrb[0].mxu0
    %v3241 = vadd.f32 0.0, %v3240
    %v3242 = vpop.f32.mrb[0].mxu0
    %3243 = vdwg.mxu0
    %s3244 = scalar_lea.vmem [#allocation10], 64
    %v3245 = vld [vmem:[%s3244] sm:$0xf]
    %v3246 = vld [vmem:[%s3244 + $0x4] sm:$0xf]
    %v3247 = vld [vmem:[%s3244 + $0x8] sm:$0xf]
    %v3248 = vld [vmem:[%s3244 + $0xc] sm:$0xf]
    %v3249 = vld [vmem:[%s3244 + $0x10] sm:$0xf]
    %v3250 = vld [vmem:[%s3244 + $0x14] sm:$0xf]
    %v3251 = vld [vmem:[%s3244 + $0x18] sm:$0xf]
    %v3252 = vld [vmem:[%s3244 + $0x1c] sm:$0xf]
    %v3253 = vld [vmem:[%s3244 + $0x20] sm:$0xf]
    %v3254 = vld [vmem:[%s3244 + $0x24] sm:$0xf]
    %v3255 = vld [vmem:[%s3244 + $0x28] sm:$0xf]
    %v3256 = vld [vmem:[%s3244 + $0x2c] sm:$0xf]
    %v3257 = vld [vmem:[%s3244 + $0x30] sm:$0xf]
    %v3258 = vld [vmem:[%s3244 + $0x34] sm:$0xf]
    %v3259 = vld [vmem:[%s3244 + $0x38] sm:$0xf]
    %v3260 = vld [vmem:[%s3244 + $0x3c] sm:$0xf]
    %v3277 = vunpack.c.l.b16 %v3245
    %v3278 = vunpack.c.l.b16 %v3246
    %v3279 = vunpack.c.l.b16 %v3247
    %v3280 = vunpack.c.l.b16 %v3248
    %v3281 = vunpack.c.l.b16 %v3249
    %v3282 = vunpack.c.l.b16 %v3250
    %v3283 = vunpack.c.l.b16 %v3251
    %v3284 = vunpack.c.l.b16 %v3252
    %v3285 = vunpack.c.l.b16 %v3253
    %v3286 = vunpack.c.l.b16 %v3254
    %v3287 = vunpack.c.l.b16 %v3255
    %v3288 = vunpack.c.l.b16 %v3256
    %v3289 = vunpack.c.l.b16 %v3257
    %v3290 = vunpack.c.l.b16 %v3258
    %v3291 = vunpack.c.l.b16 %v3259
    %v3292 = vunpack.c.l.b16 %v3260
    %v3293 = vpack.c.b16 %v3278, %v3277
    %v3294 = vpack.c.b16 %v3280, %v3279
    %v3295 = vpack.c.b16 %v3282, %v3281
    %v3296 = vpack.c.b16 %v3284, %v3283
    %v3297 = vpack.c.b16 %v3286, %v3285
    %v3298 = vpack.c.b16 %v3288, %v3287
    %v3299 = vpack.c.b16 %v3290, %v3289
    %v3300 = vpack.c.b16 %v3292, %v3291
    %3309 = vmatprep.subr.bf16.mxu0 0
    %3310 = vmatpush1.bf16.msra.mxu0 %v3293
    %3311 = vmatprep.subr.bf16.mxu0 0
    %3312 = vmatpush1.bf16.msra.mxu0 %v3294
    %3313 = vmatprep.subr.bf16.mxu0 0
    %3314 = vmatpush1.bf16.msra.mxu0 %v3295
    %3315 = vmatprep.subr.bf16.mxu0 0
    %3316 = vmatpush1.bf16.msra.mxu0 %v3296
    %3317 = vmatprep.subr.bf16.mxu0 0
    %3318 = vmatpush1.bf16.msra.mxu0 %v3297
    %3319 = vmatprep.subr.bf16.mxu0 0
    %3320 = vmatpush1.bf16.msra.mxu0 %v3298
    %3321 = vmatprep.subr.bf16.mxu0 0
    %3322 = vmatpush1.bf16.msra.mxu0 %v3299
    %3323 = vmatprep.subr.bf16.mxu0 0
    %3324 = vmatpush1.bf16.msra.mxu0 %v3300
    %3325 = vmatprep.subr.bf16.mxu0 0
    %3326 = vmatpush1.bf16.msra.mxu0 0
    %3327 = vmatprep.subr.bf16.mxu0 0
    %3328 = vmatpush1.bf16.msra.mxu0 0
    %3329 = vmatprep.subr.bf16.mxu0 0
    %3330 = vmatpush1.bf16.msra.mxu0 0
    %3331 = vmatprep.subr.bf16.mxu0 0
    %3332 = vmatpush1.bf16.msra.mxu0 0
    %3333 = vmatprep.subr.bf16.mxu0 0
    %3334 = vmatpush1.bf16.msra.mxu0 0
    %3335 = vmatprep.subr.bf16.mxu0 0
    %3336 = vmatpush1.bf16.msra.mxu0 0
    %3337 = vmatprep.subr.bf16.mxu0 0
    %3338 = vmatpush1.bf16.msra.mxu0 0
    %3339 = vmatprep.subr.bf16.mxu0 0
    %3340 = vmatpush1.bf16.msra.mxu0 0
    %3341 = vmatprep.mubr.bf16.mxu0 0
    %3342 = vmatmul.mubr.bf16.gmra.mrb[0].mxu0 %v3138
    %v3343 = vpop.f32.mrb[0].mxu0
    %v3344 = vadd.f32 0.0, %v3343
    %v3345 = vpop.f32.mrb[0].mxu0
    %v3346 = vpop.f32.mrb[0].mxu0
    %v3347 = vadd.f32 0.0, %v3346
    %v3348 = vpop.f32.mrb[0].mxu0
    %3349 = vdwg.mxu0
    %v3350 = vmax.f32 %v3238, %v3344
    %v3351 = vmax.f32 %v3241, %v3347
    %3352 = vst [vmem:[#allocation11] sm:$0xff] %v3350
    %3353 = vst [vmem:[#allocation11 + $0x8] sm:$0xff] %v3351
    // Predicated region
    $region74: #{tpu_custom_call.1} parent=1 // pred_check
      _
    $region75: #{tpu_custom_call.1} parent=1 // pred_check_branch
      %3355 = sbr.rel (0) target = $region77
    $region76: #{tpu_custom_call.1} parent=1 // pred_region
      %s3357 = ssub.s32 256, 256
      %3358 = vsyncadd [#allocation4], %s3357
      %s3359 = sshll.u32 [#allocation11], 4
      %s3360 = int_to_ptr.vmem [resolvable:$true] %s3359
      %3365 = dma.vmem_to_hbm [thread:$0]  %s3360, 256, %s13, [#allocation4], 128, 128, 8
    $region77: #{tpu_custom_call.1} parent=1 // pred_fallthru
      _
    // Predicated region
    $region78: #{tpu_custom_call.1} parent=1 // pred_check
      _
    $region79: #{tpu_custom_call.1} parent=1 // pred_check_branch
      %3367 = sbr.rel (0) target = $region81
    $region80: #{tpu_custom_call.1} parent=1 // pred_region
      %3368 = dma.done [#allocation4], 256
    $region81: #{tpu_custom_call.1} parent=1 // pred_fallthru
      _
    %3369 = vsyncpa [#allocation3], 1
    %3370 = vsyncpa [#allocation6], 1
    %3371 = vsyncpa [#allocation9], 1
    %3372 = vsyncpa [#allocation4], 1

</llo_original>
